<compile_context>
chip_gen: v6e
topology: v6e:2x2x1
jax: 0.10.0
libtpu: 0.0.40
codegen_flags: <defaults>
</compile_context>

<pallas_src>
import jax
import jax.numpy as jnp
from jax.experimental import pallas as pl
from jax.experimental.pallas import tpu as pltpu


# ----------------------------------------------------------------------------
# Fused kernel: direct conv (9 shifted matmuls) + ReLU + GAP + all heads
# ----------------------------------------------------------------------------
def _make_pipe_kernel(num_heads, H, W, C_in, C_out, KH, KW):
    S = H * W

    def kernel(*refs):
        x_ref = refs[0]                                   # [1, H+KH-1, W+KW-1, C_in]
        w_ref = refs[1]                                   # [KH*KW, C_in, C_out]
        b_ref = refs[2]                                   # [1, C_out]
        head_w = refs[3:3 + num_heads]                    # each [C_out, n_h]
        head_b = refs[3 + num_heads:3 + 2 * num_heads]    # each [1, n_h]
        outs = refs[3 + 2 * num_heads:]                   # each [1, 1, n_h]

        # Direct conv: accumulate KH*KW shifted matmuls (no im2col in HBM/VMEM).
        acc = None
        for kh in range(KH):
            for kw in range(KW):
                patch = x_ref[0, kh:kh + H, kw:kw + W, :].reshape(S, C_in)
                part = jnp.dot(patch, w_ref[kh * KW + kw],
                               preferred_element_type=jnp.float32)
                acc = part if acc is None else acc + part

        feat = jnp.maximum(acc + b_ref[...], 0.0)          # [S, C_out]  (bias + ReLU)
        pooled = jnp.mean(feat, axis=0, keepdims=True)     # [1, C_out]  (GAP)

        # All logistic-regression heads, fused: tiny matmul + stable softmax.
        for h in range(num_heads):
            logits = jnp.dot(pooled, head_w[h][...],
                             preferred_element_type=jnp.float32) + head_b[h][...]
            m = jnp.max(logits, axis=-1, keepdims=True)
            e = jnp.exp(logits - m)
            inv = pl.reciprocal(jnp.sum(e, axis=-1, keepdims=True), approx=True)
            outs[h][0] = e * inv                           # [1, n_h]

    return kernel


# ----------------------------------------------------------------------------
# Wrapper: one pallas_call for the whole Pipe forward
# ----------------------------------------------------------------------------
def pipe_forward(x_nchw, conv_w, conv_b, head_params):
    """Fused Pipe forward.

    x_nchw      : [B, C_in, H, W] float32
    conv_w      : [C_out, C_in, KH, KW] (PyTorch Conv2d layout), conv_b: [C_out]
    head_params : list of (lin_w [n_h, C_out] PyTorch Linear layout, lin_b [n_h])
    returns     : list of [B, n_h] softmax outputs (one per head).
    """
    B, C_in, H, W = x_nchw.shape
    C_out, _, KH, KW = conv_w.shape
    ph, pw = (KH - 1) // 2, (KW - 1) // 2
    Hp, Wp = H + 2 * ph, W + 2 * pw
    num_heads = len(head_params)
    n_outs = [int(w.shape[0]) for (w, _) in head_params]

    # One-time NCHW -> padded NHWC (cheap; replaces the 9x im2col HBM expansion).
    x_pad = jnp.pad(jnp.transpose(x_nchw, (0, 2, 3, 1)).astype(jnp.float32),
                    ((0, 0), (ph, ph), (pw, pw), (0, 0)))

    # Conv weight as KH*KW taps of [C_in, C_out]; tap k = kh*KW + kw.
    w_taps = jnp.transpose(conv_w, (2, 3, 1, 0)).reshape(KH * KW, C_in, C_out)
    w_taps = w_taps.astype(jnp.float32)
    b_row = conv_b.reshape(1, C_out).astype(jnp.float32)
    head_ws = [jnp.transpose(w).astype(jnp.float32) for (w, _) in head_params]
    head_bs = [b.reshape(1, -1).astype(jnp.float32) for (_, b) in head_params]

    in_specs = (
        [pl.BlockSpec((1, Hp, Wp, C_in), lambda b: (b, 0, 0, 0))]        # per-batch image
        + [pl.BlockSpec((KH * KW, C_in, C_out), lambda b: (0, 0, 0))]    # resident weights
        + [pl.BlockSpec((1, C_out), lambda b: (0, 0))]
        + [pl.BlockSpec((C_out, n), lambda b: (0, 0)) for n in n_outs]
        + [pl.BlockSpec((1, n), lambda b: (0, 0)) for n in n_outs]
    )
    # Head outputs shaped [B, 1, n] so block last-two dims equal full array dims.
    out_specs = [pl.BlockSpec((1, 1, n), lambda b: (b, 0, 0)) for n in n_outs]
    out_shape = [jax.ShapeDtypeStruct((B, 1, n), jnp.float32) for n in n_outs]

    flops = (2 * B * H * W * KH * KW * C_in * C_out
             + sum(2 * B * C_out * n for n in n_outs))
    bytes_accessed = 4 * (x_pad.size + w_taps.size + b_row.size
                          + sum(int(w.size) for w in head_ws)
                          + sum(int(b.size) for b in head_bs)
                          + sum(B * n for n in n_outs))

    # TODO(synk): for large H, W add a spatial row-tile grid axis with a GAP
    # accumulator so the per-step conv block stays well under v7x's 64 MiB VMEM.
    outs = pl.pallas_call(
        _make_pipe_kernel(num_heads, H, W, C_in, C_out, KH, KW),
        out_shape=out_shape,
        grid=(B,),
        in_specs=in_specs,
        out_specs=out_specs,
        compiler_params=pltpu.CompilerParams(
            dimension_semantics=("parallel",),        # shard batches across TCs (v7x)
            vmem_limit_bytes=32 * 1024 * 1024),
        cost_estimate=pl.CostEstimate(
            flops=flops,
            transcendentals=B * sum(n_outs),
            bytes_accessed=bytes_accessed),
    )(x_pad, w_taps, b_row, *head_ws, *head_bs)

    return [o[:, 0, :] for o in outs]


# ----------------------------------------------------------------------------
# Pipe: feature_extractor followed by (list of) feature_converter(s)
# ----------------------------------------------------------------------------
class Pipe:
    """Pallas port of realtimenet Pipe (extractor params + converter params)."""

    def __init__(self, extractor_params, converter_params):
        # extractor_params: (conv_w [C_out,C_in,3,3], conv_b [C_out])
        # converter_params: (lin_w, lin_b) or list of (lin_w [n_out,C_out], lin_b [n_out])
        self.extractor_params = extractor_params
        self.converter_params = converter_params
        self._forward = jax.jit(pipe_forward)

    def __call__(self, input_tensor):
        conv_w, conv_b = self.extractor_params
        is_list = isinstance(self.converter_params, list)
        heads = self.converter_params if is_list else [self.converter_params]
        outs = self._forward(input_tensor, conv_w, conv_b, heads)
        return outs if is_list else outs[0]

    # TODO(synk): expected_frame_size / fps / step_size / preprocess are metadata
    # passthroughs of the PyTorch feature_extractor; no Pallas equivalent.


# ----------------------------------------------------------------------------
# Pure-JAX reference for correctness checking
# ----------------------------------------------------------------------------
def _reference_forward(x_nchw, conv_w, conv_b, head_params):
    y = jax.lax.conv_general_dilated(
        x_nchw, conv_w, window_strides=(1, 1), padding=((1, 1), (1, 1)),
        dimension_numbers=("NCHW", "OIHW", "NCHW"))
    y = jax.nn.relu(y + conv_b[None, :, None, None])
    pooled = jnp.mean(y, axis=(2, 3))                       # [B, C_out]
    return [jax.nn.softmax(pooled @ w.T + b[None, :], axis=-1)
            for (w, b) in head_params]


if __name__ == "__main__":
    B, C_in, H, W = 2, 3, 16, 16
    C_feat = 32
    head_sizes = [5, 8]

    key = jax.random.PRNGKey(0)
    k_x, k_cw, k_cb, *k_heads = jax.random.split(key, 3 + 2 * len(head_sizes))

    x = jax.random.normal(k_x, (B, C_in, H, W), dtype=jnp.float32)
    conv_w = 0.1 * jax.random.normal(k_cw, (C_feat, C_in, 3, 3), dtype=jnp.float32)
    conv_b = 0.1 * jax.random.normal(k_cb, (C_feat,), dtype=jnp.float32)

    converters = []
    for i, n_out in enumerate(head_sizes):
        kw, kb = k_heads[2 * i], k_heads[2 * i + 1]
        lin_w = 0.1 * jax.random.normal(kw, (n_out, C_feat), dtype=jnp.float32)
        lin_b = 0.1 * jax.random.normal(kb, (n_out,), dtype=jnp.float32)
        converters.append((lin_w, lin_b))

    pipe = Pipe((conv_w, conv_b), converters)
    outs = [jax.block_until_ready(o) for o in pipe(x)]

    # Correctness: shapes, softmax rows sum to 1, and match the pure-JAX reference.
    refs = _reference_forward(x, conv_w, conv_b, converters)
    assert outs[0].shape == (B, head_sizes[0]) and outs[1].shape == (B, head_sizes[1])
    for o, r in zip(outs, refs):
        assert bool(jnp.allclose(jnp.sum(o, axis=-1), 1.0, atol=2e-3))
        assert bool(jnp.allclose(o, r, atol=2e-3, rtol=2e-3))

    print("KERNEL_OK")
</pallas_src>

<mosaic_0001>
module attributes {stable_mosaic.version = 11 : i64} {
  func.func @kernel(%arg0: i32, %arg1: memref<1x18x18x3xf32, #tpu.memory_space<vmem>>, %arg2: memref<9x3x32xf32, #tpu.memory_space<vmem>>, %arg3: memref<1x32xf32, #tpu.memory_space<vmem>>, %arg4: memref<32x5xf32, #tpu.memory_space<vmem>>, %arg5: memref<32x8xf32, #tpu.memory_space<vmem>>, %arg6: memref<1x5xf32, #tpu.memory_space<vmem>>, %arg7: memref<1x8xf32, #tpu.memory_space<vmem>>, %arg8: memref<1x1x5xf32, #tpu.memory_space<vmem>>, %arg9: memref<1x1x8xf32, #tpu.memory_space<vmem>>) attributes {dimension_semantics = [#tpu.dimension_semantics<parallel>], iteration_bounds = array<i64: 2>, scalar_prefetch = 0 : i64, scratch_operands = 0 : i64, tpu.core_type = #tpu.core_type<tc>, window_params = [{transform_indices = @transform_0, window_bounds = array<i64: 1, 18, 18, 3>}, {pipeline_mode = #tpu.pipeline_mode<synchronous>, transform_indices = @transform_1, window_bounds = array<i64: 9, 3, 32>}, {pipeline_mode = #tpu.pipeline_mode<synchronous>, transform_indices = @transform_2, window_bounds = array<i64: 1, 32>}, {pipeline_mode = #tpu.pipeline_mode<synchronous>, transform_indices = @transform_3, window_bounds = array<i64: 32, 5>}, {pipeline_mode = #tpu.pipeline_mode<synchronous>, transform_indices = @transform_4, window_bounds = array<i64: 32, 8>}, {pipeline_mode = #tpu.pipeline_mode<synchronous>, transform_indices = @transform_5, window_bounds = array<i64: 1, 5>}, {pipeline_mode = #tpu.pipeline_mode<synchronous>, transform_indices = @transform_6, window_bounds = array<i64: 1, 8>}, {transform_indices = @transform_7, window_bounds = array<i64: 1, 1, 5>}, {transform_indices = @transform_8, window_bounds = array<i64: 1, 1, 8>}]} {
    %c0 = arith.constant 0 : index
    %c0_0 = arith.constant 0 : index
    %c0_1 = arith.constant 0 : index
    %c0_2 = arith.constant 0 : index
    %0 = vector.load %arg1[%c0, %c0_0, %c0_1, %c0_2] : memref<1x18x18x3xf32, #tpu.memory_space<vmem>>, vector<1x16x16x3xf32>
    %1 = vector.shape_cast %0 : vector<1x16x16x3xf32> to vector<16x16x3xf32>
    %2 = vector.shape_cast %1 : vector<16x16x3xf32> to vector<256x3xf32>
    %c0_3 = arith.constant 0 : index
    %c0_4 = arith.constant 0 : index
    %c0_5 = arith.constant 0 : index
    %3 = vector.load %arg2[%c0_3, %c0_4, %c0_5] : memref<9x3x32xf32, #tpu.memory_space<vmem>>, vector<1x3x32xf32>
    %4 = vector.shape_cast %3 : vector<1x3x32xf32> to vector<3x32xf32>
    %cst = arith.constant dense<0.000000e+00> : vector<256x32xf32>
    %5 = tpu.matmul %2, %4, %cst {dimension_numbers = #tpu.dot_dimension_numbers<[1], [0], [0], [1], [0, 0, 1, 1], [], []>} : vector<256x3xf32>, vector<3x32xf32>, vector<256x32xf32> -> vector<256x32xf32>
    %c0_6 = arith.constant 0 : index
    %c0_7 = arith.constant 0 : index
    %c1 = arith.constant 1 : index
    %c0_8 = arith.constant 0 : index
    %6 = vector.load %arg1[%c0_6, %c0_7, %c1, %c0_8] : memref<1x18x18x3xf32, #tpu.memory_space<vmem>>, vector<1x16x16x3xf32>
    %7 = vector.shape_cast %6 : vector<1x16x16x3xf32> to vector<16x16x3xf32>
    %8 = vector.shape_cast %7 : vector<16x16x3xf32> to vector<256x3xf32>
    %c1_9 = arith.constant 1 : index
    %c0_10 = arith.constant 0 : index
    %c0_11 = arith.constant 0 : index
    %9 = vector.load %arg2[%c1_9, %c0_10, %c0_11] : memref<9x3x32xf32, #tpu.memory_space<vmem>>, vector<1x3x32xf32>
    %10 = vector.shape_cast %9 : vector<1x3x32xf32> to vector<3x32xf32>
    %cst_12 = arith.constant dense<0.000000e+00> : vector<256x32xf32>
    %11 = tpu.matmul %8, %10, %cst_12 {dimension_numbers = #tpu.dot_dimension_numbers<[1], [0], [0], [1], [0, 0, 1, 1], [], []>} : vector<256x3xf32>, vector<3x32xf32>, vector<256x32xf32> -> vector<256x32xf32>
    %12 = arith.addf %5, %11 : vector<256x32xf32>
    %c0_13 = arith.constant 0 : index
    %c0_14 = arith.constant 0 : index
    %c2 = arith.constant 2 : index
    %c0_15 = arith.constant 0 : index
    %13 = vector.load %arg1[%c0_13, %c0_14, %c2, %c0_15] : memref<1x18x18x3xf32, #tpu.memory_space<vmem>>, vector<1x16x16x3xf32>
    %14 = vector.shape_cast %13 : vector<1x16x16x3xf32> to vector<16x16x3xf32>
    %15 = vector.shape_cast %14 : vector<16x16x3xf32> to vector<256x3xf32>
    %c2_16 = arith.constant 2 : index
    %c0_17 = arith.constant 0 : index
    %c0_18 = arith.constant 0 : index
    %16 = vector.load %arg2[%c2_16, %c0_17, %c0_18] : memref<9x3x32xf32, #tpu.memory_space<vmem>>, vector<1x3x32xf32>
    %17 = vector.shape_cast %16 : vector<1x3x32xf32> to vector<3x32xf32>
    %cst_19 = arith.constant dense<0.000000e+00> : vector<256x32xf32>
    %18 = tpu.matmul %15, %17, %cst_19 {dimension_numbers = #tpu.dot_dimension_numbers<[1], [0], [0], [1], [0, 0, 1, 1], [], []>} : vector<256x3xf32>, vector<3x32xf32>, vector<256x32xf32> -> vector<256x32xf32>
    %19 = arith.addf %12, %18 : vector<256x32xf32>
    %c0_20 = arith.constant 0 : index
    %c1_21 = arith.constant 1 : index
    %c0_22 = arith.constant 0 : index
    %c0_23 = arith.constant 0 : index
    %20 = vector.load %arg1[%c0_20, %c1_21, %c0_22, %c0_23] : memref<1x18x18x3xf32, #tpu.memory_space<vmem>>, vector<1x16x16x3xf32>
    %21 = vector.shape_cast %20 : vector<1x16x16x3xf32> to vector<16x16x3xf32>
    %22 = vector.shape_cast %21 : vector<16x16x3xf32> to vector<256x3xf32>
    %c3 = arith.constant 3 : index
    %c0_24 = arith.constant 0 : index
    %c0_25 = arith.constant 0 : index
    %23 = vector.load %arg2[%c3, %c0_24, %c0_25] : memref<9x3x32xf32, #tpu.memory_space<vmem>>, vector<1x3x32xf32>
    %24 = vector.shape_cast %23 : vector<1x3x32xf32> to vector<3x32xf32>
    %cst_26 = arith.constant dense<0.000000e+00> : vector<256x32xf32>
    %25 = tpu.matmul %22, %24, %cst_26 {dimension_numbers = #tpu.dot_dimension_numbers<[1], [0], [0], [1], [0, 0, 1, 1], [], []>} : vector<256x3xf32>, vector<3x32xf32>, vector<256x32xf32> -> vector<256x32xf32>
    %26 = arith.addf %19, %25 : vector<256x32xf32>
    %c0_27 = arith.constant 0 : index
    %c1_28 = arith.constant 1 : index
    %c1_29 = arith.constant 1 : index
    %c0_30 = arith.constant 0 : index
    %27 = vector.load %arg1[%c0_27, %c1_28, %c1_29, %c0_30] : memref<1x18x18x3xf32, #tpu.memory_space<vmem>>, vector<1x16x16x3xf32>
    %28 = vector.shape_cast %27 : vector<1x16x16x3xf32> to vector<16x16x3xf32>
    %29 = vector.shape_cast %28 : vector<16x16x3xf32> to vector<256x3xf32>
    %c4 = arith.constant 4 : index
    %c0_31 = arith.constant 0 : index
    %c0_32 = arith.constant 0 : index
    %30 = vector.load %arg2[%c4, %c0_31, %c0_32] : memref<9x3x32xf32, #tpu.memory_space<vmem>>, vector<1x3x32xf32>
    %31 = vector.shape_cast %30 : vector<1x3x32xf32> to vector<3x32xf32>
    %cst_33 = arith.constant dense<0.000000e+00> : vector<256x32xf32>
    %32 = tpu.matmul %29, %31, %cst_33 {dimension_numbers = #tpu.dot_dimension_numbers<[1], [0], [0], [1], [0, 0, 1, 1], [], []>} : vector<256x3xf32>, vector<3x32xf32>, vector<256x32xf32> -> vector<256x32xf32>
    %33 = arith.addf %26, %32 : vector<256x32xf32>
    %c0_34 = arith.constant 0 : index
    %c1_35 = arith.constant 1 : index
    %c2_36 = arith.constant 2 : index
    %c0_37 = arith.constant 0 : index
    %34 = vector.load %arg1[%c0_34, %c1_35, %c2_36, %c0_37] : memref<1x18x18x3xf32, #tpu.memory_space<vmem>>, vector<1x16x16x3xf32>
    %35 = vector.shape_cast %34 : vector<1x16x16x3xf32> to vector<16x16x3xf32>
    %36 = vector.shape_cast %35 : vector<16x16x3xf32> to vector<256x3xf32>
    %c5 = arith.constant 5 : index
    %c0_38 = arith.constant 0 : index
    %c0_39 = arith.constant 0 : index
    %37 = vector.load %arg2[%c5, %c0_38, %c0_39] : memref<9x3x32xf32, #tpu.memory_space<vmem>>, vector<1x3x32xf32>
    %38 = vector.shape_cast %37 : vector<1x3x32xf32> to vector<3x32xf32>
    %cst_40 = arith.constant dense<0.000000e+00> : vector<256x32xf32>
    %39 = tpu.matmul %36, %38, %cst_40 {dimension_numbers = #tpu.dot_dimension_numbers<[1], [0], [0], [1], [0, 0, 1, 1], [], []>} : vector<256x3xf32>, vector<3x32xf32>, vector<256x32xf32> -> vector<256x32xf32>
    %40 = arith.addf %33, %39 : vector<256x32xf32>
    %c0_41 = arith.constant 0 : index
    %c2_42 = arith.constant 2 : index
    %c0_43 = arith.constant 0 : index
    %c0_44 = arith.constant 0 : index
    %41 = vector.load %arg1[%c0_41, %c2_42, %c0_43, %c0_44] : memref<1x18x18x3xf32, #tpu.memory_space<vmem>>, vector<1x16x16x3xf32>
    %42 = vector.shape_cast %41 : vector<1x16x16x3xf32> to vector<16x16x3xf32>
    %43 = vector.shape_cast %42 : vector<16x16x3xf32> to vector<256x3xf32>
    %c6 = arith.constant 6 : index
    %c0_45 = arith.constant 0 : index
    %c0_46 = arith.constant 0 : index
    %44 = vector.load %arg2[%c6, %c0_45, %c0_46] : memref<9x3x32xf32, #tpu.memory_space<vmem>>, vector<1x3x32xf32>
    %45 = vector.shape_cast %44 : vector<1x3x32xf32> to vector<3x32xf32>
    %cst_47 = arith.constant dense<0.000000e+00> : vector<256x32xf32>
    %46 = tpu.matmul %43, %45, %cst_47 {dimension_numbers = #tpu.dot_dimension_numbers<[1], [0], [0], [1], [0, 0, 1, 1], [], []>} : vector<256x3xf32>, vector<3x32xf32>, vector<256x32xf32> -> vector<256x32xf32>
    %47 = arith.addf %40, %46 : vector<256x32xf32>
    %c0_48 = arith.constant 0 : index
    %c2_49 = arith.constant 2 : index
    %c1_50 = arith.constant 1 : index
    %c0_51 = arith.constant 0 : index
    %48 = vector.load %arg1[%c0_48, %c2_49, %c1_50, %c0_51] : memref<1x18x18x3xf32, #tpu.memory_space<vmem>>, vector<1x16x16x3xf32>
    %49 = vector.shape_cast %48 : vector<1x16x16x3xf32> to vector<16x16x3xf32>
    %50 = vector.shape_cast %49 : vector<16x16x3xf32> to vector<256x3xf32>
    %c7 = arith.constant 7 : index
    %c0_52 = arith.constant 0 : index
    %c0_53 = arith.constant 0 : index
    %51 = vector.load %arg2[%c7, %c0_52, %c0_53] : memref<9x3x32xf32, #tpu.memory_space<vmem>>, vector<1x3x32xf32>
    %52 = vector.shape_cast %51 : vector<1x3x32xf32> to vector<3x32xf32>
    %cst_54 = arith.constant dense<0.000000e+00> : vector<256x32xf32>
    %53 = tpu.matmul %50, %52, %cst_54 {dimension_numbers = #tpu.dot_dimension_numbers<[1], [0], [0], [1], [0, 0, 1, 1], [], []>} : vector<256x3xf32>, vector<3x32xf32>, vector<256x32xf32> -> vector<256x32xf32>
    %54 = arith.addf %47, %53 : vector<256x32xf32>
    %c0_55 = arith.constant 0 : index
    %c2_56 = arith.constant 2 : index
    %c2_57 = arith.constant 2 : index
    %c0_58 = arith.constant 0 : index
    %55 = vector.load %arg1[%c0_55, %c2_56, %c2_57, %c0_58] : memref<1x18x18x3xf32, #tpu.memory_space<vmem>>, vector<1x16x16x3xf32>
    %56 = vector.shape_cast %55 : vector<1x16x16x3xf32> to vector<16x16x3xf32>
    %57 = vector.shape_cast %56 : vector<16x16x3xf32> to vector<256x3xf32>
    %c8 = arith.constant 8 : index
    %c0_59 = arith.constant 0 : index
    %c0_60 = arith.constant 0 : index
    %58 = vector.load %arg2[%c8, %c0_59, %c0_60] : memref<9x3x32xf32, #tpu.memory_space<vmem>>, vector<1x3x32xf32>
    %59 = vector.shape_cast %58 : vector<1x3x32xf32> to vector<3x32xf32>
    %cst_61 = arith.constant dense<0.000000e+00> : vector<256x32xf32>
    %60 = tpu.matmul %57, %59, %cst_61 {dimension_numbers = #tpu.dot_dimension_numbers<[1], [0], [0], [1], [0, 0, 1, 1], [], []>} : vector<256x3xf32>, vector<3x32xf32>, vector<256x32xf32> -> vector<256x32xf32>
    %61 = arith.addf %54, %60 : vector<256x32xf32>
    %c0_62 = arith.constant 0 : index
    %c0_63 = arith.constant 0 : index
    %62 = vector.load %arg3[%c0_62, %c0_63] : memref<1x32xf32, #tpu.memory_space<vmem>>, vector<1x32xf32>
    %63 = vector.broadcast %62 : vector<1x32xf32> to vector<256x32xf32>
    %64 = arith.addf %61, %63 : vector<256x32xf32>
    %cst_64 = arith.constant 0.000000e+00 : f32
    %65 = vector.broadcast %cst_64 : f32 to vector<256x32xf32>
    %66 = arith.maximumf %64, %65 : vector<256x32xf32>
    %cst_65 = arith.constant dense<0.000000e+00> : vector<32xf32>
    %67 = vector.multi_reduction <add>, %66, %cst_65 [0] : vector<256x32xf32> to vector<32xf32>
    %68 = vector.shape_cast %67 : vector<32xf32> to vector<1x32xf32>
    %cst_66 = arith.constant 2.560000e+02 : f32
    %69 = vector.broadcast %cst_66 : f32 to vector<1x32xf32>
    %70 = arith.divf %68, %69 : vector<1x32xf32>
    %c0_67 = arith.constant 0 : index
    %c0_68 = arith.constant 0 : index
    %71 = vector.load %arg4[%c0_67, %c0_68] : memref<32x5xf32, #tpu.memory_space<vmem>>, vector<32x5xf32>
    %cst_69 = arith.constant dense<0.000000e+00> : vector<1x5xf32>
    %72 = tpu.matmul %70, %71, %cst_69 {dimension_numbers = #tpu.dot_dimension_numbers<[1], [0], [0], [1], [0, 0, 1, 1], [], []>} : vector<1x32xf32>, vector<32x5xf32>, vector<1x5xf32> -> vector<1x5xf32>
    %c0_70 = arith.constant 0 : index
    %c0_71 = arith.constant 0 : index
    %73 = vector.load %arg6[%c0_70, %c0_71] : memref<1x5xf32, #tpu.memory_space<vmem>>, vector<1x5xf32>
    %74 = arith.addf %72, %73 : vector<1x5xf32>
    %cst_72 = arith.constant dense<0xFF800000> : vector<1xf32>
    %75 = vector.multi_reduction <maximumf>, %74, %cst_72 [1] : vector<1x5xf32> to vector<1xf32>
    %76 = vector.shape_cast %75 : vector<1xf32> to vector<1x1xf32>
    %77 = vector.broadcast %76 : vector<1x1xf32> to vector<1x5xf32>
    %78 = arith.subf %74, %77 : vector<1x5xf32>
    %79 = math.exp %78 : vector<1x5xf32>
    %cst_73 = arith.constant dense<0.000000e+00> : vector<1xf32>
    %80 = vector.multi_reduction <add>, %79, %cst_73 [1] : vector<1x5xf32> to vector<1xf32>
    %81 = vector.shape_cast %80 : vector<1xf32> to vector<1x1xf32>
    %82 = tpu.reciprocal %81 {approx = true} : vector<1x1xf32> -> vector<1x1xf32>
    %83 = vector.broadcast %82 : vector<1x1xf32> to vector<1x5xf32>
    %84 = arith.mulf %79, %83 : vector<1x5xf32>
    %c0_74 = arith.constant 0 : index
    %c0_75 = arith.constant 0 : index
    %c0_76 = arith.constant 0 : index
    %85 = vector.load %arg8[%c0_74, %c0_75, %c0_76] : memref<1x1x5xf32, #tpu.memory_space<vmem>>, vector<1x1x5xf32>
    %86 = vector.shape_cast %85 : vector<1x1x5xf32> to vector<1x5xf32>
    %87 = vector.shape_cast %84 : vector<1x5xf32> to vector<1x1x5xf32>
    tpu.vector_store %arg8[%c0_74, %c0_75, %c0_76], %87 {strides = array<i32>} : memref<1x1x5xf32, #tpu.memory_space<vmem>>, vector<1x1x5xf32>,
    %c0_77 = arith.constant 0 : index
    %c0_78 = arith.constant 0 : index
    %88 = vector.load %arg5[%c0_77, %c0_78] : memref<32x8xf32, #tpu.memory_space<vmem>>, vector<32x8xf32>
    %cst_79 = arith.constant dense<0.000000e+00> : vector<1x8xf32>
    %89 = tpu.matmul %70, %88, %cst_79 {dimension_numbers = #tpu.dot_dimension_numbers<[1], [0], [0], [1], [0, 0, 1, 1], [], []>} : vector<1x32xf32>, vector<32x8xf32>, vector<1x8xf32> -> vector<1x8xf32>
    %c0_80 = arith.constant 0 : index
    %c0_81 = arith.constant 0 : index
    %90 = vector.load %arg7[%c0_80, %c0_81] : memref<1x8xf32, #tpu.memory_space<vmem>>, vector<1x8xf32>
    %91 = arith.addf %89, %90 : vector<1x8xf32>
    %cst_82 = arith.constant dense<0xFF800000> : vector<1xf32>
    %92 = vector.multi_reduction <maximumf>, %91, %cst_82 [1] : vector<1x8xf32> to vector<1xf32>
    %93 = vector.shape_cast %92 : vector<1xf32> to vector<1x1xf32>
    %94 = vector.broadcast %93 : vector<1x1xf32> to vector<1x8xf32>
    %95 = arith.subf %91, %94 : vector<1x8xf32>
    %96 = math.exp %95 : vector<1x8xf32>
    %cst_83 = arith.constant dense<0.000000e+00> : vector<1xf32>
    %97 = vector.multi_reduction <add>, %96, %cst_83 [1] : vector<1x8xf32> to vector<1xf32>
    %98 = vector.shape_cast %97 : vector<1xf32> to vector<1x1xf32>
    %99 = tpu.reciprocal %98 {approx = true} : vector<1x1xf32> -> vector<1x1xf32>
    %100 = vector.broadcast %99 : vector<1x1xf32> to vector<1x8xf32>
    %101 = arith.mulf %96, %100 : vector<1x8xf32>
    %c0_84 = arith.constant 0 : index
    %c0_85 = arith.constant 0 : index
    %c0_86 = arith.constant 0 : index
    %102 = vector.load %arg9[%c0_84, %c0_85, %c0_86] : memref<1x1x8xf32, #tpu.memory_space<vmem>>, vector<1x1x8xf32>
    %103 = vector.shape_cast %102 : vector<1x1x8xf32> to vector<1x8xf32>
    %104 = vector.shape_cast %101 : vector<1x8xf32> to vector<1x1x8xf32>
    tpu.vector_store %arg9[%c0_84, %c0_85, %c0_86], %104 {strides = array<i32>} : memref<1x1x8xf32, #tpu.memory_space<vmem>>, vector<1x1x8xf32>,
    return
  }
  func.func @transform_0(%arg0: i32) -> (i32, i32, i32, i32) {
    %c0_i32 = arith.constant 0 : i32
    %c0_i32_0 = arith.constant 0 : i32
    %c0_i32_1 = arith.constant 0 : i32
    %c0_i32_2 = arith.constant 0 : i32
    return %arg0, %c0_i32, %c0_i32_0, %c0_i32_1 : i32, i32, i32, i32
  }
  func.func @transform_1(%arg0: i32) -> (i32, i32, i32) {
    %c0_i32 = arith.constant 0 : i32
    %c0_i32_0 = arith.constant 0 : i32
    %c0_i32_1 = arith.constant 0 : i32
    %c0_i32_2 = arith.constant 0 : i32
    return %c0_i32, %c0_i32_0, %c0_i32_1 : i32, i32, i32
  }
  func.func @transform_2(%arg0: i32) -> (i32, i32) {
    %c0_i32 = arith.constant 0 : i32
    %c0_i32_0 = arith.constant 0 : i32
    %c0_i32_1 = arith.constant 0 : i32
    return %c0_i32, %c0_i32_0 : i32, i32
  }
  func.func @transform_3(%arg0: i32) -> (i32, i32) {
    %c0_i32 = arith.constant 0 : i32
    %c0_i32_0 = arith.constant 0 : i32
    %c0_i32_1 = arith.constant 0 : i32
    return %c0_i32, %c0_i32_0 : i32, i32
  }
  func.func @transform_4(%arg0: i32) -> (i32, i32) {
    %c0_i32 = arith.constant 0 : i32
    %c0_i32_0 = arith.constant 0 : i32
    %c0_i32_1 = arith.constant 0 : i32
    return %c0_i32, %c0_i32_0 : i32, i32
  }
  func.func @transform_5(%arg0: i32) -> (i32, i32) {
    %c0_i32 = arith.constant 0 : i32
    %c0_i32_0 = arith.constant 0 : i32
    %c0_i32_1 = arith.constant 0 : i32
    return %c0_i32, %c0_i32_0 : i32, i32
  }
  func.func @transform_6(%arg0: i32) -> (i32, i32) {
    %c0_i32 = arith.constant 0 : i32
    %c0_i32_0 = arith.constant 0 : i32
    %c0_i32_1 = arith.constant 0 : i32
    return %c0_i32, %c0_i32_0 : i32, i32
  }
  func.func @transform_7(%arg0: i32) -> (i32, i32, i32) {
    %c0_i32 = arith.constant 0 : i32
    %c0_i32_0 = arith.constant 0 : i32
    %c0_i32_1 = arith.constant 0 : i32
    return %arg0, %c0_i32, %c0_i32_0 : i32, i32, i32
  }
  func.func @transform_8(%arg0: i32) -> (i32, i32, i32) {
    %c0_i32 = arith.constant 0 : i32
    %c0_i32_0 = arith.constant 0 : i32
    %c0_i32_1 = arith.constant 0 : i32
    return %arg0, %c0_i32, %c0_i32_0 : i32, i32, i32
  }
}

</mosaic_0001>

<llo_original>
// kernel: pipe_forward.1
$region0: #{pipe_forward.1}
  #allocation0 [shape = 'u32[]', space=smem, size = 0x4, offset = 0x4, fixed_abs, tag = 'smem constant byte address 0x4 - core index']
  #allocation1 [shape = 'u32[144,128]{1,0:T(1,128)}', space=vmem, size = 0x12000, scoped, tag = 'internal scratch']
  %s0 = inlined_call_operand.vmem [shape: f32[2,18,18,3], index: 0, kind: input, shape index: {}]
  %s1 = inlined_call_operand.vmem [shape: f32[9,3,32], index: 1, kind: input, shape index: {}]
  %s2 = inlined_call_operand.vmem [shape: f32[1,32], index: 2, kind: input, shape index: {}]
  %s3 = inlined_call_operand.vmem [shape: f32[32,5], index: 3, kind: input, shape index: {}]
  %s4 = inlined_call_operand.vmem [shape: f32[32,8], index: 4, kind: input, shape index: {}]
  %s5 = inlined_call_operand.vmem [shape: f32[1,5], index: 5, kind: input, shape index: {}]
  %s6 = inlined_call_operand.vmem [shape: f32[1,8], index: 6, kind: input, shape index: {}]
  %s7 = inlined_call_operand.hbm [shape: f32[2,1,5], index: 7, kind: output, shape index: {0}]
  %s8 = inlined_call_operand.hbm [shape: f32[2,1,8], index: 8, kind: output, shape index: {1}]
  %9 = xla_tuple %s7, %s8
  %s10 = sld [smem:[#allocation0]]
  $region69: #{pipe_forward.1} parent=0
    _
  %s12 = ssub.s32 1, %s10
  %s13 = scalar_select 0, %s12, %s10
  $region1: #{pipe_forward.1} parent=0
    #allocation2 [shape = 'u8[1024]{0}', space=vmem, size = 0x400, scoped, tag = 'output window, operand 0']
    #allocation3 [shape = 's32[2]{0}', space=sflag, size = 0x8, scoped, tag = 'scoped memory for pipe_forward.1']
    #allocation4 [shape = 'u8[1024]{0}', space=vmem, size = 0x400, scoped, tag = 'output window, operand 1']
    #allocation5 [shape = 's32[2]{0}', space=sflag, size = 0x8, scoped, tag = 'scoped memory for pipe_forward.1']
    %14 = vsyncpa [#allocation3], 0
    %s15 = scalar_lea.sflag [#allocation3], 1
    %16 = vsyncpa %s15, 0
    %17 = vsyncpa [#allocation5], 0
    %s18 = scalar_lea.sflag [#allocation5], 1
    %19 = vsyncpa %s18, 0
    loop: start=0, step=1, limit=4
    $region2: #{pipe_forward.1} parent=1 // loop_pre_header
      _
    $region3: #{pipe_forward.1} parent=1 // loop_header
      %s21 = sphi 0, %s25
      %p22 = scmp.ge.s32.totalorder %s21, 4
      %s31 = sphi 0, %s33
      %s34 = sphi 0, %s31
      %s35 = sphi 0, %s34
      %s51 = sphi 0, %s35
      %s55 = sphi 0, %s55
      %s57 = sphi 0, %s55
      %s58 = sphi 0, %s57
      %s72 = sphi 0, %s58
      %s76 = sphi 0, %s76
      %s78 = sphi 0, %s76
      %s79 = sphi 0, %s78
      %s93 = sphi 0, %s79
      %s97 = sphi 0, %s97
      %s99 = sphi 0, %s97
      %s100 = sphi 0, %s99
      %s114 = sphi 0, %s100
      %s118 = sphi 0, %s118
      %s120 = sphi 0, %s118
      %s121 = sphi 0, %s120
      %s135 = sphi 0, %s121
      %s139 = sphi 0, %s139
      %s141 = sphi 0, %s139
      %s142 = sphi 0, %s141
      %s156 = sphi 0, %s142
      %s160 = sphi 0, %s160
      %s162 = sphi 0, %s160
      %s163 = sphi 0, %s162
      %s177 = sphi 0, %s163
      %s183 = sphi 0, %s185
      %s186 = sphi 0, %s183
      %s187 = sphi 0, %s186
      %s203 = sphi 0, %s187
      %s209 = sphi 0, %s211
      %s212 = sphi 0, %s209
      %s213 = sphi 0, %s212
      %s229 = sphi 0, %s213
    $region4: #{pipe_forward.1} parent=1 // loop_header_branch
      %24 = sbr.rel (%p22) target = $region8
    $region5: #{pipe_forward.1} parent=1 // loop_body
      %s26 = ssub.s32 %s21, 1
      %s27 = ssub.s32 %s21, 2
      %s28 = sadd.s32 %s21, 1
      %s29 = ssub.s32 %s21, %s28
      %p30 = scmp.eq.s32.totalorder %s29, 0
      %s32 = sadd.s32 %s31, 1
      %s33 = scalar_select %p30, %s31, %s32
      %p36 = pneg %p30
      %p37 = scmp.eq.s32.totalorder %s21, 1
      %p38 = por %p36, %p37
      %p39 = scmp.ne.s32.totalorder %s31, %s34
      %p40 = scmp.eq.s32.totalorder %s21, 0
      %p41 = por %p39, %p40
      %p42 = scmp.ne.s32.totalorder %s31, %s34
      %p43 = scmp.eq.s32.totalorder %s26, 1
      %p44 = por %p42, %p43
      %p45 = scmp.ne.s32.totalorder %s34, %s35
      %p46 = scmp.eq.s32.totalorder %s26, 0
      %p47 = por %p45, %p46
      %p48 = scmp.ne.s32.totalorder %s34, %s35
      %p49 = scmp.eq.s32.totalorder %s27, 1
      %p50 = por %p48, %p49
      %p52 = scmp.ne.s32.totalorder %s35, %s51
      %p53 = scmp.eq.s32.totalorder %s27, 0
      %p54 = por %p52, %p53
      %s56 = sadd.s32 %s55, 1
      %p59 = scmp.eq.s32.totalorder %s21, 1
      %p60 = scmp.ne.s32.totalorder %s55, %s57
      %p61 = scmp.eq.s32.totalorder %s21, 0
      %p62 = por %p60, %p61
      %p63 = scmp.ne.s32.totalorder %s55, %s57
      %p64 = scmp.eq.s32.totalorder %s26, 1
      %p65 = por %p63, %p64
      %p66 = scmp.ne.s32.totalorder %s57, %s58
      %p67 = scmp.eq.s32.totalorder %s26, 0
      %p68 = por %p66, %p67
      %p69 = scmp.ne.s32.totalorder %s57, %s58
      %p70 = scmp.eq.s32.totalorder %s27, 1
      %p71 = por %p69, %p70
      %p73 = scmp.ne.s32.totalorder %s58, %s72
      %p74 = scmp.eq.s32.totalorder %s27, 0
      %p75 = por %p73, %p74
      %s77 = sadd.s32 %s76, 1
      %p80 = scmp.eq.s32.totalorder %s21, 1
      %p81 = scmp.ne.s32.totalorder %s76, %s78
      %p82 = scmp.eq.s32.totalorder %s21, 0
      %p83 = por %p81, %p82
      %p84 = scmp.ne.s32.totalorder %s76, %s78
      %p85 = scmp.eq.s32.totalorder %s26, 1
      %p86 = por %p84, %p85
      %p87 = scmp.ne.s32.totalorder %s78, %s79
      %p88 = scmp.eq.s32.totalorder %s26, 0
      %p89 = por %p87, %p88
      %p90 = scmp.ne.s32.totalorder %s78, %s79
      %p91 = scmp.eq.s32.totalorder %s27, 1
      %p92 = por %p90, %p91
      %p94 = scmp.ne.s32.totalorder %s79, %s93
      %p95 = scmp.eq.s32.totalorder %s27, 0
      %p96 = por %p94, %p95
      %s98 = sadd.s32 %s97, 1
      %p101 = scmp.eq.s32.totalorder %s21, 1
      %p102 = scmp.ne.s32.totalorder %s97, %s99
      %p103 = scmp.eq.s32.totalorder %s21, 0
      %p104 = por %p102, %p103
      %p105 = scmp.ne.s32.totalorder %s97, %s99
      %p106 = scmp.eq.s32.totalorder %s26, 1
      %p107 = por %p105, %p106
      %p108 = scmp.ne.s32.totalorder %s99, %s100
      %p109 = scmp.eq.s32.totalorder %s26, 0
      %p110 = por %p108, %p109
      %p111 = scmp.ne.s32.totalorder %s99, %s100
      %p112 = scmp.eq.s32.totalorder %s27, 1
      %p113 = por %p111, %p112
      %p115 = scmp.ne.s32.totalorder %s100, %s114
      %p116 = scmp.eq.s32.totalorder %s27, 0
      %p117 = por %p115, %p116
      %s119 = sadd.s32 %s118, 1
      %p122 = scmp.eq.s32.totalorder %s21, 1
      %p123 = scmp.ne.s32.totalorder %s118, %s120
      %p124 = scmp.eq.s32.totalorder %s21, 0
      %p125 = por %p123, %p124
      %p126 = scmp.ne.s32.totalorder %s118, %s120
      %p127 = scmp.eq.s32.totalorder %s26, 1
      %p128 = por %p126, %p127
      %p129 = scmp.ne.s32.totalorder %s120, %s121
      %p130 = scmp.eq.s32.totalorder %s26, 0
      %p131 = por %p129, %p130
      %p132 = scmp.ne.s32.totalorder %s120, %s121
      %p133 = scmp.eq.s32.totalorder %s27, 1
      %p134 = por %p132, %p133
      %p136 = scmp.ne.s32.totalorder %s121, %s135
      %p137 = scmp.eq.s32.totalorder %s27, 0
      %p138 = por %p136, %p137
      %s140 = sadd.s32 %s139, 1
      %p143 = scmp.eq.s32.totalorder %s21, 1
      %p144 = scmp.ne.s32.totalorder %s139, %s141
      %p145 = scmp.eq.s32.totalorder %s21, 0
      %p146 = por %p144, %p145
      %p147 = scmp.ne.s32.totalorder %s139, %s141
      %p148 = scmp.eq.s32.totalorder %s26, 1
      %p149 = por %p147, %p148
      %p150 = scmp.ne.s32.totalorder %s141, %s142
      %p151 = scmp.eq.s32.totalorder %s26, 0
      %p152 = por %p150, %p151
      %p153 = scmp.ne.s32.totalorder %s141, %s142
      %p154 = scmp.eq.s32.totalorder %s27, 1
      %p155 = por %p153, %p154
      %p157 = scmp.ne.s32.totalorder %s142, %s156
      %p158 = scmp.eq.s32.totalorder %s27, 0
      %p159 = por %p157, %p158
      %s161 = sadd.s32 %s160, 1
      %p164 = scmp.eq.s32.totalorder %s21, 1
      %p165 = scmp.ne.s32.totalorder %s160, %s162
      %p166 = scmp.eq.s32.totalorder %s21, 0
      %p167 = por %p165, %p166
      %p168 = scmp.ne.s32.totalorder %s160, %s162
      %p169 = scmp.eq.s32.totalorder %s26, 1
      %p170 = por %p168, %p169
      %p171 = scmp.ne.s32.totalorder %s162, %s163
      %p172 = scmp.eq.s32.totalorder %s26, 0
      %p173 = por %p171, %p172
      %p174 = scmp.ne.s32.totalorder %s162, %s163
      %p175 = scmp.eq.s32.totalorder %s27, 1
      %p176 = por %p174, %p175
      %p178 = scmp.ne.s32.totalorder %s163, %s177
      %p179 = scmp.eq.s32.totalorder %s27, 0
      %p180 = por %p178, %p179
      %s181 = ssub.s32 %s21, %s28
      %p182 = scmp.eq.s32.totalorder %s181, 0
      %s184 = sadd.s32 %s183, 1
      %s185 = scalar_select %p182, %s183, %s184
      %p188 = pneg %p182
      %p189 = scmp.eq.s32.totalorder %s21, 1
      %p190 = por %p188, %p189
      %p191 = scmp.ne.s32.totalorder %s183, %s186
      %p192 = scmp.eq.s32.totalorder %s21, 0
      %p193 = por %p191, %p192
      %p194 = scmp.ne.s32.totalorder %s183, %s186
      %p195 = scmp.eq.s32.totalorder %s26, 1
      %p196 = por %p194, %p195
      %p197 = scmp.ne.s32.totalorder %s186, %s187
      %p198 = scmp.eq.s32.totalorder %s26, 0
      %p199 = por %p197, %p198
      %p200 = scmp.ne.s32.totalorder %s186, %s187
      %p201 = scmp.eq.s32.totalorder %s27, 1
      %p202 = por %p200, %p201
      %p204 = scmp.ne.s32.totalorder %s187, %s203
      %p205 = scmp.eq.s32.totalorder %s27, 0
      %p206 = por %p204, %p205
      %s207 = ssub.s32 %s21, %s28
      %p208 = scmp.eq.s32.totalorder %s207, 0
      %s210 = sadd.s32 %s209, 1
      %s211 = scalar_select %p208, %s209, %s210
      %p214 = pneg %p208
      %p215 = scmp.eq.s32.totalorder %s21, 1
      %p216 = por %p214, %p215
      %p217 = scmp.ne.s32.totalorder %s209, %s212
      %p218 = scmp.eq.s32.totalorder %s21, 0
      %p219 = por %p217, %p218
      %p220 = scmp.ne.s32.totalorder %s209, %s212
      %p221 = scmp.eq.s32.totalorder %s26, 1
      %p222 = por %p220, %p221
      %p223 = scmp.ne.s32.totalorder %s212, %s213
      %p224 = scmp.eq.s32.totalorder %s26, 0
      %p225 = por %p223, %p224
      %p226 = scmp.ne.s32.totalorder %s212, %s213
      %p227 = scmp.eq.s32.totalorder %s27, 1
      %p228 = por %p226, %p227
      %p230 = scmp.ne.s32.totalorder %s213, %s229
      %p231 = scmp.eq.s32.totalorder %s27, 0
      %p232 = por %p230, %p231
      %p233 = scmp.le.s32.totalorder 1, %s21
      %p234 = scmp.lt.s32.totalorder %s21, 3
      %p235 = pnand %p233, %p234
      %p236 = pneg %p235
      // Predicated region
      $region9: #{pipe_forward.1} parent=5 // pred_check
        _
      $region10: #{pipe_forward.1} parent=5 // pred_check_branch
        %238 = sbr.rel (%p235) target = $region12
      $region11: #{pipe_forward.1} parent=5 // pred_region
        %s239 = ssub.s32 %s21, 1
        // Predicated region
        $region13: #{pipe_forward.1} parent=11 // pred_check
          %p240 = pneg %p68
        $region14: #{pipe_forward.1} parent=11 // pred_check_branch
          %242 = sbr.rel (%p240) target = $region16
        $region15: #{pipe_forward.1} parent=11 // pred_region
          _
        $region16: #{pipe_forward.1} parent=11 // pred_fallthru
          _
        // Predicated region
        $region17: #{pipe_forward.1} parent=11 // pred_check
          %p243 = pneg %p89
        $region18: #{pipe_forward.1} parent=11 // pred_check_branch
          %245 = sbr.rel (%p243) target = $region20
        $region19: #{pipe_forward.1} parent=11 // pred_region
          _
        $region20: #{pipe_forward.1} parent=11 // pred_fallthru
          _
        // Predicated region
        $region21: #{pipe_forward.1} parent=11 // pred_check
          %p246 = pneg %p110
        $region22: #{pipe_forward.1} parent=11 // pred_check_branch
          %248 = sbr.rel (%p246) target = $region24
        $region23: #{pipe_forward.1} parent=11 // pred_region
          _
        $region24: #{pipe_forward.1} parent=11 // pred_fallthru
          _
        // Predicated region
        $region25: #{pipe_forward.1} parent=11 // pred_check
          %p249 = pneg %p131
        $region26: #{pipe_forward.1} parent=11 // pred_check_branch
          %251 = sbr.rel (%p249) target = $region28
        $region27: #{pipe_forward.1} parent=11 // pred_region
          _
        $region28: #{pipe_forward.1} parent=11 // pred_fallthru
          _
        // Predicated region
        $region29: #{pipe_forward.1} parent=11 // pred_check
          %p252 = pneg %p152
        $region30: #{pipe_forward.1} parent=11 // pred_check_branch
          %254 = sbr.rel (%p252) target = $region32
        $region31: #{pipe_forward.1} parent=11 // pred_region
          _
        $region32: #{pipe_forward.1} parent=11 // pred_fallthru
          _
        // Predicated region
        $region33: #{pipe_forward.1} parent=11 // pred_check
          %p255 = pneg %p173
        $region34: #{pipe_forward.1} parent=11 // pred_check_branch
          %257 = sbr.rel (%p255) target = $region36
        $region35: #{pipe_forward.1} parent=11 // pred_region
          _
        $region36: #{pipe_forward.1} parent=11 // pred_fallthru
          _
      $region12: #{pipe_forward.1} parent=5 // pred_fallthru
        _
      %p258 = scmp.lt.s32.totalorder %s21, 2
      // Predicated region
      $region37: #{pipe_forward.1} parent=5 // pred_check
        %p259 = pneg %p258
      $region38: #{pipe_forward.1} parent=5 // pred_check_branch
        %261 = sbr.rel (%p259) target = $region40
      $region39: #{pipe_forward.1} parent=5 // pred_region
        // Predicated region
        $region41: #{pipe_forward.1} parent=39 // pred_check
          %p262 = pneg %p41
        $region42: #{pipe_forward.1} parent=39 // pred_check_branch
          %264 = sbr.rel (%p262) target = $region44
        $region43: #{pipe_forward.1} parent=39 // pred_region
          %p265 = scmp.lt.s32.totalorder %s21, 1
          %s266 = scalar_select %p265, %s21, 1
          %s267 = smul.addr %s266, 54
          %s268 = smul.addr %s267, 8
          %s269 = scalar_lea.vmem %s0, %s268
        $region44: #{pipe_forward.1} parent=39 // pred_fallthru
          _
      $region40: #{pipe_forward.1} parent=5 // pred_fallthru
        _
      %p270 = scmp.le.s32.totalorder 1, %s21
      %p271 = scmp.lt.s32.totalorder %s21, 3
      %p272 = pnand %p270, %p271
      %p273 = pneg %p272
      // Predicated region
      $region45: #{pipe_forward.1} parent=5 // pred_check
        _
      $region46: #{pipe_forward.1} parent=5 // pred_check_branch
        %275 = sbr.rel (%p272) target = $region48
      $region47: #{pipe_forward.1} parent=5 // pred_region
        %s276 = ssub.s32 %s21, 1
        %p277 = scmp.lt.s32.totalorder %s26, 1
        %s278 = scalar_select %p277, %s26, 1
        %s279 = smul.addr %s278, 54
        %s280 = smul.addr %s279, 8
        %s281 = scalar_lea.vmem %s0, %s280
        %p282 = pneg %p47
        %p283 = pneg %p44
        %p284 = pneg %p68
        %p285 = pneg %p65
        %p286 = pneg %p89
        %p287 = pneg %p86
        %p288 = pneg %p110
        %p289 = pneg %p107
        %p290 = pneg %p131
        %p291 = pneg %p128
        %p292 = pneg %p152
        %p293 = pneg %p149
        %p294 = pneg %p173
        %p295 = pneg %p170
        %p296 = pneg %p199
        %p297 = pneg %p196
        %s298 = sand.u32 %s186, 1
        %s299 = scalar_lea.sflag [#allocation3], %s298
        %s300 = sand.u32 %s186, 1
        %s301 = scalar_lea.vmem [#allocation2], %s300
        %p302 = pneg %p225
        %p303 = pneg %p222
        %s304 = sand.u32 %s212, 1
        %s305 = scalar_lea.sflag [#allocation5], %s304
        %s306 = sand.u32 %s212, 1
        %s307 = scalar_lea.vmem [#allocation4], %s306
        %p308 = scmp.lt.s32.totalorder %s26, 1
        %s309 = scalar_select %p308, %s26, 1
        %s310 = smul.addr %s309, 54
        %s311 = smul.addr %s310, 8
        %s312 = scalar_lea.vmem %s0, %s311
        %v313 = vld [vmem:[%s312] sm:$0xff]
        %v314 = vld [vmem:[%s312 + $0x8] sm:$0xff]
        %v315 = vld [vmem:[%s312 + $0x18] sm:$0xff]
        %v316 = vld [vmem:[%s312 + $0x20] sm:$0xff]
        %v317 = vld [vmem:[%s312 + $0x30] sm:$0xff]
        %v318 = vld [vmem:[%s312 + $0x38] sm:$0xff]
        %v319 = vld [vmem:[%s312 + $0x48] sm:$0xff]
        %v320 = vld [vmem:[%s312 + $0x50] sm:$0xff]
        %v321 = vld [vmem:[%s312 + $0x60] sm:$0xff]
        %v322 = vld [vmem:[%s312 + $0x68] sm:$0xff]
        %v323 = vld [vmem:[%s312 + $0x78] sm:$0xff]
        %v324 = vld [vmem:[%s312 + $0x80] sm:$0xff]
        %v325 = vld [vmem:[%s312 + $0x90] sm:$0xff]
        %v326 = vld [vmem:[%s312 + $0x98] sm:$0xff]
        %v327 = vld [vmem:[%s312 + $0xa8] sm:$0xff]
        %v328 = vld [vmem:[%s312 + $0xb0] sm:$0xff]
        %v329 = vld [vmem:[%s312 + $0xc0] sm:$0xff]
        %v330 = vld [vmem:[%s312 + $0xc8] sm:$0xff]
        %v331 = vld [vmem:[%s312 + $0xd8] sm:$0xff]
        %v332 = vld [vmem:[%s312 + $0xe0] sm:$0xff]
        %v333 = vld [vmem:[%s312 + $0xf0] sm:$0xff]
        %v334 = vld [vmem:[%s312 + $0xf8] sm:$0xff]
        %v335 = vld [vmem:[%s312 + $0x108] sm:$0xff]
        %v336 = vld [vmem:[%s312 + $0x110] sm:$0xff]
        %v337 = vld [vmem:[%s312 + $0x120] sm:$0xff]
        %v338 = vld [vmem:[%s312 + $0x128] sm:$0xff]
        %v339 = vld [vmem:[%s312 + $0x138] sm:$0xff]
        %v340 = vld [vmem:[%s312 + $0x140] sm:$0xff]
        %v341 = vld [vmem:[%s312 + $0x150] sm:$0xff]
        %v342 = vld [vmem:[%s312 + $0x158] sm:$0xff]
        %v343 = vld [vmem:[%s312 + $0x168] sm:$0xff]
        %v344 = vld [vmem:[%s312 + $0x170] sm:$0xff]
        %v345 = vld [vmem:[%s1] sm:$0x7]
        %v346 = vld [vmem:[%s312 + $0x1] sm:$0xff]
        %v347 = vld [vmem:[%s312 + $0x9] sm:$0xff]
        %v348 = vld [vmem:[%s312 + $0x19] sm:$0xff]
        %v349 = vld [vmem:[%s312 + $0x21] sm:$0xff]
        %v350 = vld [vmem:[%s312 + $0x31] sm:$0xff]
        %v351 = vld [vmem:[%s312 + $0x39] sm:$0xff]
        %v352 = vld [vmem:[%s312 + $0x49] sm:$0xff]
        %v353 = vld [vmem:[%s312 + $0x51] sm:$0xff]
        %v354 = vld [vmem:[%s312 + $0x61] sm:$0xff]
        %v355 = vld [vmem:[%s312 + $0x69] sm:$0xff]
        %v356 = vld [vmem:[%s312 + $0x79] sm:$0xff]
        %v357 = vld [vmem:[%s312 + $0x81] sm:$0xff]
        %v358 = vld [vmem:[%s312 + $0x91] sm:$0xff]
        %v359 = vld [vmem:[%s312 + $0x99] sm:$0xff]
        %v360 = vld [vmem:[%s312 + $0xa9] sm:$0xff]
        %v361 = vld [vmem:[%s312 + $0xb1] sm:$0xff]
        %v362 = vld [vmem:[%s312 + $0xc1] sm:$0xff]
        %v363 = vld [vmem:[%s312 + $0xc9] sm:$0xff]
        %v364 = vld [vmem:[%s312 + $0xd9] sm:$0xff]
        %v365 = vld [vmem:[%s312 + $0xe1] sm:$0xff]
        %v366 = vld [vmem:[%s312 + $0xf1] sm:$0xff]
        %v367 = vld [vmem:[%s312 + $0xf9] sm:$0xff]
        %v368 = vld [vmem:[%s312 + $0x109] sm:$0xff]
        %v369 = vld [vmem:[%s312 + $0x111] sm:$0xff]
        %v370 = vld [vmem:[%s312 + $0x121] sm:$0xff]
        %v371 = vld [vmem:[%s312 + $0x129] sm:$0xff]
        %v372 = vld [vmem:[%s312 + $0x139] sm:$0xff]
        %v373 = vld [vmem:[%s312 + $0x141] sm:$0xff]
        %v374 = vld [vmem:[%s312 + $0x151] sm:$0xff]
        %v375 = vld [vmem:[%s312 + $0x159] sm:$0xff]
        %v376 = vld [vmem:[%s312 + $0x169] sm:$0xff]
        %v377 = vld [vmem:[%s312 + $0x171] sm:$0xff]
        %s378 = scalar_lea.vmem %s1, 4
        %v379 = vld [vmem:[%s378] sm:$0x7]
        %vm380 = vcmask 23552
        %v382 = vsel %vm380, %v346, 0
        %v385 = vsel %vm380, %v347, 0
        %v388 = vsel %vm380, %v348, 0
        %v391 = vsel %vm380, %v349, 0
        %v394 = vsel %vm380, %v350, 0
        %v397 = vsel %vm380, %v351, 0
        %v400 = vsel %vm380, %v352, 0
        %v403 = vsel %vm380, %v353, 0
        %v406 = vsel %vm380, %v354, 0
        %v409 = vsel %vm380, %v355, 0
        %v412 = vsel %vm380, %v356, 0
        %v415 = vsel %vm380, %v357, 0
        %v418 = vsel %vm380, %v358, 0
        %v421 = vsel %vm380, %v359, 0
        %v424 = vsel %vm380, %v360, 0
        %v427 = vsel %vm380, %v361, 0
        %v430 = vsel %vm380, %v362, 0
        %v433 = vsel %vm380, %v363, 0
        %v436 = vsel %vm380, %v364, 0
        %v439 = vsel %vm380, %v365, 0
        %v442 = vsel %vm380, %v366, 0
        %v445 = vsel %vm380, %v367, 0
        %v448 = vsel %vm380, %v368, 0
        %v451 = vsel %vm380, %v369, 0
        %v454 = vsel %vm380, %v370, 0
        %v457 = vsel %vm380, %v371, 0
        %v460 = vsel %vm380, %v372, 0
        %v463 = vsel %vm380, %v373, 0
        %v466 = vsel %vm380, %v374, 0
        %v469 = vsel %vm380, %v375, 0
        %v472 = vsel %vm380, %v376, 0
        %v475 = vsel %vm380, %v377, 0
        %vm477 = vcmask 1042432
        %v479 = vsel %vm477, %v379, 0
        %481 = vmatprep.subr.mxu0 0.0
        %482 = vmatpush1.msra.mxu0 0.0
        %483 = vmatprep.subr.mxu0 0.0
        %484 = vmatpush1.msra.mxu0 0.0
        %485 = vmatprep.subr.mxu0 0.0
        %486 = vmatpush1.msra.mxu0 0.0
        %487 = vmatprep.subr.mxu0 0.0
        %488 = vmatpush1.msra.mxu0 0.0
        %489 = vmatprep.subr.mxu0 0.0
        %490 = vmatpush1.msra.mxu0 0.0
        %491 = vmatprep.subr.mxu0 0.0
        %492 = vmatpush1.msra.mxu0 0.0
        %493 = vmatprep.subr.mxu0 0.0
        %494 = vmatpush1.msra.mxu0 0.0
        %495 = vmatprep.subr.mxu0 0.0
        %496 = vmatpush1.msra.mxu0 0.0
        %497 = vmatprep.subr.mxu0 0.0
        %498 = vmatpush1.msra.mxu0 0.0
        %499 = vmatprep.subr.mxu0 0.0
        %500 = vmatpush1.msra.mxu0 0.0
        %501 = vmatprep.subr.mxu0 0.0
        %502 = vmatpush1.msra.mxu0 0.0
        %503 = vmatprep.subr.mxu0 0.0
        %504 = vmatpush1.msra.mxu0 0.0
        %505 = vmatprep.subr.mxu0 0.0
        %506 = vmatpush1.msra.mxu0 0.0
        %507 = vmatprep.subr.mxu0 0.0
        %508 = vmatpush1.msra.mxu0 0.0
        %509 = vmatprep.subr.mxu0 0.0
        %510 = vmatpush1.msra.mxu0 0.0
        %511 = vmatprep.subr.mxu0 0.0
        %512 = vmatpush1.msra.mxu0 %v479
        %513 = vmatprep.subr.mxu0 0.0
        %514 = vmatpush2.msra.mxu0 0.0
        %515 = vmatprep.subr.mxu0 0.0
        %516 = vmatpush2.msra.mxu0 0.0
        %517 = vmatprep.subr.mxu0 0.0
        %518 = vmatpush2.msra.mxu0 0.0
        %519 = vmatprep.subr.mxu0 0.0
        %520 = vmatpush2.msra.mxu0 0.0
        %521 = vmatprep.subr.mxu0 0.0
        %522 = vmatpush2.msra.mxu0 0.0
        %523 = vmatprep.subr.mxu0 0.0
        %524 = vmatpush2.msra.mxu0 0.0
        %525 = vmatprep.subr.mxu0 0.0
        %526 = vmatpush2.msra.mxu0 0.0
        %527 = vmatprep.subr.mxu0 0.0
        %528 = vmatpush2.msra.mxu0 0.0
        %529 = vmatprep.subr.mxu0 0.0
        %530 = vmatpush2.msra.mxu0 0.0
        %531 = vmatprep.subr.mxu0 0.0
        %532 = vmatpush2.msra.mxu0 0.0
        %533 = vmatprep.subr.mxu0 0.0
        %534 = vmatpush2.msra.mxu0 0.0
        %535 = vmatprep.subr.mxu0 0.0
        %536 = vmatpush2.msra.mxu0 0.0
        %537 = vmatprep.subr.mxu0 0.0
        %538 = vmatpush2.msra.mxu0 0.0
        %539 = vmatprep.subr.mxu0 0.0
        %540 = vmatpush2.msra.mxu0 0.0
        %541 = vmatprep.subr.mxu0 0.0
        %542 = vmatpush2.msra.mxu0 0.0
        %543 = vmatprep.subr.mxu0 0.0
        %544 = vmatpush2.msra.mxu0 0.0
        %545 = vmatprep.mubr.f32.mxu0 0.0
        %546 = vmatmul.mubr.f32.gmra.mxu0 %v382
        %v547 = vpop.f32.mrf.mxu0
        %v548 = vadd.f32 0.0, %v547
        %v549 = vpop.f32.mrf.mxu0
        %550 = vmatprep.mubr.f32.mxu0 0.0
        %551 = vmatmul.mubr.f32.gmra.mxu0 %v385
        %v552 = vpop.f32.mrf.mxu0
        %v553 = vadd.f32 0.0, %v552
        %v554 = vpop.f32.mrf.mxu0
        %555 = vmatprep.mubr.f32.mxu0 0.0
        %556 = vmatmul.mubr.f32.gmra.mxu0 %v388
        %v557 = vpop.f32.mrf.mxu0
        %v558 = vadd.f32 0.0, %v557
        %v559 = vpop.f32.mrf.mxu0
        %560 = vmatprep.mubr.f32.mxu0 0.0
        %561 = vmatmul.mubr.f32.gmra.mxu0 %v391
        %v562 = vpop.f32.mrf.mxu0
        %v563 = vadd.f32 0.0, %v562
        %v564 = vpop.f32.mrf.mxu0
        %565 = vmatprep.mubr.f32.mxu0 0.0
        %566 = vmatmul.mubr.f32.gmra.mxu0 %v394
        %v567 = vpop.f32.mrf.mxu0
        %v568 = vadd.f32 0.0, %v567
        %v569 = vpop.f32.mrf.mxu0
        %570 = vmatprep.mubr.f32.mxu0 0.0
        %571 = vmatmul.mubr.f32.gmra.mxu0 %v397
        %v572 = vpop.f32.mrf.mxu0
        %v573 = vadd.f32 0.0, %v572
        %v574 = vpop.f32.mrf.mxu0
        %575 = vmatprep.mubr.f32.mxu0 0.0
        %576 = vmatmul.mubr.f32.gmra.mxu0 %v400
        %v577 = vpop.f32.mrf.mxu0
        %v578 = vadd.f32 0.0, %v577
        %v579 = vpop.f32.mrf.mxu0
        %580 = vmatprep.mubr.f32.mxu0 0.0
        %581 = vmatmul.mubr.f32.gmra.mxu0 %v403
        %v582 = vpop.f32.mrf.mxu0
        %v583 = vadd.f32 0.0, %v582
        %v584 = vpop.f32.mrf.mxu0
        %585 = vmatprep.mubr.f32.mxu0 0.0
        %586 = vmatmul.mubr.f32.gmra.mxu0 %v406
        %v587 = vpop.f32.mrf.mxu0
        %v588 = vadd.f32 0.0, %v587
        %v589 = vpop.f32.mrf.mxu0
        %590 = vmatprep.mubr.f32.mxu0 0.0
        %591 = vmatmul.mubr.f32.gmra.mxu0 %v409
        %v592 = vpop.f32.mrf.mxu0
        %v593 = vadd.f32 0.0, %v592
        %v594 = vpop.f32.mrf.mxu0
        %595 = vmatprep.mubr.f32.mxu0 0.0
        %596 = vmatmul.mubr.f32.gmra.mxu0 %v412
        %v597 = vpop.f32.mrf.mxu0
        %v598 = vadd.f32 0.0, %v597
        %v599 = vpop.f32.mrf.mxu0
        %600 = vmatprep.mubr.f32.mxu0 0.0
        %601 = vmatmul.mubr.f32.gmra.mxu0 %v415
        %v602 = vpop.f32.mrf.mxu0
        %v603 = vadd.f32 0.0, %v602
        %v604 = vpop.f32.mrf.mxu0
        %605 = vmatprep.mubr.f32.mxu0 0.0
        %606 = vmatmul.mubr.f32.gmra.mxu0 %v418
        %v607 = vpop.f32.mrf.mxu0
        %v608 = vadd.f32 0.0, %v607
        %v609 = vpop.f32.mrf.mxu0
        %610 = vmatprep.mubr.f32.mxu0 0.0
        %611 = vmatmul.mubr.f32.gmra.mxu0 %v421
        %v612 = vpop.f32.mrf.mxu0
        %v613 = vadd.f32 0.0, %v612
        %v614 = vpop.f32.mrf.mxu0
        %615 = vmatprep.mubr.f32.mxu0 0.0
        %616 = vmatmul.mubr.f32.gmra.mxu0 %v424
        %v617 = vpop.f32.mrf.mxu0
        %v618 = vadd.f32 0.0, %v617
        %v619 = vpop.f32.mrf.mxu0
        %620 = vmatprep.mubr.f32.mxu0 0.0
        %621 = vmatmul.mubr.f32.gmra.mxu0 %v427
        %v622 = vpop.f32.mrf.mxu0
        %v623 = vadd.f32 0.0, %v622
        %v624 = vpop.f32.mrf.mxu0
        %625 = vmatprep.mubr.f32.mxu0 0.0
        %626 = vmatmul.mubr.f32.gmra.mxu0 %v430
        %v627 = vpop.f32.mrf.mxu0
        %v628 = vadd.f32 0.0, %v627
        %v629 = vpop.f32.mrf.mxu0
        %630 = vmatprep.mubr.f32.mxu0 0.0
        %631 = vmatmul.mubr.f32.gmra.mxu0 %v433
        %v632 = vpop.f32.mrf.mxu0
        %v633 = vadd.f32 0.0, %v632
        %v634 = vpop.f32.mrf.mxu0
        %635 = vmatprep.mubr.f32.mxu0 0.0
        %636 = vmatmul.mubr.f32.gmra.mxu0 %v436
        %v637 = vpop.f32.mrf.mxu0
        %v638 = vadd.f32 0.0, %v637
        %v639 = vpop.f32.mrf.mxu0
        %640 = vmatprep.mubr.f32.mxu0 0.0
        %641 = vmatmul.mubr.f32.gmra.mxu0 %v439
        %v642 = vpop.f32.mrf.mxu0
        %v643 = vadd.f32 0.0, %v642
        %v644 = vpop.f32.mrf.mxu0
        %645 = vmatprep.mubr.f32.mxu0 0.0
        %646 = vmatmul.mubr.f32.gmra.mxu0 %v442
        %v647 = vpop.f32.mrf.mxu0
        %v648 = vadd.f32 0.0, %v647
        %v649 = vpop.f32.mrf.mxu0
        %650 = vmatprep.mubr.f32.mxu0 0.0
        %651 = vmatmul.mubr.f32.gmra.mxu0 %v445
        %v652 = vpop.f32.mrf.mxu0
        %v653 = vadd.f32 0.0, %v652
        %v654 = vpop.f32.mrf.mxu0
        %655 = vmatprep.mubr.f32.mxu0 0.0
        %656 = vmatmul.mubr.f32.gmra.mxu0 %v448
        %v657 = vpop.f32.mrf.mxu0
        %v658 = vadd.f32 0.0, %v657
        %v659 = vpop.f32.mrf.mxu0
        %660 = vmatprep.mubr.f32.mxu0 0.0
        %661 = vmatmul.mubr.f32.gmra.mxu0 %v451
        %v662 = vpop.f32.mrf.mxu0
        %v663 = vadd.f32 0.0, %v662
        %v664 = vpop.f32.mrf.mxu0
        %665 = vmatprep.mubr.f32.mxu0 0.0
        %666 = vmatmul.mubr.f32.gmra.mxu0 %v454
        %v667 = vpop.f32.mrf.mxu0
        %v668 = vadd.f32 0.0, %v667
        %v669 = vpop.f32.mrf.mxu0
        %670 = vmatprep.mubr.f32.mxu0 0.0
        %671 = vmatmul.mubr.f32.gmra.mxu0 %v457
        %v672 = vpop.f32.mrf.mxu0
        %v673 = vadd.f32 0.0, %v672
        %v674 = vpop.f32.mrf.mxu0
        %675 = vmatprep.mubr.f32.mxu0 0.0
        %676 = vmatmul.mubr.f32.gmra.mxu0 %v460
        %v677 = vpop.f32.mrf.mxu0
        %v678 = vadd.f32 0.0, %v677
        %v679 = vpop.f32.mrf.mxu0
        %680 = vmatprep.mubr.f32.mxu0 0.0
        %681 = vmatmul.mubr.f32.gmra.mxu0 %v463
        %v682 = vpop.f32.mrf.mxu0
        %v683 = vadd.f32 0.0, %v682
        %v684 = vpop.f32.mrf.mxu0
        %685 = vmatprep.mubr.f32.mxu0 0.0
        %686 = vmatmul.mubr.f32.gmra.mxu0 %v466
        %v687 = vpop.f32.mrf.mxu0
        %v688 = vadd.f32 0.0, %v687
        %v689 = vpop.f32.mrf.mxu0
        %690 = vmatprep.mubr.f32.mxu0 0.0
        %691 = vmatmul.mubr.f32.gmra.mxu0 %v469
        %v692 = vpop.f32.mrf.mxu0
        %v693 = vadd.f32 0.0, %v692
        %v694 = vpop.f32.mrf.mxu0
        %695 = vmatprep.mubr.f32.mxu0 0.0
        %696 = vmatmul.mubr.f32.gmra.mxu0 %v472
        %v697 = vpop.f32.mrf.mxu0
        %v698 = vadd.f32 0.0, %v697
        %v699 = vpop.f32.mrf.mxu0
        %700 = vmatprep.mubr.f32.mxu0 0.0
        %701 = vmatmul.mubr.f32.gmra.mxu0 %v475
        %v702 = vpop.f32.mrf.mxu0
        %v703 = vadd.f32 0.0, %v702
        %v704 = vpop.f32.mrf.mxu0
        %705 = vdwg.mxu0
        %v707 = vsel %vm380, %v313, 0
        %v710 = vsel %vm380, %v314, 0
        %v713 = vsel %vm380, %v315, 0
        %v716 = vsel %vm380, %v316, 0
        %v719 = vsel %vm380, %v317, 0
        %v722 = vsel %vm380, %v318, 0
        %v725 = vsel %vm380, %v319, 0
        %v728 = vsel %vm380, %v320, 0
        %v731 = vsel %vm380, %v321, 0
        %v734 = vsel %vm380, %v322, 0
        %v737 = vsel %vm380, %v323, 0
        %v740 = vsel %vm380, %v324, 0
        %v743 = vsel %vm380, %v325, 0
        %v746 = vsel %vm380, %v326, 0
        %v749 = vsel %vm380, %v327, 0
        %v752 = vsel %vm380, %v328, 0
        %v755 = vsel %vm380, %v329, 0
        %v758 = vsel %vm380, %v330, 0
        %v761 = vsel %vm380, %v331, 0
        %v764 = vsel %vm380, %v332, 0
        %v767 = vsel %vm380, %v333, 0
        %v770 = vsel %vm380, %v334, 0
        %v773 = vsel %vm380, %v335, 0
        %v776 = vsel %vm380, %v336, 0
        %v779 = vsel %vm380, %v337, 0
        %v782 = vsel %vm380, %v338, 0
        %v785 = vsel %vm380, %v339, 0
        %v788 = vsel %vm380, %v340, 0
        %v791 = vsel %vm380, %v341, 0
        %v794 = vsel %vm380, %v342, 0
        %v797 = vsel %vm380, %v343, 0
        %v800 = vsel %vm380, %v344, 0
        %v803 = vsel %vm477, %v345, 0
        %805 = vmatprep.subr.mxu0 0.0
        %806 = vmatpush1.msra.mxu0 0.0
        %807 = vmatprep.subr.mxu0 0.0
        %808 = vmatpush1.msra.mxu0 0.0
        %809 = vmatprep.subr.mxu0 0.0
        %810 = vmatpush1.msra.mxu0 0.0
        %811 = vmatprep.subr.mxu0 0.0
        %812 = vmatpush1.msra.mxu0 0.0
        %813 = vmatprep.subr.mxu0 0.0
        %814 = vmatpush1.msra.mxu0 0.0
        %815 = vmatprep.subr.mxu0 0.0
        %816 = vmatpush1.msra.mxu0 0.0
        %817 = vmatprep.subr.mxu0 0.0
        %818 = vmatpush1.msra.mxu0 0.0
        %819 = vmatprep.subr.mxu0 0.0
        %820 = vmatpush1.msra.mxu0 0.0
        %821 = vmatprep.subr.mxu0 0.0
        %822 = vmatpush1.msra.mxu0 0.0
        %823 = vmatprep.subr.mxu0 0.0
        %824 = vmatpush1.msra.mxu0 0.0
        %825 = vmatprep.subr.mxu0 0.0
        %826 = vmatpush1.msra.mxu0 0.0
        %827 = vmatprep.subr.mxu0 0.0
        %828 = vmatpush1.msra.mxu0 0.0
        %829 = vmatprep.subr.mxu0 0.0
        %830 = vmatpush1.msra.mxu0 0.0
        %831 = vmatprep.subr.mxu0 0.0
        %832 = vmatpush1.msra.mxu0 0.0
        %833 = vmatprep.subr.mxu0 0.0
        %834 = vmatpush1.msra.mxu0 0.0
        %835 = vmatprep.subr.mxu0 0.0
        %836 = vmatpush1.msra.mxu0 %v803
        %837 = vmatprep.subr.mxu0 0.0
        %838 = vmatpush2.msra.mxu0 0.0
        %839 = vmatprep.subr.mxu0 0.0
        %840 = vmatpush2.msra.mxu0 0.0
        %841 = vmatprep.subr.mxu0 0.0
        %842 = vmatpush2.msra.mxu0 0.0
        %843 = vmatprep.subr.mxu0 0.0
        %844 = vmatpush2.msra.mxu0 0.0
        %845 = vmatprep.subr.mxu0 0.0
        %846 = vmatpush2.msra.mxu0 0.0
        %847 = vmatprep.subr.mxu0 0.0
        %848 = vmatpush2.msra.mxu0 0.0
        %849 = vmatprep.subr.mxu0 0.0
        %850 = vmatpush2.msra.mxu0 0.0
        %851 = vmatprep.subr.mxu0 0.0
        %852 = vmatpush2.msra.mxu0 0.0
        %853 = vmatprep.subr.mxu0 0.0
        %854 = vmatpush2.msra.mxu0 0.0
        %855 = vmatprep.subr.mxu0 0.0
        %856 = vmatpush2.msra.mxu0 0.0
        %857 = vmatprep.subr.mxu0 0.0
        %858 = vmatpush2.msra.mxu0 0.0
        %859 = vmatprep.subr.mxu0 0.0
        %860 = vmatpush2.msra.mxu0 0.0
        %861 = vmatprep.subr.mxu0 0.0
        %862 = vmatpush2.msra.mxu0 0.0
        %863 = vmatprep.subr.mxu0 0.0
        %864 = vmatpush2.msra.mxu0 0.0
        %865 = vmatprep.subr.mxu0 0.0
        %866 = vmatpush2.msra.mxu0 0.0
        %867 = vmatprep.subr.mxu0 0.0
        %868 = vmatpush2.msra.mxu0 0.0
        %869 = vmatprep.mubr.f32.mxu0 0.0
        %870 = vmatmul.mubr.f32.gmra.mxu0 %v707
        %v871 = vpop.f32.mrf.mxu0
        %v872 = vadd.f32 %v548, %v871
        %v873 = vpop.f32.mrf.mxu0
        %874 = vmatprep.mubr.f32.mxu0 0.0
        %875 = vmatmul.mubr.f32.gmra.mxu0 %v710
        %v876 = vpop.f32.mrf.mxu0
        %v877 = vadd.f32 %v553, %v876
        %v878 = vpop.f32.mrf.mxu0
        %879 = vmatprep.mubr.f32.mxu0 0.0
        %880 = vmatmul.mubr.f32.gmra.mxu0 %v713
        %v881 = vpop.f32.mrf.mxu0
        %v882 = vadd.f32 %v558, %v881
        %v883 = vpop.f32.mrf.mxu0
        %884 = vmatprep.mubr.f32.mxu0 0.0
        %885 = vmatmul.mubr.f32.gmra.mxu0 %v716
        %v886 = vpop.f32.mrf.mxu0
        %v887 = vadd.f32 %v563, %v886
        %v888 = vpop.f32.mrf.mxu0
        %889 = vmatprep.mubr.f32.mxu0 0.0
        %890 = vmatmul.mubr.f32.gmra.mxu0 %v719
        %v891 = vpop.f32.mrf.mxu0
        %v892 = vadd.f32 %v568, %v891
        %v893 = vpop.f32.mrf.mxu0
        %894 = vmatprep.mubr.f32.mxu0 0.0
        %895 = vmatmul.mubr.f32.gmra.mxu0 %v722
        %v896 = vpop.f32.mrf.mxu0
        %v897 = vadd.f32 %v573, %v896
        %v898 = vpop.f32.mrf.mxu0
        %899 = vmatprep.mubr.f32.mxu0 0.0
        %900 = vmatmul.mubr.f32.gmra.mxu0 %v725
        %v901 = vpop.f32.mrf.mxu0
        %v902 = vadd.f32 %v578, %v901
        %v903 = vpop.f32.mrf.mxu0
        %904 = vmatprep.mubr.f32.mxu0 0.0
        %905 = vmatmul.mubr.f32.gmra.mxu0 %v728
        %v906 = vpop.f32.mrf.mxu0
        %v907 = vadd.f32 %v583, %v906
        %v908 = vpop.f32.mrf.mxu0
        %909 = vmatprep.mubr.f32.mxu0 0.0
        %910 = vmatmul.mubr.f32.gmra.mxu0 %v731
        %v911 = vpop.f32.mrf.mxu0
        %v912 = vadd.f32 %v588, %v911
        %v913 = vpop.f32.mrf.mxu0
        %914 = vmatprep.mubr.f32.mxu0 0.0
        %915 = vmatmul.mubr.f32.gmra.mxu0 %v734
        %v916 = vpop.f32.mrf.mxu0
        %v917 = vadd.f32 %v593, %v916
        %v918 = vpop.f32.mrf.mxu0
        %919 = vmatprep.mubr.f32.mxu0 0.0
        %920 = vmatmul.mubr.f32.gmra.mxu0 %v737
        %v921 = vpop.f32.mrf.mxu0
        %v922 = vadd.f32 %v598, %v921
        %v923 = vpop.f32.mrf.mxu0
        %924 = vmatprep.mubr.f32.mxu0 0.0
        %925 = vmatmul.mubr.f32.gmra.mxu0 %v740
        %v926 = vpop.f32.mrf.mxu0
        %v927 = vadd.f32 %v603, %v926
        %v928 = vpop.f32.mrf.mxu0
        %929 = vmatprep.mubr.f32.mxu0 0.0
        %930 = vmatmul.mubr.f32.gmra.mxu0 %v743
        %v931 = vpop.f32.mrf.mxu0
        %v932 = vadd.f32 %v608, %v931
        %v933 = vpop.f32.mrf.mxu0
        %934 = vmatprep.mubr.f32.mxu0 0.0
        %935 = vmatmul.mubr.f32.gmra.mxu0 %v746
        %v936 = vpop.f32.mrf.mxu0
        %v937 = vadd.f32 %v613, %v936
        %v938 = vpop.f32.mrf.mxu0
        %939 = vmatprep.mubr.f32.mxu0 0.0
        %940 = vmatmul.mubr.f32.gmra.mxu0 %v749
        %v941 = vpop.f32.mrf.mxu0
        %v942 = vadd.f32 %v618, %v941
        %v943 = vpop.f32.mrf.mxu0
        %944 = vmatprep.mubr.f32.mxu0 0.0
        %945 = vmatmul.mubr.f32.gmra.mxu0 %v752
        %v946 = vpop.f32.mrf.mxu0
        %v947 = vadd.f32 %v623, %v946
        %v948 = vpop.f32.mrf.mxu0
        %949 = vmatprep.mubr.f32.mxu0 0.0
        %950 = vmatmul.mubr.f32.gmra.mxu0 %v755
        %v951 = vpop.f32.mrf.mxu0
        %v952 = vadd.f32 %v628, %v951
        %v953 = vpop.f32.mrf.mxu0
        %954 = vmatprep.mubr.f32.mxu0 0.0
        %955 = vmatmul.mubr.f32.gmra.mxu0 %v758
        %v956 = vpop.f32.mrf.mxu0
        %v957 = vadd.f32 %v633, %v956
        %v958 = vpop.f32.mrf.mxu0
        %959 = vmatprep.mubr.f32.mxu0 0.0
        %960 = vmatmul.mubr.f32.gmra.mxu0 %v761
        %v961 = vpop.f32.mrf.mxu0
        %v962 = vadd.f32 %v638, %v961
        %v963 = vpop.f32.mrf.mxu0
        %964 = vmatprep.mubr.f32.mxu0 0.0
        %965 = vmatmul.mubr.f32.gmra.mxu0 %v764
        %v966 = vpop.f32.mrf.mxu0
        %v967 = vadd.f32 %v643, %v966
        %v968 = vpop.f32.mrf.mxu0
        %969 = vmatprep.mubr.f32.mxu0 0.0
        %970 = vmatmul.mubr.f32.gmra.mxu0 %v767
        %v971 = vpop.f32.mrf.mxu0
        %v972 = vadd.f32 %v648, %v971
        %v973 = vpop.f32.mrf.mxu0
        %974 = vmatprep.mubr.f32.mxu0 0.0
        %975 = vmatmul.mubr.f32.gmra.mxu0 %v770
        %v976 = vpop.f32.mrf.mxu0
        %v977 = vadd.f32 %v653, %v976
        %v978 = vpop.f32.mrf.mxu0
        %979 = vmatprep.mubr.f32.mxu0 0.0
        %980 = vmatmul.mubr.f32.gmra.mxu0 %v773
        %v981 = vpop.f32.mrf.mxu0
        %v982 = vadd.f32 %v658, %v981
        %v983 = vpop.f32.mrf.mxu0
        %984 = vmatprep.mubr.f32.mxu0 0.0
        %985 = vmatmul.mubr.f32.gmra.mxu0 %v776
        %v986 = vpop.f32.mrf.mxu0
        %v987 = vadd.f32 %v663, %v986
        %v988 = vpop.f32.mrf.mxu0
        %989 = vmatprep.mubr.f32.mxu0 0.0
        %990 = vmatmul.mubr.f32.gmra.mxu0 %v779
        %v991 = vpop.f32.mrf.mxu0
        %v992 = vadd.f32 %v668, %v991
        %v993 = vpop.f32.mrf.mxu0
        %994 = vmatprep.mubr.f32.mxu0 0.0
        %995 = vmatmul.mubr.f32.gmra.mxu0 %v782
        %v996 = vpop.f32.mrf.mxu0
        %v997 = vadd.f32 %v673, %v996
        %v998 = vpop.f32.mrf.mxu0
        %999 = vmatprep.mubr.f32.mxu0 0.0
        %1000 = vmatmul.mubr.f32.gmra.mxu0 %v785
        %v1001 = vpop.f32.mrf.mxu0
        %v1002 = vadd.f32 %v678, %v1001
        %v1003 = vpop.f32.mrf.mxu0
        %1004 = vmatprep.mubr.f32.mxu0 0.0
        %1005 = vmatmul.mubr.f32.gmra.mxu0 %v788
        %v1006 = vpop.f32.mrf.mxu0
        %v1007 = vadd.f32 %v683, %v1006
        %v1008 = vpop.f32.mrf.mxu0
        %1009 = vmatprep.mubr.f32.mxu0 0.0
        %1010 = vmatmul.mubr.f32.gmra.mxu0 %v791
        %v1011 = vpop.f32.mrf.mxu0
        %v1012 = vadd.f32 %v688, %v1011
        %v1013 = vpop.f32.mrf.mxu0
        %1014 = vmatprep.mubr.f32.mxu0 0.0
        %1015 = vmatmul.mubr.f32.gmra.mxu0 %v794
        %v1016 = vpop.f32.mrf.mxu0
        %v1017 = vadd.f32 %v693, %v1016
        %v1018 = vpop.f32.mrf.mxu0
        %1019 = vmatprep.mubr.f32.mxu0 0.0
        %1020 = vmatmul.mubr.f32.gmra.mxu0 %v797
        %v1021 = vpop.f32.mrf.mxu0
        %v1022 = vadd.f32 %v698, %v1021
        %v1023 = vpop.f32.mrf.mxu0
        %1024 = vmatprep.mubr.f32.mxu0 0.0
        %1025 = vmatmul.mubr.f32.gmra.mxu0 %v800
        %v1026 = vpop.f32.mrf.mxu0
        %v1027 = vadd.f32 %v703, %v1026
        %v1028 = vpop.f32.mrf.mxu0
        %1029 = vdwg.mxu0
        %v1030 = vld [vmem:[%s312 + $0x2] sm:$0xff]
        %v1031 = vld [vmem:[%s312 + $0xa] sm:$0xff]
        %v1032 = vld [vmem:[%s312 + $0x1a] sm:$0xff]
        %v1033 = vld [vmem:[%s312 + $0x22] sm:$0xff]
        %v1034 = vld [vmem:[%s312 + $0x32] sm:$0xff]
        %v1035 = vld [vmem:[%s312 + $0x3a] sm:$0xff]
        %v1036 = vld [vmem:[%s312 + $0x4a] sm:$0xff]
        %v1037 = vld [vmem:[%s312 + $0x52] sm:$0xff]
        %v1038 = vld [vmem:[%s312 + $0x62] sm:$0xff]
        %v1039 = vld [vmem:[%s312 + $0x6a] sm:$0xff]
        %v1040 = vld [vmem:[%s312 + $0x7a] sm:$0xff]
        %v1041 = vld [vmem:[%s312 + $0x82] sm:$0xff]
        %v1042 = vld [vmem:[%s312 + $0x92] sm:$0xff]
        %v1043 = vld [vmem:[%s312 + $0x9a] sm:$0xff]
        %v1044 = vld [vmem:[%s312 + $0xaa] sm:$0xff]
        %v1045 = vld [vmem:[%s312 + $0xb2] sm:$0xff]
        %v1046 = vld [vmem:[%s312 + $0xc2] sm:$0xff]
        %v1047 = vld [vmem:[%s312 + $0xca] sm:$0xff]
        %v1048 = vld [vmem:[%s312 + $0xda] sm:$0xff]
        %v1049 = vld [vmem:[%s312 + $0xe2] sm:$0xff]
        %v1050 = vld [vmem:[%s312 + $0xf2] sm:$0xff]
        %v1051 = vld [vmem:[%s312 + $0xfa] sm:$0xff]
        %v1052 = vld [vmem:[%s312 + $0x10a] sm:$0xff]
        %v1053 = vld [vmem:[%s312 + $0x112] sm:$0xff]
        %v1054 = vld [vmem:[%s312 + $0x122] sm:$0xff]
        %v1055 = vld [vmem:[%s312 + $0x12a] sm:$0xff]
        %v1056 = vld [vmem:[%s312 + $0x13a] sm:$0xff]
        %v1057 = vld [vmem:[%s312 + $0x142] sm:$0xff]
        %v1058 = vld [vmem:[%s312 + $0x152] sm:$0xff]
        %v1059 = vld [vmem:[%s312 + $0x15a] sm:$0xff]
        %v1060 = vld [vmem:[%s312 + $0x16a] sm:$0xff]
        %v1061 = vld [vmem:[%s312 + $0x172] sm:$0xff]
        %s1062 = scalar_lea.vmem %s1, 8
        %v1063 = vld [vmem:[%s1062] sm:$0x7]
        %v1065 = vsel %vm380, %v1030, 0
        %v1068 = vsel %vm380, %v1031, 0
        %v1071 = vsel %vm380, %v1032, 0
        %v1074 = vsel %vm380, %v1033, 0
        %v1077 = vsel %vm380, %v1034, 0
        %v1080 = vsel %vm380, %v1035, 0
        %v1083 = vsel %vm380, %v1036, 0
        %v1086 = vsel %vm380, %v1037, 0
        %v1089 = vsel %vm380, %v1038, 0
        %v1092 = vsel %vm380, %v1039, 0
        %v1095 = vsel %vm380, %v1040, 0
        %v1098 = vsel %vm380, %v1041, 0
        %v1101 = vsel %vm380, %v1042, 0
        %v1104 = vsel %vm380, %v1043, 0
        %v1107 = vsel %vm380, %v1044, 0
        %v1110 = vsel %vm380, %v1045, 0
        %v1113 = vsel %vm380, %v1046, 0
        %v1116 = vsel %vm380, %v1047, 0
        %v1119 = vsel %vm380, %v1048, 0
        %v1122 = vsel %vm380, %v1049, 0
        %v1125 = vsel %vm380, %v1050, 0
        %v1128 = vsel %vm380, %v1051, 0
        %v1131 = vsel %vm380, %v1052, 0
        %v1134 = vsel %vm380, %v1053, 0
        %v1137 = vsel %vm380, %v1054, 0
        %v1140 = vsel %vm380, %v1055, 0
        %v1143 = vsel %vm380, %v1056, 0
        %v1146 = vsel %vm380, %v1057, 0
        %v1149 = vsel %vm380, %v1058, 0
        %v1152 = vsel %vm380, %v1059, 0
        %v1155 = vsel %vm380, %v1060, 0
        %v1158 = vsel %vm380, %v1061, 0
        %v1161 = vsel %vm477, %v1063, 0
        %1163 = vmatprep.subr.mxu0 0.0
        %1164 = vmatpush1.msra.mxu0 0.0
        %1165 = vmatprep.subr.mxu0 0.0
        %1166 = vmatpush1.msra.mxu0 0.0
        %1167 = vmatprep.subr.mxu0 0.0
        %1168 = vmatpush1.msra.mxu0 0.0
        %1169 = vmatprep.subr.mxu0 0.0
        %1170 = vmatpush1.msra.mxu0 0.0
        %1171 = vmatprep.subr.mxu0 0.0
        %1172 = vmatpush1.msra.mxu0 0.0
        %1173 = vmatprep.subr.mxu0 0.0
        %1174 = vmatpush1.msra.mxu0 0.0
        %1175 = vmatprep.subr.mxu0 0.0
        %1176 = vmatpush1.msra.mxu0 0.0
        %1177 = vmatprep.subr.mxu0 0.0
        %1178 = vmatpush1.msra.mxu0 0.0
        %1179 = vmatprep.subr.mxu0 0.0
        %1180 = vmatpush1.msra.mxu0 0.0
        %1181 = vmatprep.subr.mxu0 0.0
        %1182 = vmatpush1.msra.mxu0 0.0
        %1183 = vmatprep.subr.mxu0 0.0
        %1184 = vmatpush1.msra.mxu0 0.0
        %1185 = vmatprep.subr.mxu0 0.0
        %1186 = vmatpush1.msra.mxu0 0.0
        %1187 = vmatprep.subr.mxu0 0.0
        %1188 = vmatpush1.msra.mxu0 0.0
        %1189 = vmatprep.subr.mxu0 0.0
        %1190 = vmatpush1.msra.mxu0 0.0
        %1191 = vmatprep.subr.mxu0 0.0
        %1192 = vmatpush1.msra.mxu0 0.0
        %1193 = vmatprep.subr.mxu0 0.0
        %1194 = vmatpush1.msra.mxu0 %v1161
        %1195 = vmatprep.subr.mxu0 0.0
        %1196 = vmatpush2.msra.mxu0 0.0
        %1197 = vmatprep.subr.mxu0 0.0
        %1198 = vmatpush2.msra.mxu0 0.0
        %1199 = vmatprep.subr.mxu0 0.0
        %1200 = vmatpush2.msra.mxu0 0.0
        %1201 = vmatprep.subr.mxu0 0.0
        %1202 = vmatpush2.msra.mxu0 0.0
        %1203 = vmatprep.subr.mxu0 0.0
        %1204 = vmatpush2.msra.mxu0 0.0
        %1205 = vmatprep.subr.mxu0 0.0
        %1206 = vmatpush2.msra.mxu0 0.0
        %1207 = vmatprep.subr.mxu0 0.0
        %1208 = vmatpush2.msra.mxu0 0.0
        %1209 = vmatprep.subr.mxu0 0.0
        %1210 = vmatpush2.msra.mxu0 0.0
        %1211 = vmatprep.subr.mxu0 0.0
        %1212 = vmatpush2.msra.mxu0 0.0
        %1213 = vmatprep.subr.mxu0 0.0
        %1214 = vmatpush2.msra.mxu0 0.0
        %1215 = vmatprep.subr.mxu0 0.0
        %1216 = vmatpush2.msra.mxu0 0.0
        %1217 = vmatprep.subr.mxu0 0.0
        %1218 = vmatpush2.msra.mxu0 0.0
        %1219 = vmatprep.subr.mxu0 0.0
        %1220 = vmatpush2.msra.mxu0 0.0
        %1221 = vmatprep.subr.mxu0 0.0
        %1222 = vmatpush2.msra.mxu0 0.0
        %1223 = vmatprep.subr.mxu0 0.0
        %1224 = vmatpush2.msra.mxu0 0.0
        %1225 = vmatprep.subr.mxu0 0.0
        %1226 = vmatpush2.msra.mxu0 0.0
        %1227 = vmatprep.mubr.f32.mxu0 0.0
        %1228 = vmatmul.mubr.f32.gmra.mxu0 %v1065
        %v1229 = vpop.f32.mrf.mxu0
        %v1230 = vadd.f32 0.0, %v1229
        %v1231 = vpop.f32.mrf.mxu0
        %1232 = vmatprep.mubr.f32.mxu0 0.0
        %1233 = vmatmul.mubr.f32.gmra.mxu0 %v1068
        %v1234 = vpop.f32.mrf.mxu0
        %v1235 = vadd.f32 0.0, %v1234
        %v1236 = vpop.f32.mrf.mxu0
        %1237 = vmatprep.mubr.f32.mxu0 0.0
        %1238 = vmatmul.mubr.f32.gmra.mxu0 %v1071
        %v1239 = vpop.f32.mrf.mxu0
        %v1240 = vadd.f32 0.0, %v1239
        %v1241 = vpop.f32.mrf.mxu0
        %1242 = vmatprep.mubr.f32.mxu0 0.0
        %1243 = vmatmul.mubr.f32.gmra.mxu0 %v1074
        %v1244 = vpop.f32.mrf.mxu0
        %v1245 = vadd.f32 0.0, %v1244
        %v1246 = vpop.f32.mrf.mxu0
        %1247 = vmatprep.mubr.f32.mxu0 0.0
        %1248 = vmatmul.mubr.f32.gmra.mxu0 %v1077
        %v1249 = vpop.f32.mrf.mxu0
        %v1250 = vadd.f32 0.0, %v1249
        %v1251 = vpop.f32.mrf.mxu0
        %1252 = vmatprep.mubr.f32.mxu0 0.0
        %1253 = vmatmul.mubr.f32.gmra.mxu0 %v1080
        %v1254 = vpop.f32.mrf.mxu0
        %v1255 = vadd.f32 0.0, %v1254
        %v1256 = vpop.f32.mrf.mxu0
        %1257 = vmatprep.mubr.f32.mxu0 0.0
        %1258 = vmatmul.mubr.f32.gmra.mxu0 %v1083
        %v1259 = vpop.f32.mrf.mxu0
        %v1260 = vadd.f32 0.0, %v1259
        %v1261 = vpop.f32.mrf.mxu0
        %1262 = vmatprep.mubr.f32.mxu0 0.0
        %1263 = vmatmul.mubr.f32.gmra.mxu0 %v1086
        %v1264 = vpop.f32.mrf.mxu0
        %v1265 = vadd.f32 0.0, %v1264
        %v1266 = vpop.f32.mrf.mxu0
        %1267 = vmatprep.mubr.f32.mxu0 0.0
        %1268 = vmatmul.mubr.f32.gmra.mxu0 %v1089
        %v1269 = vpop.f32.mrf.mxu0
        %v1270 = vadd.f32 0.0, %v1269
        %v1271 = vpop.f32.mrf.mxu0
        %1272 = vmatprep.mubr.f32.mxu0 0.0
        %1273 = vmatmul.mubr.f32.gmra.mxu0 %v1092
        %v1274 = vpop.f32.mrf.mxu0
        %v1275 = vadd.f32 0.0, %v1274
        %v1276 = vpop.f32.mrf.mxu0
        %1277 = vmatprep.mubr.f32.mxu0 0.0
        %1278 = vmatmul.mubr.f32.gmra.mxu0 %v1095
        %v1279 = vpop.f32.mrf.mxu0
        %v1280 = vadd.f32 0.0, %v1279
        %v1281 = vpop.f32.mrf.mxu0
        %1282 = vmatprep.mubr.f32.mxu0 0.0
        %1283 = vmatmul.mubr.f32.gmra.mxu0 %v1098
        %v1284 = vpop.f32.mrf.mxu0
        %v1285 = vadd.f32 0.0, %v1284
        %v1286 = vpop.f32.mrf.mxu0
        %1287 = vmatprep.mubr.f32.mxu0 0.0
        %1288 = vmatmul.mubr.f32.gmra.mxu0 %v1101
        %v1289 = vpop.f32.mrf.mxu0
        %v1290 = vadd.f32 0.0, %v1289
        %v1291 = vpop.f32.mrf.mxu0
        %1292 = vmatprep.mubr.f32.mxu0 0.0
        %1293 = vmatmul.mubr.f32.gmra.mxu0 %v1104
        %v1294 = vpop.f32.mrf.mxu0
        %v1295 = vadd.f32 0.0, %v1294
        %v1296 = vpop.f32.mrf.mxu0
        %1297 = vmatprep.mubr.f32.mxu0 0.0
        %1298 = vmatmul.mubr.f32.gmra.mxu0 %v1107
        %v1299 = vpop.f32.mrf.mxu0
        %v1300 = vadd.f32 0.0, %v1299
        %v1301 = vpop.f32.mrf.mxu0
        %1302 = vmatprep.mubr.f32.mxu0 0.0
        %1303 = vmatmul.mubr.f32.gmra.mxu0 %v1110
        %v1304 = vpop.f32.mrf.mxu0
        %v1305 = vadd.f32 0.0, %v1304
        %v1306 = vpop.f32.mrf.mxu0
        %1307 = vmatprep.mubr.f32.mxu0 0.0
        %1308 = vmatmul.mubr.f32.gmra.mxu0 %v1113
        %v1309 = vpop.f32.mrf.mxu0
        %v1310 = vadd.f32 0.0, %v1309
        %v1311 = vpop.f32.mrf.mxu0
        %1312 = vmatprep.mubr.f32.mxu0 0.0
        %1313 = vmatmul.mubr.f32.gmra.mxu0 %v1116
        %v1314 = vpop.f32.mrf.mxu0
        %v1315 = vadd.f32 0.0, %v1314
        %v1316 = vpop.f32.mrf.mxu0
        %1317 = vmatprep.mubr.f32.mxu0 0.0
        %1318 = vmatmul.mubr.f32.gmra.mxu0 %v1119
        %v1319 = vpop.f32.mrf.mxu0
        %v1320 = vadd.f32 0.0, %v1319
        %v1321 = vpop.f32.mrf.mxu0
        %1322 = vmatprep.mubr.f32.mxu0 0.0
        %1323 = vmatmul.mubr.f32.gmra.mxu0 %v1122
        %v1324 = vpop.f32.mrf.mxu0
        %v1325 = vadd.f32 0.0, %v1324
        %v1326 = vpop.f32.mrf.mxu0
        %1327 = vmatprep.mubr.f32.mxu0 0.0
        %1328 = vmatmul.mubr.f32.gmra.mxu0 %v1125
        %v1329 = vpop.f32.mrf.mxu0
        %v1330 = vadd.f32 0.0, %v1329
        %v1331 = vpop.f32.mrf.mxu0
        %1332 = vmatprep.mubr.f32.mxu0 0.0
        %1333 = vmatmul.mubr.f32.gmra.mxu0 %v1128
        %v1334 = vpop.f32.mrf.mxu0
        %v1335 = vadd.f32 0.0, %v1334
        %v1336 = vpop.f32.mrf.mxu0
        %1337 = vmatprep.mubr.f32.mxu0 0.0
        %1338 = vmatmul.mubr.f32.gmra.mxu0 %v1131
        %v1339 = vpop.f32.mrf.mxu0
        %v1340 = vadd.f32 0.0, %v1339
        %v1341 = vpop.f32.mrf.mxu0
        %1342 = vmatprep.mubr.f32.mxu0 0.0
        %1343 = vmatmul.mubr.f32.gmra.mxu0 %v1134
        %v1344 = vpop.f32.mrf.mxu0
        %v1345 = vadd.f32 0.0, %v1344
        %v1346 = vpop.f32.mrf.mxu0
        %1347 = vmatprep.mubr.f32.mxu0 0.0
        %1348 = vmatmul.mubr.f32.gmra.mxu0 %v1137
        %v1349 = vpop.f32.mrf.mxu0
        %v1350 = vadd.f32 0.0, %v1349
        %v1351 = vpop.f32.mrf.mxu0
        %1352 = vmatprep.mubr.f32.mxu0 0.0
        %1353 = vmatmul.mubr.f32.gmra.mxu0 %v1140
        %v1354 = vpop.f32.mrf.mxu0
        %v1355 = vadd.f32 0.0, %v1354
        %v1356 = vpop.f32.mrf.mxu0
        %1357 = vmatprep.mubr.f32.mxu0 0.0
        %1358 = vmatmul.mubr.f32.gmra.mxu0 %v1143
        %v1359 = vpop.f32.mrf.mxu0
        %v1360 = vadd.f32 0.0, %v1359
        %v1361 = vpop.f32.mrf.mxu0
        %1362 = vmatprep.mubr.f32.mxu0 0.0
        %1363 = vmatmul.mubr.f32.gmra.mxu0 %v1146
        %v1364 = vpop.f32.mrf.mxu0
        %v1365 = vadd.f32 0.0, %v1364
        %v1366 = vpop.f32.mrf.mxu0
        %1367 = vmatprep.mubr.f32.mxu0 0.0
        %1368 = vmatmul.mubr.f32.gmra.mxu0 %v1149
        %v1369 = vpop.f32.mrf.mxu0
        %v1370 = vadd.f32 0.0, %v1369
        %v1371 = vpop.f32.mrf.mxu0
        %1372 = vmatprep.mubr.f32.mxu0 0.0
        %1373 = vmatmul.mubr.f32.gmra.mxu0 %v1152
        %v1374 = vpop.f32.mrf.mxu0
        %v1375 = vadd.f32 0.0, %v1374
        %v1376 = vpop.f32.mrf.mxu0
        %1377 = vmatprep.mubr.f32.mxu0 0.0
        %1378 = vmatmul.mubr.f32.gmra.mxu0 %v1155
        %v1379 = vpop.f32.mrf.mxu0
        %v1380 = vadd.f32 0.0, %v1379
        %v1381 = vpop.f32.mrf.mxu0
        %1382 = vmatprep.mubr.f32.mxu0 0.0
        %1383 = vmatmul.mubr.f32.gmra.mxu0 %v1158
        %v1384 = vpop.f32.mrf.mxu0
        %v1385 = vadd.f32 0.0, %v1384
        %v1386 = vpop.f32.mrf.mxu0
        %1387 = vdwg.mxu0
        %v1388 = vadd.f32 %v872, %v1230
        %v1389 = vadd.f32 %v877, %v1235
        %v1390 = vadd.f32 %v882, %v1240
        %v1391 = vadd.f32 %v887, %v1245
        %v1392 = vadd.f32 %v892, %v1250
        %v1393 = vadd.f32 %v897, %v1255
        %v1394 = vadd.f32 %v902, %v1260
        %v1395 = vadd.f32 %v907, %v1265
        %v1396 = vadd.f32 %v912, %v1270
        %v1397 = vadd.f32 %v917, %v1275
        %v1398 = vadd.f32 %v922, %v1280
        %v1399 = vadd.f32 %v927, %v1285
        %v1400 = vadd.f32 %v932, %v1290
        %v1401 = vadd.f32 %v937, %v1295
        %v1402 = vadd.f32 %v942, %v1300
        %v1403 = vadd.f32 %v947, %v1305
        %v1404 = vadd.f32 %v952, %v1310
        %v1405 = vadd.f32 %v957, %v1315
        %v1406 = vadd.f32 %v962, %v1320
        %v1407 = vadd.f32 %v967, %v1325
        %v1408 = vadd.f32 %v972, %v1330
        %v1409 = vadd.f32 %v977, %v1335
        %v1410 = vadd.f32 %v982, %v1340
        %v1411 = vadd.f32 %v987, %v1345
        %v1412 = vadd.f32 %v992, %v1350
        %v1413 = vadd.f32 %v997, %v1355
        %v1414 = vadd.f32 %v1002, %v1360
        %v1415 = vadd.f32 %v1007, %v1365
        %v1416 = vadd.f32 %v1012, %v1370
        %v1417 = vadd.f32 %v1017, %v1375
        %v1418 = vadd.f32 %v1022, %v1380
        %v1419 = vadd.f32 %v1027, %v1385
        %s1420 = scalar_lea.vmem %s312, 24
        %v1421 = vld [vmem:[%s1420] sm:$0xff]
        %v1422 = vld [vmem:[%s1420 + $0x8] sm:$0xff]
        %v1423 = vld [vmem:[%s1420 + $0x18] sm:$0xff]
        %v1424 = vld [vmem:[%s1420 + $0x20] sm:$0xff]
        %v1425 = vld [vmem:[%s1420 + $0x30] sm:$0xff]
        %v1426 = vld [vmem:[%s1420 + $0x38] sm:$0xff]
        %v1427 = vld [vmem:[%s1420 + $0x48] sm:$0xff]
        %v1428 = vld [vmem:[%s1420 + $0x50] sm:$0xff]
        %v1429 = vld [vmem:[%s1420 + $0x60] sm:$0xff]
        %v1430 = vld [vmem:[%s1420 + $0x68] sm:$0xff]
        %v1431 = vld [vmem:[%s1420 + $0x78] sm:$0xff]
        %v1432 = vld [vmem:[%s1420 + $0x80] sm:$0xff]
        %v1433 = vld [vmem:[%s1420 + $0x90] sm:$0xff]
        %v1434 = vld [vmem:[%s1420 + $0x98] sm:$0xff]
        %v1435 = vld [vmem:[%s1420 + $0xa8] sm:$0xff]
        %v1436 = vld [vmem:[%s1420 + $0xb0] sm:$0xff]
        %v1437 = vld [vmem:[%s1420 + $0xc0] sm:$0xff]
        %v1438 = vld [vmem:[%s1420 + $0xc8] sm:$0xff]
        %v1439 = vld [vmem:[%s1420 + $0xd8] sm:$0xff]
        %v1440 = vld [vmem:[%s1420 + $0xe0] sm:$0xff]
        %v1441 = vld [vmem:[%s1420 + $0xf0] sm:$0xff]
        %v1442 = vld [vmem:[%s1420 + $0xf8] sm:$0xff]
        %v1443 = vld [vmem:[%s1420 + $0x108] sm:$0xff]
        %v1444 = vld [vmem:[%s1420 + $0x110] sm:$0xff]
        %v1445 = vld [vmem:[%s1420 + $0x120] sm:$0xff]
        %v1446 = vld [vmem:[%s1420 + $0x128] sm:$0xff]
        %v1447 = vld [vmem:[%s1420 + $0x138] sm:$0xff]
        %v1448 = vld [vmem:[%s1420 + $0x140] sm:$0xff]
        %v1449 = vld [vmem:[%s1420 + $0x150] sm:$0xff]
        %v1450 = vld [vmem:[%s1420 + $0x158] sm:$0xff]
        %v1451 = vld [vmem:[%s1420 + $0x168] sm:$0xff]
        %v1452 = vld [vmem:[%s1420 + $0x170] sm:$0xff]
        %s1453 = scalar_lea.vmem %s1, 12
        %v1454 = vld [vmem:[%s1453] sm:$0x7]
        %v1456 = vsel %vm380, %v1421, 0
        %v1459 = vsel %vm380, %v1422, 0
        %v1462 = vsel %vm380, %v1423, 0
        %v1465 = vsel %vm380, %v1424, 0
        %v1468 = vsel %vm380, %v1425, 0
        %v1471 = vsel %vm380, %v1426, 0
        %v1474 = vsel %vm380, %v1427, 0
        %v1477 = vsel %vm380, %v1428, 0
        %v1480 = vsel %vm380, %v1429, 0
        %v1483 = vsel %vm380, %v1430, 0
        %v1486 = vsel %vm380, %v1431, 0
        %v1489 = vsel %vm380, %v1432, 0
        %v1492 = vsel %vm380, %v1433, 0
        %v1495 = vsel %vm380, %v1434, 0
        %v1498 = vsel %vm380, %v1435, 0
        %v1501 = vsel %vm380, %v1436, 0
        %v1504 = vsel %vm380, %v1437, 0
        %v1507 = vsel %vm380, %v1438, 0
        %v1510 = vsel %vm380, %v1439, 0
        %v1513 = vsel %vm380, %v1440, 0
        %v1516 = vsel %vm380, %v1441, 0
        %v1519 = vsel %vm380, %v1442, 0
        %v1522 = vsel %vm380, %v1443, 0
        %v1525 = vsel %vm380, %v1444, 0
        %v1528 = vsel %vm380, %v1445, 0
        %v1531 = vsel %vm380, %v1446, 0
        %v1534 = vsel %vm380, %v1447, 0
        %v1537 = vsel %vm380, %v1448, 0
        %v1540 = vsel %vm380, %v1449, 0
        %v1543 = vsel %vm380, %v1450, 0
        %v1546 = vsel %vm380, %v1451, 0
        %v1549 = vsel %vm380, %v1452, 0
        %v1552 = vsel %vm477, %v1454, 0
        %1554 = vmatprep.subr.mxu0 0.0
        %1555 = vmatpush1.msra.mxu0 0.0
        %1556 = vmatprep.subr.mxu0 0.0
        %1557 = vmatpush1.msra.mxu0 0.0
        %1558 = vmatprep.subr.mxu0 0.0
        %1559 = vmatpush1.msra.mxu0 0.0
        %1560 = vmatprep.subr.mxu0 0.0
        %1561 = vmatpush1.msra.mxu0 0.0
        %1562 = vmatprep.subr.mxu0 0.0
        %1563 = vmatpush1.msra.mxu0 0.0
        %1564 = vmatprep.subr.mxu0 0.0
        %1565 = vmatpush1.msra.mxu0 0.0
        %1566 = vmatprep.subr.mxu0 0.0
        %1567 = vmatpush1.msra.mxu0 0.0
        %1568 = vmatprep.subr.mxu0 0.0
        %1569 = vmatpush1.msra.mxu0 0.0
        %1570 = vmatprep.subr.mxu0 0.0
        %1571 = vmatpush1.msra.mxu0 0.0
        %1572 = vmatprep.subr.mxu0 0.0
        %1573 = vmatpush1.msra.mxu0 0.0
        %1574 = vmatprep.subr.mxu0 0.0
        %1575 = vmatpush1.msra.mxu0 0.0
        %1576 = vmatprep.subr.mxu0 0.0
        %1577 = vmatpush1.msra.mxu0 0.0
        %1578 = vmatprep.subr.mxu0 0.0
        %1579 = vmatpush1.msra.mxu0 0.0
        %1580 = vmatprep.subr.mxu0 0.0
        %1581 = vmatpush1.msra.mxu0 0.0
        %1582 = vmatprep.subr.mxu0 0.0
        %1583 = vmatpush1.msra.mxu0 0.0
        %1584 = vmatprep.subr.mxu0 0.0
        %1585 = vmatpush1.msra.mxu0 %v1552
        %1586 = vmatprep.subr.mxu0 0.0
        %1587 = vmatpush2.msra.mxu0 0.0
        %1588 = vmatprep.subr.mxu0 0.0
        %1589 = vmatpush2.msra.mxu0 0.0
        %1590 = vmatprep.subr.mxu0 0.0
        %1591 = vmatpush2.msra.mxu0 0.0
        %1592 = vmatprep.subr.mxu0 0.0
        %1593 = vmatpush2.msra.mxu0 0.0
        %1594 = vmatprep.subr.mxu0 0.0
        %1595 = vmatpush2.msra.mxu0 0.0
        %1596 = vmatprep.subr.mxu0 0.0
        %1597 = vmatpush2.msra.mxu0 0.0
        %1598 = vmatprep.subr.mxu0 0.0
        %1599 = vmatpush2.msra.mxu0 0.0
        %1600 = vmatprep.subr.mxu0 0.0
        %1601 = vmatpush2.msra.mxu0 0.0
        %1602 = vmatprep.subr.mxu0 0.0
        %1603 = vmatpush2.msra.mxu0 0.0
        %1604 = vmatprep.subr.mxu0 0.0
        %1605 = vmatpush2.msra.mxu0 0.0
        %1606 = vmatprep.subr.mxu0 0.0
        %1607 = vmatpush2.msra.mxu0 0.0
        %1608 = vmatprep.subr.mxu0 0.0
        %1609 = vmatpush2.msra.mxu0 0.0
        %1610 = vmatprep.subr.mxu0 0.0
        %1611 = vmatpush2.msra.mxu0 0.0
        %1612 = vmatprep.subr.mxu0 0.0
        %1613 = vmatpush2.msra.mxu0 0.0
        %1614 = vmatprep.subr.mxu0 0.0
        %1615 = vmatpush2.msra.mxu0 0.0
        %1616 = vmatprep.subr.mxu0 0.0
        %1617 = vmatpush2.msra.mxu0 0.0
        %1618 = vmatprep.mubr.f32.mxu0 0.0
        %1619 = vmatmul.mubr.f32.gmra.mxu0 %v1456
        %v1620 = vpop.f32.mrf.mxu0
        %v1621 = vadd.f32 0.0, %v1620
        %v1622 = vpop.f32.mrf.mxu0
        %1623 = vmatprep.mubr.f32.mxu0 0.0
        %1624 = vmatmul.mubr.f32.gmra.mxu0 %v1459
        %v1625 = vpop.f32.mrf.mxu0
        %v1626 = vadd.f32 0.0, %v1625
        %v1627 = vpop.f32.mrf.mxu0
        %1628 = vmatprep.mubr.f32.mxu0 0.0
        %1629 = vmatmul.mubr.f32.gmra.mxu0 %v1462
        %v1630 = vpop.f32.mrf.mxu0
        %v1631 = vadd.f32 0.0, %v1630
        %v1632 = vpop.f32.mrf.mxu0
        %1633 = vmatprep.mubr.f32.mxu0 0.0
        %1634 = vmatmul.mubr.f32.gmra.mxu0 %v1465
        %v1635 = vpop.f32.mrf.mxu0
        %v1636 = vadd.f32 0.0, %v1635
        %v1637 = vpop.f32.mrf.mxu0
        %1638 = vmatprep.mubr.f32.mxu0 0.0
        %1639 = vmatmul.mubr.f32.gmra.mxu0 %v1468
        %v1640 = vpop.f32.mrf.mxu0
        %v1641 = vadd.f32 0.0, %v1640
        %v1642 = vpop.f32.mrf.mxu0
        %1643 = vmatprep.mubr.f32.mxu0 0.0
        %1644 = vmatmul.mubr.f32.gmra.mxu0 %v1471
        %v1645 = vpop.f32.mrf.mxu0
        %v1646 = vadd.f32 0.0, %v1645
        %v1647 = vpop.f32.mrf.mxu0
        %1648 = vmatprep.mubr.f32.mxu0 0.0
        %1649 = vmatmul.mubr.f32.gmra.mxu0 %v1474
        %v1650 = vpop.f32.mrf.mxu0
        %v1651 = vadd.f32 0.0, %v1650
        %v1652 = vpop.f32.mrf.mxu0
        %1653 = vmatprep.mubr.f32.mxu0 0.0
        %1654 = vmatmul.mubr.f32.gmra.mxu0 %v1477
        %v1655 = vpop.f32.mrf.mxu0
        %v1656 = vadd.f32 0.0, %v1655
        %v1657 = vpop.f32.mrf.mxu0
        %1658 = vmatprep.mubr.f32.mxu0 0.0
        %1659 = vmatmul.mubr.f32.gmra.mxu0 %v1480
        %v1660 = vpop.f32.mrf.mxu0
        %v1661 = vadd.f32 0.0, %v1660
        %v1662 = vpop.f32.mrf.mxu0
        %1663 = vmatprep.mubr.f32.mxu0 0.0
        %1664 = vmatmul.mubr.f32.gmra.mxu0 %v1483
        %v1665 = vpop.f32.mrf.mxu0
        %v1666 = vadd.f32 0.0, %v1665
        %v1667 = vpop.f32.mrf.mxu0
        %1668 = vmatprep.mubr.f32.mxu0 0.0
        %1669 = vmatmul.mubr.f32.gmra.mxu0 %v1486
        %v1670 = vpop.f32.mrf.mxu0
        %v1671 = vadd.f32 0.0, %v1670
        %v1672 = vpop.f32.mrf.mxu0
        %1673 = vmatprep.mubr.f32.mxu0 0.0
        %1674 = vmatmul.mubr.f32.gmra.mxu0 %v1489
        %v1675 = vpop.f32.mrf.mxu0
        %v1676 = vadd.f32 0.0, %v1675
        %v1677 = vpop.f32.mrf.mxu0
        %1678 = vmatprep.mubr.f32.mxu0 0.0
        %1679 = vmatmul.mubr.f32.gmra.mxu0 %v1492
        %v1680 = vpop.f32.mrf.mxu0
        %v1681 = vadd.f32 0.0, %v1680
        %v1682 = vpop.f32.mrf.mxu0
        %1683 = vmatprep.mubr.f32.mxu0 0.0
        %1684 = vmatmul.mubr.f32.gmra.mxu0 %v1495
        %v1685 = vpop.f32.mrf.mxu0
        %v1686 = vadd.f32 0.0, %v1685
        %v1687 = vpop.f32.mrf.mxu0
        %1688 = vmatprep.mubr.f32.mxu0 0.0
        %1689 = vmatmul.mubr.f32.gmra.mxu0 %v1498
        %v1690 = vpop.f32.mrf.mxu0
        %v1691 = vadd.f32 0.0, %v1690
        %v1692 = vpop.f32.mrf.mxu0
        %1693 = vmatprep.mubr.f32.mxu0 0.0
        %1694 = vmatmul.mubr.f32.gmra.mxu0 %v1501
        %v1695 = vpop.f32.mrf.mxu0
        %v1696 = vadd.f32 0.0, %v1695
        %v1697 = vpop.f32.mrf.mxu0
        %1698 = vmatprep.mubr.f32.mxu0 0.0
        %1699 = vmatmul.mubr.f32.gmra.mxu0 %v1504
        %v1700 = vpop.f32.mrf.mxu0
        %v1701 = vadd.f32 0.0, %v1700
        %v1702 = vpop.f32.mrf.mxu0
        %1703 = vmatprep.mubr.f32.mxu0 0.0
        %1704 = vmatmul.mubr.f32.gmra.mxu0 %v1507
        %v1705 = vpop.f32.mrf.mxu0
        %v1706 = vadd.f32 0.0, %v1705
        %v1707 = vpop.f32.mrf.mxu0
        %1708 = vmatprep.mubr.f32.mxu0 0.0
        %1709 = vmatmul.mubr.f32.gmra.mxu0 %v1510
        %v1710 = vpop.f32.mrf.mxu0
        %v1711 = vadd.f32 0.0, %v1710
        %v1712 = vpop.f32.mrf.mxu0
        %1713 = vmatprep.mubr.f32.mxu0 0.0
        %1714 = vmatmul.mubr.f32.gmra.mxu0 %v1513
        %v1715 = vpop.f32.mrf.mxu0
        %v1716 = vadd.f32 0.0, %v1715
        %v1717 = vpop.f32.mrf.mxu0
        %1718 = vmatprep.mubr.f32.mxu0 0.0
        %1719 = vmatmul.mubr.f32.gmra.mxu0 %v1516
        %v1720 = vpop.f32.mrf.mxu0
        %v1721 = vadd.f32 0.0, %v1720
        %v1722 = vpop.f32.mrf.mxu0
        %1723 = vmatprep.mubr.f32.mxu0 0.0
        %1724 = vmatmul.mubr.f32.gmra.mxu0 %v1519
        %v1725 = vpop.f32.mrf.mxu0
        %v1726 = vadd.f32 0.0, %v1725
        %v1727 = vpop.f32.mrf.mxu0
        %1728 = vmatprep.mubr.f32.mxu0 0.0
        %1729 = vmatmul.mubr.f32.gmra.mxu0 %v1522
        %v1730 = vpop.f32.mrf.mxu0
        %v1731 = vadd.f32 0.0, %v1730
        %v1732 = vpop.f32.mrf.mxu0
        %1733 = vmatprep.mubr.f32.mxu0 0.0
        %1734 = vmatmul.mubr.f32.gmra.mxu0 %v1525
        %v1735 = vpop.f32.mrf.mxu0
        %v1736 = vadd.f32 0.0, %v1735
        %v1737 = vpop.f32.mrf.mxu0
        %1738 = vmatprep.mubr.f32.mxu0 0.0
        %1739 = vmatmul.mubr.f32.gmra.mxu0 %v1528
        %v1740 = vpop.f32.mrf.mxu0
        %v1741 = vadd.f32 0.0, %v1740
        %v1742 = vpop.f32.mrf.mxu0
        %1743 = vmatprep.mubr.f32.mxu0 0.0
        %1744 = vmatmul.mubr.f32.gmra.mxu0 %v1531
        %v1745 = vpop.f32.mrf.mxu0
        %v1746 = vadd.f32 0.0, %v1745
        %v1747 = vpop.f32.mrf.mxu0
        %1748 = vmatprep.mubr.f32.mxu0 0.0
        %1749 = vmatmul.mubr.f32.gmra.mxu0 %v1534
        %v1750 = vpop.f32.mrf.mxu0
        %v1751 = vadd.f32 0.0, %v1750
        %v1752 = vpop.f32.mrf.mxu0
        %1753 = vmatprep.mubr.f32.mxu0 0.0
        %1754 = vmatmul.mubr.f32.gmra.mxu0 %v1537
        %v1755 = vpop.f32.mrf.mxu0
        %v1756 = vadd.f32 0.0, %v1755
        %v1757 = vpop.f32.mrf.mxu0
        %1758 = vmatprep.mubr.f32.mxu0 0.0
        %1759 = vmatmul.mubr.f32.gmra.mxu0 %v1540
        %v1760 = vpop.f32.mrf.mxu0
        %v1761 = vadd.f32 0.0, %v1760
        %v1762 = vpop.f32.mrf.mxu0
        %1763 = vmatprep.mubr.f32.mxu0 0.0
        %1764 = vmatmul.mubr.f32.gmra.mxu0 %v1543
        %v1765 = vpop.f32.mrf.mxu0
        %v1766 = vadd.f32 0.0, %v1765
        %v1767 = vpop.f32.mrf.mxu0
        %1768 = vmatprep.mubr.f32.mxu0 0.0
        %1769 = vmatmul.mubr.f32.gmra.mxu0 %v1546
        %v1770 = vpop.f32.mrf.mxu0
        %v1771 = vadd.f32 0.0, %v1770
        %v1772 = vpop.f32.mrf.mxu0
        %1773 = vmatprep.mubr.f32.mxu0 0.0
        %1774 = vmatmul.mubr.f32.gmra.mxu0 %v1549
        %v1775 = vpop.f32.mrf.mxu0
        %v1776 = vadd.f32 0.0, %v1775
        %v1777 = vpop.f32.mrf.mxu0
        %1778 = vdwg.mxu0
        %v1779 = vadd.f32 %v1388, %v1621
        %v1780 = vadd.f32 %v1389, %v1626
        %v1781 = vadd.f32 %v1390, %v1631
        %v1782 = vadd.f32 %v1391, %v1636
        %v1783 = vadd.f32 %v1392, %v1641
        %v1784 = vadd.f32 %v1393, %v1646
        %v1785 = vadd.f32 %v1394, %v1651
        %v1786 = vadd.f32 %v1395, %v1656
        %v1787 = vadd.f32 %v1396, %v1661
        %v1788 = vadd.f32 %v1397, %v1666
        %v1789 = vadd.f32 %v1398, %v1671
        %v1790 = vadd.f32 %v1399, %v1676
        %v1791 = vadd.f32 %v1400, %v1681
        %v1792 = vadd.f32 %v1401, %v1686
        %v1793 = vadd.f32 %v1402, %v1691
        %v1794 = vadd.f32 %v1403, %v1696
        %v1795 = vadd.f32 %v1404, %v1701
        %v1796 = vadd.f32 %v1405, %v1706
        %v1797 = vadd.f32 %v1406, %v1711
        %v1798 = vadd.f32 %v1407, %v1716
        %v1799 = vadd.f32 %v1408, %v1721
        %v1800 = vadd.f32 %v1409, %v1726
        %v1801 = vadd.f32 %v1410, %v1731
        %v1802 = vadd.f32 %v1411, %v1736
        %v1803 = vadd.f32 %v1412, %v1741
        %v1804 = vadd.f32 %v1413, %v1746
        %v1805 = vadd.f32 %v1414, %v1751
        %v1806 = vadd.f32 %v1415, %v1756
        %v1807 = vadd.f32 %v1416, %v1761
        %v1808 = vadd.f32 %v1417, %v1766
        %v1809 = vadd.f32 %v1418, %v1771
        %v1810 = vadd.f32 %v1419, %v1776
        %v1811 = vld [vmem:[%s1420 + $0x1] sm:$0xff]
        %v1812 = vld [vmem:[%s1420 + $0x9] sm:$0xff]
        %v1813 = vld [vmem:[%s1420 + $0x19] sm:$0xff]
        %v1814 = vld [vmem:[%s1420 + $0x21] sm:$0xff]
        %v1815 = vld [vmem:[%s1420 + $0x31] sm:$0xff]
        %v1816 = vld [vmem:[%s1420 + $0x39] sm:$0xff]
        %v1817 = vld [vmem:[%s1420 + $0x49] sm:$0xff]
        %v1818 = vld [vmem:[%s1420 + $0x51] sm:$0xff]
        %v1819 = vld [vmem:[%s1420 + $0x61] sm:$0xff]
        %v1820 = vld [vmem:[%s1420 + $0x69] sm:$0xff]
        %v1821 = vld [vmem:[%s1420 + $0x79] sm:$0xff]
        %v1822 = vld [vmem:[%s1420 + $0x81] sm:$0xff]
        %v1823 = vld [vmem:[%s1420 + $0x91] sm:$0xff]
        %v1824 = vld [vmem:[%s1420 + $0x99] sm:$0xff]
        %v1825 = vld [vmem:[%s1420 + $0xa9] sm:$0xff]
        %v1826 = vld [vmem:[%s1420 + $0xb1] sm:$0xff]
        %v1827 = vld [vmem:[%s1420 + $0xc1] sm:$0xff]
        %v1828 = vld [vmem:[%s1420 + $0xc9] sm:$0xff]
        %v1829 = vld [vmem:[%s1420 + $0xd9] sm:$0xff]
        %v1830 = vld [vmem:[%s1420 + $0xe1] sm:$0xff]
        %v1831 = vld [vmem:[%s1420 + $0xf1] sm:$0xff]
        %v1832 = vld [vmem:[%s1420 + $0xf9] sm:$0xff]
        %v1833 = vld [vmem:[%s1420 + $0x109] sm:$0xff]
        %v1834 = vld [vmem:[%s1420 + $0x111] sm:$0xff]
        %v1835 = vld [vmem:[%s1420 + $0x121] sm:$0xff]
        %v1836 = vld [vmem:[%s1420 + $0x129] sm:$0xff]
        %v1837 = vld [vmem:[%s1420 + $0x139] sm:$0xff]
        %v1838 = vld [vmem:[%s1420 + $0x141] sm:$0xff]
        %v1839 = vld [vmem:[%s1420 + $0x151] sm:$0xff]
        %v1840 = vld [vmem:[%s1420 + $0x159] sm:$0xff]
        %v1841 = vld [vmem:[%s1420 + $0x169] sm:$0xff]
        %v1842 = vld [vmem:[%s1420 + $0x171] sm:$0xff]
        %s1843 = scalar_lea.vmem %s1, 16
        %v1844 = vld [vmem:[%s1843] sm:$0x7]
        %v1846 = vsel %vm380, %v1811, 0
        %v1849 = vsel %vm380, %v1812, 0
        %v1852 = vsel %vm380, %v1813, 0
        %v1855 = vsel %vm380, %v1814, 0
        %v1858 = vsel %vm380, %v1815, 0
        %v1861 = vsel %vm380, %v1816, 0
        %v1864 = vsel %vm380, %v1817, 0
        %v1867 = vsel %vm380, %v1818, 0
        %v1870 = vsel %vm380, %v1819, 0
        %v1873 = vsel %vm380, %v1820, 0
        %v1876 = vsel %vm380, %v1821, 0
        %v1879 = vsel %vm380, %v1822, 0
        %v1882 = vsel %vm380, %v1823, 0
        %v1885 = vsel %vm380, %v1824, 0
        %v1888 = vsel %vm380, %v1825, 0
        %v1891 = vsel %vm380, %v1826, 0
        %v1894 = vsel %vm380, %v1827, 0
        %v1897 = vsel %vm380, %v1828, 0
        %v1900 = vsel %vm380, %v1829, 0
        %v1903 = vsel %vm380, %v1830, 0
        %v1906 = vsel %vm380, %v1831, 0
        %v1909 = vsel %vm380, %v1832, 0
        %v1912 = vsel %vm380, %v1833, 0
        %v1915 = vsel %vm380, %v1834, 0
        %v1918 = vsel %vm380, %v1835, 0
        %v1921 = vsel %vm380, %v1836, 0
        %v1924 = vsel %vm380, %v1837, 0
        %v1927 = vsel %vm380, %v1838, 0
        %v1930 = vsel %vm380, %v1839, 0
        %v1933 = vsel %vm380, %v1840, 0
        %v1936 = vsel %vm380, %v1841, 0
        %v1939 = vsel %vm380, %v1842, 0
        %v1942 = vsel %vm477, %v1844, 0
        %1944 = vmatprep.subr.mxu0 0.0
        %1945 = vmatpush1.msra.mxu0 0.0
        %1946 = vmatprep.subr.mxu0 0.0
        %1947 = vmatpush1.msra.mxu0 0.0
        %1948 = vmatprep.subr.mxu0 0.0
        %1949 = vmatpush1.msra.mxu0 0.0
        %1950 = vmatprep.subr.mxu0 0.0
        %1951 = vmatpush1.msra.mxu0 0.0
        %1952 = vmatprep.subr.mxu0 0.0
        %1953 = vmatpush1.msra.mxu0 0.0
        %1954 = vmatprep.subr.mxu0 0.0
        %1955 = vmatpush1.msra.mxu0 0.0
        %1956 = vmatprep.subr.mxu0 0.0
        %1957 = vmatpush1.msra.mxu0 0.0
        %1958 = vmatprep.subr.mxu0 0.0
        %1959 = vmatpush1.msra.mxu0 0.0
        %1960 = vmatprep.subr.mxu0 0.0
        %1961 = vmatpush1.msra.mxu0 0.0
        %1962 = vmatprep.subr.mxu0 0.0
        %1963 = vmatpush1.msra.mxu0 0.0
        %1964 = vmatprep.subr.mxu0 0.0
        %1965 = vmatpush1.msra.mxu0 0.0
        %1966 = vmatprep.subr.mxu0 0.0
        %1967 = vmatpush1.msra.mxu0 0.0
        %1968 = vmatprep.subr.mxu0 0.0
        %1969 = vmatpush1.msra.mxu0 0.0
        %1970 = vmatprep.subr.mxu0 0.0
        %1971 = vmatpush1.msra.mxu0 0.0
        %1972 = vmatprep.subr.mxu0 0.0
        %1973 = vmatpush1.msra.mxu0 0.0
        %1974 = vmatprep.subr.mxu0 0.0
        %1975 = vmatpush1.msra.mxu0 %v1942
        %1976 = vmatprep.subr.mxu0 0.0
        %1977 = vmatpush2.msra.mxu0 0.0
        %1978 = vmatprep.subr.mxu0 0.0
        %1979 = vmatpush2.msra.mxu0 0.0
        %1980 = vmatprep.subr.mxu0 0.0
        %1981 = vmatpush2.msra.mxu0 0.0
        %1982 = vmatprep.subr.mxu0 0.0
        %1983 = vmatpush2.msra.mxu0 0.0
        %1984 = vmatprep.subr.mxu0 0.0
        %1985 = vmatpush2.msra.mxu0 0.0
        %1986 = vmatprep.subr.mxu0 0.0
        %1987 = vmatpush2.msra.mxu0 0.0
        %1988 = vmatprep.subr.mxu0 0.0
        %1989 = vmatpush2.msra.mxu0 0.0
        %1990 = vmatprep.subr.mxu0 0.0
        %1991 = vmatpush2.msra.mxu0 0.0
        %1992 = vmatprep.subr.mxu0 0.0
        %1993 = vmatpush2.msra.mxu0 0.0
        %1994 = vmatprep.subr.mxu0 0.0
        %1995 = vmatpush2.msra.mxu0 0.0
        %1996 = vmatprep.subr.mxu0 0.0
        %1997 = vmatpush2.msra.mxu0 0.0
        %1998 = vmatprep.subr.mxu0 0.0
        %1999 = vmatpush2.msra.mxu0 0.0
        %2000 = vmatprep.subr.mxu0 0.0
        %2001 = vmatpush2.msra.mxu0 0.0
        %2002 = vmatprep.subr.mxu0 0.0
        %2003 = vmatpush2.msra.mxu0 0.0
        %2004 = vmatprep.subr.mxu0 0.0
        %2005 = vmatpush2.msra.mxu0 0.0
        %2006 = vmatprep.subr.mxu0 0.0
        %2007 = vmatpush2.msra.mxu0 0.0
        %2008 = vmatprep.mubr.f32.mxu0 0.0
        %2009 = vmatmul.mubr.f32.gmra.mxu0 %v1846
        %v2010 = vpop.f32.mrf.mxu0
        %v2011 = vadd.f32 0.0, %v2010
        %v2012 = vpop.f32.mrf.mxu0
        %2013 = vmatprep.mubr.f32.mxu0 0.0
        %2014 = vmatmul.mubr.f32.gmra.mxu0 %v1849
        %v2015 = vpop.f32.mrf.mxu0
        %v2016 = vadd.f32 0.0, %v2015
        %v2017 = vpop.f32.mrf.mxu0
        %2018 = vmatprep.mubr.f32.mxu0 0.0
        %2019 = vmatmul.mubr.f32.gmra.mxu0 %v1852
        %v2020 = vpop.f32.mrf.mxu0
        %v2021 = vadd.f32 0.0, %v2020
        %v2022 = vpop.f32.mrf.mxu0
        %2023 = vmatprep.mubr.f32.mxu0 0.0
        %2024 = vmatmul.mubr.f32.gmra.mxu0 %v1855
        %v2025 = vpop.f32.mrf.mxu0
        %v2026 = vadd.f32 0.0, %v2025
        %v2027 = vpop.f32.mrf.mxu0
        %2028 = vmatprep.mubr.f32.mxu0 0.0
        %2029 = vmatmul.mubr.f32.gmra.mxu0 %v1858
        %v2030 = vpop.f32.mrf.mxu0
        %v2031 = vadd.f32 0.0, %v2030
        %v2032 = vpop.f32.mrf.mxu0
        %2033 = vmatprep.mubr.f32.mxu0 0.0
        %2034 = vmatmul.mubr.f32.gmra.mxu0 %v1861
        %v2035 = vpop.f32.mrf.mxu0
        %v2036 = vadd.f32 0.0, %v2035
        %v2037 = vpop.f32.mrf.mxu0
        %2038 = vmatprep.mubr.f32.mxu0 0.0
        %2039 = vmatmul.mubr.f32.gmra.mxu0 %v1864
        %v2040 = vpop.f32.mrf.mxu0
        %v2041 = vadd.f32 0.0, %v2040
        %v2042 = vpop.f32.mrf.mxu0
        %2043 = vmatprep.mubr.f32.mxu0 0.0
        %2044 = vmatmul.mubr.f32.gmra.mxu0 %v1867
        %v2045 = vpop.f32.mrf.mxu0
        %v2046 = vadd.f32 0.0, %v2045
        %v2047 = vpop.f32.mrf.mxu0
        %2048 = vmatprep.mubr.f32.mxu0 0.0
        %2049 = vmatmul.mubr.f32.gmra.mxu0 %v1870
        %v2050 = vpop.f32.mrf.mxu0
        %v2051 = vadd.f32 0.0, %v2050
        %v2052 = vpop.f32.mrf.mxu0
        %2053 = vmatprep.mubr.f32.mxu0 0.0
        %2054 = vmatmul.mubr.f32.gmra.mxu0 %v1873
        %v2055 = vpop.f32.mrf.mxu0
        %v2056 = vadd.f32 0.0, %v2055
        %v2057 = vpop.f32.mrf.mxu0
        %2058 = vmatprep.mubr.f32.mxu0 0.0
        %2059 = vmatmul.mubr.f32.gmra.mxu0 %v1876
        %v2060 = vpop.f32.mrf.mxu0
        %v2061 = vadd.f32 0.0, %v2060
        %v2062 = vpop.f32.mrf.mxu0
        %2063 = vmatprep.mubr.f32.mxu0 0.0
        %2064 = vmatmul.mubr.f32.gmra.mxu0 %v1879
        %v2065 = vpop.f32.mrf.mxu0
        %v2066 = vadd.f32 0.0, %v2065
        %v2067 = vpop.f32.mrf.mxu0
        %2068 = vmatprep.mubr.f32.mxu0 0.0
        %2069 = vmatmul.mubr.f32.gmra.mxu0 %v1882
        %v2070 = vpop.f32.mrf.mxu0
        %v2071 = vadd.f32 0.0, %v2070
        %v2072 = vpop.f32.mrf.mxu0
        %2073 = vmatprep.mubr.f32.mxu0 0.0
        %2074 = vmatmul.mubr.f32.gmra.mxu0 %v1885
        %v2075 = vpop.f32.mrf.mxu0
        %v2076 = vadd.f32 0.0, %v2075
        %v2077 = vpop.f32.mrf.mxu0
        %2078 = vmatprep.mubr.f32.mxu0 0.0
        %2079 = vmatmul.mubr.f32.gmra.mxu0 %v1888
        %v2080 = vpop.f32.mrf.mxu0
        %v2081 = vadd.f32 0.0, %v2080
        %v2082 = vpop.f32.mrf.mxu0
        %2083 = vmatprep.mubr.f32.mxu0 0.0
        %2084 = vmatmul.mubr.f32.gmra.mxu0 %v1891
        %v2085 = vpop.f32.mrf.mxu0
        %v2086 = vadd.f32 0.0, %v2085
        %v2087 = vpop.f32.mrf.mxu0
        %2088 = vmatprep.mubr.f32.mxu0 0.0
        %2089 = vmatmul.mubr.f32.gmra.mxu0 %v1894
        %v2090 = vpop.f32.mrf.mxu0
        %v2091 = vadd.f32 0.0, %v2090
        %v2092 = vpop.f32.mrf.mxu0
        %2093 = vmatprep.mubr.f32.mxu0 0.0
        %2094 = vmatmul.mubr.f32.gmra.mxu0 %v1897
        %v2095 = vpop.f32.mrf.mxu0
        %v2096 = vadd.f32 0.0, %v2095
        %v2097 = vpop.f32.mrf.mxu0
        %2098 = vmatprep.mubr.f32.mxu0 0.0
        %2099 = vmatmul.mubr.f32.gmra.mxu0 %v1900
        %v2100 = vpop.f32.mrf.mxu0
        %v2101 = vadd.f32 0.0, %v2100
        %v2102 = vpop.f32.mrf.mxu0
        %2103 = vmatprep.mubr.f32.mxu0 0.0
        %2104 = vmatmul.mubr.f32.gmra.mxu0 %v1903
        %v2105 = vpop.f32.mrf.mxu0
        %v2106 = vadd.f32 0.0, %v2105
        %v2107 = vpop.f32.mrf.mxu0
        %2108 = vmatprep.mubr.f32.mxu0 0.0
        %2109 = vmatmul.mubr.f32.gmra.mxu0 %v1906
        %v2110 = vpop.f32.mrf.mxu0
        %v2111 = vadd.f32 0.0, %v2110
        %v2112 = vpop.f32.mrf.mxu0
        %2113 = vmatprep.mubr.f32.mxu0 0.0
        %2114 = vmatmul.mubr.f32.gmra.mxu0 %v1909
        %v2115 = vpop.f32.mrf.mxu0
        %v2116 = vadd.f32 0.0, %v2115
        %v2117 = vpop.f32.mrf.mxu0
        %2118 = vmatprep.mubr.f32.mxu0 0.0
        %2119 = vmatmul.mubr.f32.gmra.mxu0 %v1912
        %v2120 = vpop.f32.mrf.mxu0
        %v2121 = vadd.f32 0.0, %v2120
        %v2122 = vpop.f32.mrf.mxu0
        %2123 = vmatprep.mubr.f32.mxu0 0.0
        %2124 = vmatmul.mubr.f32.gmra.mxu0 %v1915
        %v2125 = vpop.f32.mrf.mxu0
        %v2126 = vadd.f32 0.0, %v2125
        %v2127 = vpop.f32.mrf.mxu0
        %2128 = vmatprep.mubr.f32.mxu0 0.0
        %2129 = vmatmul.mubr.f32.gmra.mxu0 %v1918
        %v2130 = vpop.f32.mrf.mxu0
        %v2131 = vadd.f32 0.0, %v2130
        %v2132 = vpop.f32.mrf.mxu0
        %2133 = vmatprep.mubr.f32.mxu0 0.0
        %2134 = vmatmul.mubr.f32.gmra.mxu0 %v1921
        %v2135 = vpop.f32.mrf.mxu0
        %v2136 = vadd.f32 0.0, %v2135
        %v2137 = vpop.f32.mrf.mxu0
        %2138 = vmatprep.mubr.f32.mxu0 0.0
        %2139 = vmatmul.mubr.f32.gmra.mxu0 %v1924
        %v2140 = vpop.f32.mrf.mxu0
        %v2141 = vadd.f32 0.0, %v2140
        %v2142 = vpop.f32.mrf.mxu0
        %2143 = vmatprep.mubr.f32.mxu0 0.0
        %2144 = vmatmul.mubr.f32.gmra.mxu0 %v1927
        %v2145 = vpop.f32.mrf.mxu0
        %v2146 = vadd.f32 0.0, %v2145
        %v2147 = vpop.f32.mrf.mxu0
        %2148 = vmatprep.mubr.f32.mxu0 0.0
        %2149 = vmatmul.mubr.f32.gmra.mxu0 %v1930
        %v2150 = vpop.f32.mrf.mxu0
        %v2151 = vadd.f32 0.0, %v2150
        %v2152 = vpop.f32.mrf.mxu0
        %2153 = vmatprep.mubr.f32.mxu0 0.0
        %2154 = vmatmul.mubr.f32.gmra.mxu0 %v1933
        %v2155 = vpop.f32.mrf.mxu0
        %v2156 = vadd.f32 0.0, %v2155
        %v2157 = vpop.f32.mrf.mxu0
        %2158 = vmatprep.mubr.f32.mxu0 0.0
        %2159 = vmatmul.mubr.f32.gmra.mxu0 %v1936
        %v2160 = vpop.f32.mrf.mxu0
        %v2161 = vadd.f32 0.0, %v2160
        %v2162 = vpop.f32.mrf.mxu0
        %2163 = vmatprep.mubr.f32.mxu0 0.0
        %2164 = vmatmul.mubr.f32.gmra.mxu0 %v1939
        %v2165 = vpop.f32.mrf.mxu0
        %v2166 = vadd.f32 0.0, %v2165
        %v2167 = vpop.f32.mrf.mxu0
        %2168 = vdwg.mxu0
        %v2169 = vadd.f32 %v1779, %v2011
        %v2170 = vadd.f32 %v1780, %v2016
        %v2171 = vadd.f32 %v1781, %v2021
        %v2172 = vadd.f32 %v1782, %v2026
        %v2173 = vadd.f32 %v1783, %v2031
        %v2174 = vadd.f32 %v1784, %v2036
        %v2175 = vadd.f32 %v1785, %v2041
        %v2176 = vadd.f32 %v1786, %v2046
        %v2177 = vadd.f32 %v1787, %v2051
        %v2178 = vadd.f32 %v1788, %v2056
        %v2179 = vadd.f32 %v1789, %v2061
        %v2180 = vadd.f32 %v1790, %v2066
        %v2181 = vadd.f32 %v1791, %v2071
        %v2182 = vadd.f32 %v1792, %v2076
        %v2183 = vadd.f32 %v1793, %v2081
        %v2184 = vadd.f32 %v1794, %v2086
        %v2185 = vadd.f32 %v1795, %v2091
        %v2186 = vadd.f32 %v1796, %v2096
        %v2187 = vadd.f32 %v1797, %v2101
        %v2188 = vadd.f32 %v1798, %v2106
        %v2189 = vadd.f32 %v1799, %v2111
        %v2190 = vadd.f32 %v1800, %v2116
        %v2191 = vadd.f32 %v1801, %v2121
        %v2192 = vadd.f32 %v1802, %v2126
        %v2193 = vadd.f32 %v1803, %v2131
        %v2194 = vadd.f32 %v1804, %v2136
        %v2195 = vadd.f32 %v1805, %v2141
        %v2196 = vadd.f32 %v1806, %v2146
        %v2197 = vadd.f32 %v1807, %v2151
        %v2198 = vadd.f32 %v1808, %v2156
        %v2199 = vadd.f32 %v1809, %v2161
        %v2200 = vadd.f32 %v1810, %v2166
        %v2201 = vld [vmem:[%s1420 + $0x2] sm:$0xff]
        %v2202 = vld [vmem:[%s1420 + $0xa] sm:$0xff]
        %v2203 = vld [vmem:[%s1420 + $0x1a] sm:$0xff]
        %v2204 = vld [vmem:[%s1420 + $0x22] sm:$0xff]
        %v2205 = vld [vmem:[%s1420 + $0x32] sm:$0xff]
        %v2206 = vld [vmem:[%s1420 + $0x3a] sm:$0xff]
        %v2207 = vld [vmem:[%s1420 + $0x4a] sm:$0xff]
        %v2208 = vld [vmem:[%s1420 + $0x52] sm:$0xff]
        %v2209 = vld [vmem:[%s1420 + $0x62] sm:$0xff]
        %v2210 = vld [vmem:[%s1420 + $0x6a] sm:$0xff]
        %v2211 = vld [vmem:[%s1420 + $0x7a] sm:$0xff]
        %v2212 = vld [vmem:[%s1420 + $0x82] sm:$0xff]
        %v2213 = vld [vmem:[%s1420 + $0x92] sm:$0xff]
        %v2214 = vld [vmem:[%s1420 + $0x9a] sm:$0xff]
        %v2215 = vld [vmem:[%s1420 + $0xaa] sm:$0xff]
        %v2216 = vld [vmem:[%s1420 + $0xb2] sm:$0xff]
        %v2217 = vld [vmem:[%s1420 + $0xc2] sm:$0xff]
        %v2218 = vld [vmem:[%s1420 + $0xca] sm:$0xff]
        %v2219 = vld [vmem:[%s1420 + $0xda] sm:$0xff]
        %v2220 = vld [vmem:[%s1420 + $0xe2] sm:$0xff]
        %v2221 = vld [vmem:[%s1420 + $0xf2] sm:$0xff]
        %v2222 = vld [vmem:[%s1420 + $0xfa] sm:$0xff]
        %v2223 = vld [vmem:[%s1420 + $0x10a] sm:$0xff]
        %v2224 = vld [vmem:[%s1420 + $0x112] sm:$0xff]
        %v2225 = vld [vmem:[%s1420 + $0x122] sm:$0xff]
        %v2226 = vld [vmem:[%s1420 + $0x12a] sm:$0xff]
        %v2227 = vld [vmem:[%s1420 + $0x13a] sm:$0xff]
        %v2228 = vld [vmem:[%s1420 + $0x142] sm:$0xff]
        %v2229 = vld [vmem:[%s1420 + $0x152] sm:$0xff]
        %v2230 = vld [vmem:[%s1420 + $0x15a] sm:$0xff]
        %v2231 = vld [vmem:[%s1420 + $0x16a] sm:$0xff]
        %v2232 = vld [vmem:[%s1420 + $0x172] sm:$0xff]
        %s2233 = scalar_lea.vmem %s1, 20
        %v2234 = vld [vmem:[%s2233] sm:$0x7]
        %v2236 = vsel %vm380, %v2201, 0
        %v2239 = vsel %vm380, %v2202, 0
        %v2242 = vsel %vm380, %v2203, 0
        %v2245 = vsel %vm380, %v2204, 0
        %v2248 = vsel %vm380, %v2205, 0
        %v2251 = vsel %vm380, %v2206, 0
        %v2254 = vsel %vm380, %v2207, 0
        %v2257 = vsel %vm380, %v2208, 0
        %v2260 = vsel %vm380, %v2209, 0
        %v2263 = vsel %vm380, %v2210, 0
        %v2266 = vsel %vm380, %v2211, 0
        %v2269 = vsel %vm380, %v2212, 0
        %v2272 = vsel %vm380, %v2213, 0
        %v2275 = vsel %vm380, %v2214, 0
        %v2278 = vsel %vm380, %v2215, 0
        %v2281 = vsel %vm380, %v2216, 0
        %v2284 = vsel %vm380, %v2217, 0
        %v2287 = vsel %vm380, %v2218, 0
        %v2290 = vsel %vm380, %v2219, 0
        %v2293 = vsel %vm380, %v2220, 0
        %v2296 = vsel %vm380, %v2221, 0
        %v2299 = vsel %vm380, %v2222, 0
        %v2302 = vsel %vm380, %v2223, 0
        %v2305 = vsel %vm380, %v2224, 0
        %v2308 = vsel %vm380, %v2225, 0
        %v2311 = vsel %vm380, %v2226, 0
        %v2314 = vsel %vm380, %v2227, 0
        %v2317 = vsel %vm380, %v2228, 0
        %v2320 = vsel %vm380, %v2229, 0
        %v2323 = vsel %vm380, %v2230, 0
        %v2326 = vsel %vm380, %v2231, 0
        %v2329 = vsel %vm380, %v2232, 0
        %v2332 = vsel %vm477, %v2234, 0
        %2334 = vmatprep.subr.mxu0 0.0
        %2335 = vmatpush1.msra.mxu0 0.0
        %2336 = vmatprep.subr.mxu0 0.0
        %2337 = vmatpush1.msra.mxu0 0.0
        %2338 = vmatprep.subr.mxu0 0.0
        %2339 = vmatpush1.msra.mxu0 0.0
        %2340 = vmatprep.subr.mxu0 0.0
        %2341 = vmatpush1.msra.mxu0 0.0
        %2342 = vmatprep.subr.mxu0 0.0
        %2343 = vmatpush1.msra.mxu0 0.0
        %2344 = vmatprep.subr.mxu0 0.0
        %2345 = vmatpush1.msra.mxu0 0.0
        %2346 = vmatprep.subr.mxu0 0.0
        %2347 = vmatpush1.msra.mxu0 0.0
        %2348 = vmatprep.subr.mxu0 0.0
        %2349 = vmatpush1.msra.mxu0 0.0
        %2350 = vmatprep.subr.mxu0 0.0
        %2351 = vmatpush1.msra.mxu0 0.0
        %2352 = vmatprep.subr.mxu0 0.0
        %2353 = vmatpush1.msra.mxu0 0.0
        %2354 = vmatprep.subr.mxu0 0.0
        %2355 = vmatpush1.msra.mxu0 0.0
        %2356 = vmatprep.subr.mxu0 0.0
        %2357 = vmatpush1.msra.mxu0 0.0
        %2358 = vmatprep.subr.mxu0 0.0
        %2359 = vmatpush1.msra.mxu0 0.0
        %2360 = vmatprep.subr.mxu0 0.0
        %2361 = vmatpush1.msra.mxu0 0.0
        %2362 = vmatprep.subr.mxu0 0.0
        %2363 = vmatpush1.msra.mxu0 0.0
        %2364 = vmatprep.subr.mxu0 0.0
        %2365 = vmatpush1.msra.mxu0 %v2332
        %2366 = vmatprep.subr.mxu0 0.0
        %2367 = vmatpush2.msra.mxu0 0.0
        %2368 = vmatprep.subr.mxu0 0.0
        %2369 = vmatpush2.msra.mxu0 0.0
        %2370 = vmatprep.subr.mxu0 0.0
        %2371 = vmatpush2.msra.mxu0 0.0
        %2372 = vmatprep.subr.mxu0 0.0
        %2373 = vmatpush2.msra.mxu0 0.0
        %2374 = vmatprep.subr.mxu0 0.0
        %2375 = vmatpush2.msra.mxu0 0.0
        %2376 = vmatprep.subr.mxu0 0.0
        %2377 = vmatpush2.msra.mxu0 0.0
        %2378 = vmatprep.subr.mxu0 0.0
        %2379 = vmatpush2.msra.mxu0 0.0
        %2380 = vmatprep.subr.mxu0 0.0
        %2381 = vmatpush2.msra.mxu0 0.0
        %2382 = vmatprep.subr.mxu0 0.0
        %2383 = vmatpush2.msra.mxu0 0.0
        %2384 = vmatprep.subr.mxu0 0.0
        %2385 = vmatpush2.msra.mxu0 0.0
        %2386 = vmatprep.subr.mxu0 0.0
        %2387 = vmatpush2.msra.mxu0 0.0
        %2388 = vmatprep.subr.mxu0 0.0
        %2389 = vmatpush2.msra.mxu0 0.0
        %2390 = vmatprep.subr.mxu0 0.0
        %2391 = vmatpush2.msra.mxu0 0.0
        %2392 = vmatprep.subr.mxu0 0.0
        %2393 = vmatpush2.msra.mxu0 0.0
        %2394 = vmatprep.subr.mxu0 0.0
        %2395 = vmatpush2.msra.mxu0 0.0
        %2396 = vmatprep.subr.mxu0 0.0
        %2397 = vmatpush2.msra.mxu0 0.0
        %2398 = vmatprep.mubr.f32.mxu0 0.0
        %2399 = vmatmul.mubr.f32.gmra.mxu0 %v2236
        %v2400 = vpop.f32.mrf.mxu0
        %v2401 = vadd.f32 0.0, %v2400
        %v2402 = vpop.f32.mrf.mxu0
        %2403 = vmatprep.mubr.f32.mxu0 0.0
        %2404 = vmatmul.mubr.f32.gmra.mxu0 %v2239
        %v2405 = vpop.f32.mrf.mxu0
        %v2406 = vadd.f32 0.0, %v2405
        %v2407 = vpop.f32.mrf.mxu0
        %2408 = vmatprep.mubr.f32.mxu0 0.0
        %2409 = vmatmul.mubr.f32.gmra.mxu0 %v2242
        %v2410 = vpop.f32.mrf.mxu0
        %v2411 = vadd.f32 0.0, %v2410
        %v2412 = vpop.f32.mrf.mxu0
        %2413 = vmatprep.mubr.f32.mxu0 0.0
        %2414 = vmatmul.mubr.f32.gmra.mxu0 %v2245
        %v2415 = vpop.f32.mrf.mxu0
        %v2416 = vadd.f32 0.0, %v2415
        %v2417 = vpop.f32.mrf.mxu0
        %2418 = vmatprep.mubr.f32.mxu0 0.0
        %2419 = vmatmul.mubr.f32.gmra.mxu0 %v2248
        %v2420 = vpop.f32.mrf.mxu0
        %v2421 = vadd.f32 0.0, %v2420
        %v2422 = vpop.f32.mrf.mxu0
        %2423 = vmatprep.mubr.f32.mxu0 0.0
        %2424 = vmatmul.mubr.f32.gmra.mxu0 %v2251
        %v2425 = vpop.f32.mrf.mxu0
        %v2426 = vadd.f32 0.0, %v2425
        %v2427 = vpop.f32.mrf.mxu0
        %2428 = vmatprep.mubr.f32.mxu0 0.0
        %2429 = vmatmul.mubr.f32.gmra.mxu0 %v2254
        %v2430 = vpop.f32.mrf.mxu0
        %v2431 = vadd.f32 0.0, %v2430
        %v2432 = vpop.f32.mrf.mxu0
        %2433 = vmatprep.mubr.f32.mxu0 0.0
        %2434 = vmatmul.mubr.f32.gmra.mxu0 %v2257
        %v2435 = vpop.f32.mrf.mxu0
        %v2436 = vadd.f32 0.0, %v2435
        %v2437 = vpop.f32.mrf.mxu0
        %2438 = vmatprep.mubr.f32.mxu0 0.0
        %2439 = vmatmul.mubr.f32.gmra.mxu0 %v2260
        %v2440 = vpop.f32.mrf.mxu0
        %v2441 = vadd.f32 0.0, %v2440
        %v2442 = vpop.f32.mrf.mxu0
        %2443 = vmatprep.mubr.f32.mxu0 0.0
        %2444 = vmatmul.mubr.f32.gmra.mxu0 %v2263
        %v2445 = vpop.f32.mrf.mxu0
        %v2446 = vadd.f32 0.0, %v2445
        %v2447 = vpop.f32.mrf.mxu0
        %2448 = vmatprep.mubr.f32.mxu0 0.0
        %2449 = vmatmul.mubr.f32.gmra.mxu0 %v2266
        %v2450 = vpop.f32.mrf.mxu0
        %v2451 = vadd.f32 0.0, %v2450
        %v2452 = vpop.f32.mrf.mxu0
        %2453 = vmatprep.mubr.f32.mxu0 0.0
        %2454 = vmatmul.mubr.f32.gmra.mxu0 %v2269
        %v2455 = vpop.f32.mrf.mxu0
        %v2456 = vadd.f32 0.0, %v2455
        %v2457 = vpop.f32.mrf.mxu0
        %2458 = vmatprep.mubr.f32.mxu0 0.0
        %2459 = vmatmul.mubr.f32.gmra.mxu0 %v2272
        %v2460 = vpop.f32.mrf.mxu0
        %v2461 = vadd.f32 0.0, %v2460
        %v2462 = vpop.f32.mrf.mxu0
        %2463 = vmatprep.mubr.f32.mxu0 0.0
        %2464 = vmatmul.mubr.f32.gmra.mxu0 %v2275
        %v2465 = vpop.f32.mrf.mxu0
        %v2466 = vadd.f32 0.0, %v2465
        %v2467 = vpop.f32.mrf.mxu0
        %2468 = vmatprep.mubr.f32.mxu0 0.0
        %2469 = vmatmul.mubr.f32.gmra.mxu0 %v2278
        %v2470 = vpop.f32.mrf.mxu0
        %v2471 = vadd.f32 0.0, %v2470
        %v2472 = vpop.f32.mrf.mxu0
        %2473 = vmatprep.mubr.f32.mxu0 0.0
        %2474 = vmatmul.mubr.f32.gmra.mxu0 %v2281
        %v2475 = vpop.f32.mrf.mxu0
        %v2476 = vadd.f32 0.0, %v2475
        %v2477 = vpop.f32.mrf.mxu0
        %2478 = vmatprep.mubr.f32.mxu0 0.0
        %2479 = vmatmul.mubr.f32.gmra.mxu0 %v2284
        %v2480 = vpop.f32.mrf.mxu0
        %v2481 = vadd.f32 0.0, %v2480
        %v2482 = vpop.f32.mrf.mxu0
        %2483 = vmatprep.mubr.f32.mxu0 0.0
        %2484 = vmatmul.mubr.f32.gmra.mxu0 %v2287
        %v2485 = vpop.f32.mrf.mxu0
        %v2486 = vadd.f32 0.0, %v2485
        %v2487 = vpop.f32.mrf.mxu0
        %2488 = vmatprep.mubr.f32.mxu0 0.0
        %2489 = vmatmul.mubr.f32.gmra.mxu0 %v2290
        %v2490 = vpop.f32.mrf.mxu0
        %v2491 = vadd.f32 0.0, %v2490
        %v2492 = vpop.f32.mrf.mxu0
        %2493 = vmatprep.mubr.f32.mxu0 0.0
        %2494 = vmatmul.mubr.f32.gmra.mxu0 %v2293
        %v2495 = vpop.f32.mrf.mxu0
        %v2496 = vadd.f32 0.0, %v2495
        %v2497 = vpop.f32.mrf.mxu0
        %2498 = vmatprep.mubr.f32.mxu0 0.0
        %2499 = vmatmul.mubr.f32.gmra.mxu0 %v2296
        %v2500 = vpop.f32.mrf.mxu0
        %v2501 = vadd.f32 0.0, %v2500
        %v2502 = vpop.f32.mrf.mxu0
        %2503 = vmatprep.mubr.f32.mxu0 0.0
        %2504 = vmatmul.mubr.f32.gmra.mxu0 %v2299
        %v2505 = vpop.f32.mrf.mxu0
        %v2506 = vadd.f32 0.0, %v2505
        %v2507 = vpop.f32.mrf.mxu0
        %2508 = vmatprep.mubr.f32.mxu0 0.0
        %2509 = vmatmul.mubr.f32.gmra.mxu0 %v2302
        %v2510 = vpop.f32.mrf.mxu0
        %v2511 = vadd.f32 0.0, %v2510
        %v2512 = vpop.f32.mrf.mxu0
        %2513 = vmatprep.mubr.f32.mxu0 0.0
        %2514 = vmatmul.mubr.f32.gmra.mxu0 %v2305
        %v2515 = vpop.f32.mrf.mxu0
        %v2516 = vadd.f32 0.0, %v2515
        %v2517 = vpop.f32.mrf.mxu0
        %2518 = vmatprep.mubr.f32.mxu0 0.0
        %2519 = vmatmul.mubr.f32.gmra.mxu0 %v2308
        %v2520 = vpop.f32.mrf.mxu0
        %v2521 = vadd.f32 0.0, %v2520
        %v2522 = vpop.f32.mrf.mxu0
        %2523 = vmatprep.mubr.f32.mxu0 0.0
        %2524 = vmatmul.mubr.f32.gmra.mxu0 %v2311
        %v2525 = vpop.f32.mrf.mxu0
        %v2526 = vadd.f32 0.0, %v2525
        %v2527 = vpop.f32.mrf.mxu0
        %2528 = vmatprep.mubr.f32.mxu0 0.0
        %2529 = vmatmul.mubr.f32.gmra.mxu0 %v2314
        %v2530 = vpop.f32.mrf.mxu0
        %v2531 = vadd.f32 0.0, %v2530
        %v2532 = vpop.f32.mrf.mxu0
        %2533 = vmatprep.mubr.f32.mxu0 0.0
        %2534 = vmatmul.mubr.f32.gmra.mxu0 %v2317
        %v2535 = vpop.f32.mrf.mxu0
        %v2536 = vadd.f32 0.0, %v2535
        %v2537 = vpop.f32.mrf.mxu0
        %2538 = vmatprep.mubr.f32.mxu0 0.0
        %2539 = vmatmul.mubr.f32.gmra.mxu0 %v2320
        %v2540 = vpop.f32.mrf.mxu0
        %v2541 = vadd.f32 0.0, %v2540
        %v2542 = vpop.f32.mrf.mxu0
        %2543 = vmatprep.mubr.f32.mxu0 0.0
        %2544 = vmatmul.mubr.f32.gmra.mxu0 %v2323
        %v2545 = vpop.f32.mrf.mxu0
        %v2546 = vadd.f32 0.0, %v2545
        %v2547 = vpop.f32.mrf.mxu0
        %2548 = vmatprep.mubr.f32.mxu0 0.0
        %2549 = vmatmul.mubr.f32.gmra.mxu0 %v2326
        %v2550 = vpop.f32.mrf.mxu0
        %v2551 = vadd.f32 0.0, %v2550
        %v2552 = vpop.f32.mrf.mxu0
        %2553 = vmatprep.mubr.f32.mxu0 0.0
        %2554 = vmatmul.mubr.f32.gmra.mxu0 %v2329
        %v2555 = vpop.f32.mrf.mxu0
        %v2556 = vadd.f32 0.0, %v2555
        %v2557 = vpop.f32.mrf.mxu0
        %2558 = vdwg.mxu0
        %v2559 = vadd.f32 %v2169, %v2401
        %v2560 = vadd.f32 %v2170, %v2406
        %v2561 = vadd.f32 %v2171, %v2411
        %v2562 = vadd.f32 %v2172, %v2416
        %v2563 = vadd.f32 %v2173, %v2421
        %v2564 = vadd.f32 %v2174, %v2426
        %v2565 = vadd.f32 %v2175, %v2431
        %v2566 = vadd.f32 %v2176, %v2436
        %v2567 = vadd.f32 %v2177, %v2441
        %v2568 = vadd.f32 %v2178, %v2446
        %v2569 = vadd.f32 %v2179, %v2451
        %v2570 = vadd.f32 %v2180, %v2456
        %v2571 = vadd.f32 %v2181, %v2461
        %v2572 = vadd.f32 %v2182, %v2466
        %v2573 = vadd.f32 %v2183, %v2471
        %v2574 = vadd.f32 %v2184, %v2476
        %v2575 = vadd.f32 %v2185, %v2481
        %v2576 = vadd.f32 %v2186, %v2486
        %v2577 = vadd.f32 %v2187, %v2491
        %v2578 = vadd.f32 %v2188, %v2496
        %v2579 = vadd.f32 %v2189, %v2501
        %v2580 = vadd.f32 %v2190, %v2506
        %v2581 = vadd.f32 %v2191, %v2511
        %v2582 = vadd.f32 %v2192, %v2516
        %v2583 = vadd.f32 %v2193, %v2521
        %v2584 = vadd.f32 %v2194, %v2526
        %v2585 = vadd.f32 %v2195, %v2531
        %v2586 = vadd.f32 %v2196, %v2536
        %v2587 = vadd.f32 %v2197, %v2541
        %v2588 = vadd.f32 %v2198, %v2546
        %v2589 = vadd.f32 %v2199, %v2551
        %v2590 = vadd.f32 %v2200, %v2556
        %s2591 = scalar_lea.vmem %s312, 48
        %v2592 = vld [vmem:[%s2591] sm:$0xff]
        %v2593 = vld [vmem:[%s2591 + $0x8] sm:$0xff]
        %v2594 = vld [vmem:[%s2591 + $0x18] sm:$0xff]
        %v2595 = vld [vmem:[%s2591 + $0x20] sm:$0xff]
        %v2596 = vld [vmem:[%s2591 + $0x30] sm:$0xff]
        %v2597 = vld [vmem:[%s2591 + $0x38] sm:$0xff]
        %v2598 = vld [vmem:[%s2591 + $0x48] sm:$0xff]
        %v2599 = vld [vmem:[%s2591 + $0x50] sm:$0xff]
        %v2600 = vld [vmem:[%s2591 + $0x60] sm:$0xff]
        %v2601 = vld [vmem:[%s2591 + $0x68] sm:$0xff]
        %v2602 = vld [vmem:[%s2591 + $0x78] sm:$0xff]
        %v2603 = vld [vmem:[%s2591 + $0x80] sm:$0xff]
        %v2604 = vld [vmem:[%s2591 + $0x90] sm:$0xff]
        %v2605 = vld [vmem:[%s2591 + $0x98] sm:$0xff]
        %v2606 = vld [vmem:[%s2591 + $0xa8] sm:$0xff]
        %v2607 = vld [vmem:[%s2591 + $0xb0] sm:$0xff]
        %v2608 = vld [vmem:[%s2591 + $0xc0] sm:$0xff]
        %v2609 = vld [vmem:[%s2591 + $0xc8] sm:$0xff]
        %v2610 = vld [vmem:[%s2591 + $0xd8] sm:$0xff]
        %v2611 = vld [vmem:[%s2591 + $0xe0] sm:$0xff]
        %v2612 = vld [vmem:[%s2591 + $0xf0] sm:$0xff]
        %v2613 = vld [vmem:[%s2591 + $0xf8] sm:$0xff]
        %v2614 = vld [vmem:[%s2591 + $0x108] sm:$0xff]
        %v2615 = vld [vmem:[%s2591 + $0x110] sm:$0xff]
        %v2616 = vld [vmem:[%s2591 + $0x120] sm:$0xff]
        %v2617 = vld [vmem:[%s2591 + $0x128] sm:$0xff]
        %v2618 = vld [vmem:[%s2591 + $0x138] sm:$0xff]
        %v2619 = vld [vmem:[%s2591 + $0x140] sm:$0xff]
        %v2620 = vld [vmem:[%s2591 + $0x150] sm:$0xff]
        %v2621 = vld [vmem:[%s2591 + $0x158] sm:$0xff]
        %v2622 = vld [vmem:[%s2591 + $0x168] sm:$0xff]
        %v2623 = vld [vmem:[%s2591 + $0x170] sm:$0xff]
        %s2624 = scalar_lea.vmem %s1, 24
        %v2625 = vld [vmem:[%s2624] sm:$0x7]
        %v2627 = vsel %vm380, %v2592, 0
        %v2630 = vsel %vm380, %v2593, 0
        %v2633 = vsel %vm380, %v2594, 0
        %v2636 = vsel %vm380, %v2595, 0
        %v2639 = vsel %vm380, %v2596, 0
        %v2642 = vsel %vm380, %v2597, 0
        %v2645 = vsel %vm380, %v2598, 0
        %v2648 = vsel %vm380, %v2599, 0
        %v2651 = vsel %vm380, %v2600, 0
        %v2654 = vsel %vm380, %v2601, 0
        %v2657 = vsel %vm380, %v2602, 0
        %v2660 = vsel %vm380, %v2603, 0
        %v2663 = vsel %vm380, %v2604, 0
        %v2666 = vsel %vm380, %v2605, 0
        %v2669 = vsel %vm380, %v2606, 0
        %v2672 = vsel %vm380, %v2607, 0
        %v2675 = vsel %vm380, %v2608, 0
        %v2678 = vsel %vm380, %v2609, 0
        %v2681 = vsel %vm380, %v2610, 0
        %v2684 = vsel %vm380, %v2611, 0
        %v2687 = vsel %vm380, %v2612, 0
        %v2690 = vsel %vm380, %v2613, 0
        %v2693 = vsel %vm380, %v2614, 0
        %v2696 = vsel %vm380, %v2615, 0
        %v2699 = vsel %vm380, %v2616, 0
        %v2702 = vsel %vm380, %v2617, 0
        %v2705 = vsel %vm380, %v2618, 0
        %v2708 = vsel %vm380, %v2619, 0
        %v2711 = vsel %vm380, %v2620, 0
        %v2714 = vsel %vm380, %v2621, 0
        %v2717 = vsel %vm380, %v2622, 0
        %v2720 = vsel %vm380, %v2623, 0
        %v2723 = vsel %vm477, %v2625, 0
        %2725 = vmatprep.subr.mxu0 0.0
        %2726 = vmatpush1.msra.mxu0 0.0
        %2727 = vmatprep.subr.mxu0 0.0
        %2728 = vmatpush1.msra.mxu0 0.0
        %2729 = vmatprep.subr.mxu0 0.0
        %2730 = vmatpush1.msra.mxu0 0.0
        %2731 = vmatprep.subr.mxu0 0.0
        %2732 = vmatpush1.msra.mxu0 0.0
        %2733 = vmatprep.subr.mxu0 0.0
        %2734 = vmatpush1.msra.mxu0 0.0
        %2735 = vmatprep.subr.mxu0 0.0
        %2736 = vmatpush1.msra.mxu0 0.0
        %2737 = vmatprep.subr.mxu0 0.0
        %2738 = vmatpush1.msra.mxu0 0.0
        %2739 = vmatprep.subr.mxu0 0.0
        %2740 = vmatpush1.msra.mxu0 0.0
        %2741 = vmatprep.subr.mxu0 0.0
        %2742 = vmatpush1.msra.mxu0 0.0
        %2743 = vmatprep.subr.mxu0 0.0
        %2744 = vmatpush1.msra.mxu0 0.0
        %2745 = vmatprep.subr.mxu0 0.0
        %2746 = vmatpush1.msra.mxu0 0.0
        %2747 = vmatprep.subr.mxu0 0.0
        %2748 = vmatpush1.msra.mxu0 0.0
        %2749 = vmatprep.subr.mxu0 0.0
        %2750 = vmatpush1.msra.mxu0 0.0
        %2751 = vmatprep.subr.mxu0 0.0
        %2752 = vmatpush1.msra.mxu0 0.0
        %2753 = vmatprep.subr.mxu0 0.0
        %2754 = vmatpush1.msra.mxu0 0.0
        %2755 = vmatprep.subr.mxu0 0.0
        %2756 = vmatpush1.msra.mxu0 %v2723
        %2757 = vmatprep.subr.mxu0 0.0
        %2758 = vmatpush2.msra.mxu0 0.0
        %2759 = vmatprep.subr.mxu0 0.0
        %2760 = vmatpush2.msra.mxu0 0.0
        %2761 = vmatprep.subr.mxu0 0.0
        %2762 = vmatpush2.msra.mxu0 0.0
        %2763 = vmatprep.subr.mxu0 0.0
        %2764 = vmatpush2.msra.mxu0 0.0
        %2765 = vmatprep.subr.mxu0 0.0
        %2766 = vmatpush2.msra.mxu0 0.0
        %2767 = vmatprep.subr.mxu0 0.0
        %2768 = vmatpush2.msra.mxu0 0.0
        %2769 = vmatprep.subr.mxu0 0.0
        %2770 = vmatpush2.msra.mxu0 0.0
        %2771 = vmatprep.subr.mxu0 0.0
        %2772 = vmatpush2.msra.mxu0 0.0
        %2773 = vmatprep.subr.mxu0 0.0
        %2774 = vmatpush2.msra.mxu0 0.0
        %2775 = vmatprep.subr.mxu0 0.0
        %2776 = vmatpush2.msra.mxu0 0.0
        %2777 = vmatprep.subr.mxu0 0.0
        %2778 = vmatpush2.msra.mxu0 0.0
        %2779 = vmatprep.subr.mxu0 0.0
        %2780 = vmatpush2.msra.mxu0 0.0
        %2781 = vmatprep.subr.mxu0 0.0
        %2782 = vmatpush2.msra.mxu0 0.0
        %2783 = vmatprep.subr.mxu0 0.0
        %2784 = vmatpush2.msra.mxu0 0.0
        %2785 = vmatprep.subr.mxu0 0.0
        %2786 = vmatpush2.msra.mxu0 0.0
        %2787 = vmatprep.subr.mxu0 0.0
        %2788 = vmatpush2.msra.mxu0 0.0
        %2789 = vmatprep.mubr.f32.mxu0 0.0
        %2790 = vmatmul.mubr.f32.gmra.mxu0 %v2627
        %v2791 = vpop.f32.mrf.mxu0
        %v2792 = vadd.f32 0.0, %v2791
        %v2793 = vpop.f32.mrf.mxu0
        %2794 = vmatprep.mubr.f32.mxu0 0.0
        %2795 = vmatmul.mubr.f32.gmra.mxu0 %v2630
        %v2796 = vpop.f32.mrf.mxu0
        %v2797 = vadd.f32 0.0, %v2796
        %v2798 = vpop.f32.mrf.mxu0
        %2799 = vmatprep.mubr.f32.mxu0 0.0
        %2800 = vmatmul.mubr.f32.gmra.mxu0 %v2633
        %v2801 = vpop.f32.mrf.mxu0
        %v2802 = vadd.f32 0.0, %v2801
        %v2803 = vpop.f32.mrf.mxu0
        %2804 = vmatprep.mubr.f32.mxu0 0.0
        %2805 = vmatmul.mubr.f32.gmra.mxu0 %v2636
        %v2806 = vpop.f32.mrf.mxu0
        %v2807 = vadd.f32 0.0, %v2806
        %v2808 = vpop.f32.mrf.mxu0
        %2809 = vmatprep.mubr.f32.mxu0 0.0
        %2810 = vmatmul.mubr.f32.gmra.mxu0 %v2639
        %v2811 = vpop.f32.mrf.mxu0
        %v2812 = vadd.f32 0.0, %v2811
        %v2813 = vpop.f32.mrf.mxu0
        %2814 = vmatprep.mubr.f32.mxu0 0.0
        %2815 = vmatmul.mubr.f32.gmra.mxu0 %v2642
        %v2816 = vpop.f32.mrf.mxu0
        %v2817 = vadd.f32 0.0, %v2816
        %v2818 = vpop.f32.mrf.mxu0
        %2819 = vmatprep.mubr.f32.mxu0 0.0
        %2820 = vmatmul.mubr.f32.gmra.mxu0 %v2645
        %v2821 = vpop.f32.mrf.mxu0
        %v2822 = vadd.f32 0.0, %v2821
        %v2823 = vpop.f32.mrf.mxu0
        %2824 = vmatprep.mubr.f32.mxu0 0.0
        %2825 = vmatmul.mubr.f32.gmra.mxu0 %v2648
        %v2826 = vpop.f32.mrf.mxu0
        %v2827 = vadd.f32 0.0, %v2826
        %v2828 = vpop.f32.mrf.mxu0
        %2829 = vmatprep.mubr.f32.mxu0 0.0
        %2830 = vmatmul.mubr.f32.gmra.mxu0 %v2651
        %v2831 = vpop.f32.mrf.mxu0
        %v2832 = vadd.f32 0.0, %v2831
        %v2833 = vpop.f32.mrf.mxu0
        %2834 = vmatprep.mubr.f32.mxu0 0.0
        %2835 = vmatmul.mubr.f32.gmra.mxu0 %v2654
        %v2836 = vpop.f32.mrf.mxu0
        %v2837 = vadd.f32 0.0, %v2836
        %v2838 = vpop.f32.mrf.mxu0
        %2839 = vmatprep.mubr.f32.mxu0 0.0
        %2840 = vmatmul.mubr.f32.gmra.mxu0 %v2657
        %v2841 = vpop.f32.mrf.mxu0
        %v2842 = vadd.f32 0.0, %v2841
        %v2843 = vpop.f32.mrf.mxu0
        %2844 = vmatprep.mubr.f32.mxu0 0.0
        %2845 = vmatmul.mubr.f32.gmra.mxu0 %v2660
        %v2846 = vpop.f32.mrf.mxu0
        %v2847 = vadd.f32 0.0, %v2846
        %v2848 = vpop.f32.mrf.mxu0
        %2849 = vmatprep.mubr.f32.mxu0 0.0
        %2850 = vmatmul.mubr.f32.gmra.mxu0 %v2663
        %v2851 = vpop.f32.mrf.mxu0
        %v2852 = vadd.f32 0.0, %v2851
        %v2853 = vpop.f32.mrf.mxu0
        %2854 = vmatprep.mubr.f32.mxu0 0.0
        %2855 = vmatmul.mubr.f32.gmra.mxu0 %v2666
        %v2856 = vpop.f32.mrf.mxu0
        %v2857 = vadd.f32 0.0, %v2856
        %v2858 = vpop.f32.mrf.mxu0
        %2859 = vmatprep.mubr.f32.mxu0 0.0
        %2860 = vmatmul.mubr.f32.gmra.mxu0 %v2669
        %v2861 = vpop.f32.mrf.mxu0
        %v2862 = vadd.f32 0.0, %v2861
        %v2863 = vpop.f32.mrf.mxu0
        %2864 = vmatprep.mubr.f32.mxu0 0.0
        %2865 = vmatmul.mubr.f32.gmra.mxu0 %v2672
        %v2866 = vpop.f32.mrf.mxu0
        %v2867 = vadd.f32 0.0, %v2866
        %v2868 = vpop.f32.mrf.mxu0
        %2869 = vmatprep.mubr.f32.mxu0 0.0
        %2870 = vmatmul.mubr.f32.gmra.mxu0 %v2675
        %v2871 = vpop.f32.mrf.mxu0
        %v2872 = vadd.f32 0.0, %v2871
        %v2873 = vpop.f32.mrf.mxu0
        %2874 = vmatprep.mubr.f32.mxu0 0.0
        %2875 = vmatmul.mubr.f32.gmra.mxu0 %v2678
        %v2876 = vpop.f32.mrf.mxu0
        %v2877 = vadd.f32 0.0, %v2876
        %v2878 = vpop.f32.mrf.mxu0
        %2879 = vmatprep.mubr.f32.mxu0 0.0
        %2880 = vmatmul.mubr.f32.gmra.mxu0 %v2681
        %v2881 = vpop.f32.mrf.mxu0
        %v2882 = vadd.f32 0.0, %v2881
        %v2883 = vpop.f32.mrf.mxu0
        %2884 = vmatprep.mubr.f32.mxu0 0.0
        %2885 = vmatmul.mubr.f32.gmra.mxu0 %v2684
        %v2886 = vpop.f32.mrf.mxu0
        %v2887 = vadd.f32 0.0, %v2886
        %v2888 = vpop.f32.mrf.mxu0
        %2889 = vmatprep.mubr.f32.mxu0 0.0
        %2890 = vmatmul.mubr.f32.gmra.mxu0 %v2687
        %v2891 = vpop.f32.mrf.mxu0
        %v2892 = vadd.f32 0.0, %v2891
        %v2893 = vpop.f32.mrf.mxu0
        %2894 = vmatprep.mubr.f32.mxu0 0.0
        %2895 = vmatmul.mubr.f32.gmra.mxu0 %v2690
        %v2896 = vpop.f32.mrf.mxu0
        %v2897 = vadd.f32 0.0, %v2896
        %v2898 = vpop.f32.mrf.mxu0
        %2899 = vmatprep.mubr.f32.mxu0 0.0
        %2900 = vmatmul.mubr.f32.gmra.mxu0 %v2693
        %v2901 = vpop.f32.mrf.mxu0
        %v2902 = vadd.f32 0.0, %v2901
        %v2903 = vpop.f32.mrf.mxu0
        %2904 = vmatprep.mubr.f32.mxu0 0.0
        %2905 = vmatmul.mubr.f32.gmra.mxu0 %v2696
        %v2906 = vpop.f32.mrf.mxu0
        %v2907 = vadd.f32 0.0, %v2906
        %v2908 = vpop.f32.mrf.mxu0
        %2909 = vmatprep.mubr.f32.mxu0 0.0
        %2910 = vmatmul.mubr.f32.gmra.mxu0 %v2699
        %v2911 = vpop.f32.mrf.mxu0
        %v2912 = vadd.f32 0.0, %v2911
        %v2913 = vpop.f32.mrf.mxu0
        %2914 = vmatprep.mubr.f32.mxu0 0.0
        %2915 = vmatmul.mubr.f32.gmra.mxu0 %v2702
        %v2916 = vpop.f32.mrf.mxu0
        %v2917 = vadd.f32 0.0, %v2916
        %v2918 = vpop.f32.mrf.mxu0
        %2919 = vmatprep.mubr.f32.mxu0 0.0
        %2920 = vmatmul.mubr.f32.gmra.mxu0 %v2705
        %v2921 = vpop.f32.mrf.mxu0
        %v2922 = vadd.f32 0.0, %v2921
        %v2923 = vpop.f32.mrf.mxu0
        %2924 = vmatprep.mubr.f32.mxu0 0.0
        %2925 = vmatmul.mubr.f32.gmra.mxu0 %v2708
        %v2926 = vpop.f32.mrf.mxu0
        %v2927 = vadd.f32 0.0, %v2926
        %v2928 = vpop.f32.mrf.mxu0
        %2929 = vmatprep.mubr.f32.mxu0 0.0
        %2930 = vmatmul.mubr.f32.gmra.mxu0 %v2711
        %v2931 = vpop.f32.mrf.mxu0
        %v2932 = vadd.f32 0.0, %v2931
        %v2933 = vpop.f32.mrf.mxu0
        %2934 = vmatprep.mubr.f32.mxu0 0.0
        %2935 = vmatmul.mubr.f32.gmra.mxu0 %v2714
        %v2936 = vpop.f32.mrf.mxu0
        %v2937 = vadd.f32 0.0, %v2936
        %v2938 = vpop.f32.mrf.mxu0
        %2939 = vmatprep.mubr.f32.mxu0 0.0
        %2940 = vmatmul.mubr.f32.gmra.mxu0 %v2717
        %v2941 = vpop.f32.mrf.mxu0
        %v2942 = vadd.f32 0.0, %v2941
        %v2943 = vpop.f32.mrf.mxu0
        %2944 = vmatprep.mubr.f32.mxu0 0.0
        %2945 = vmatmul.mubr.f32.gmra.mxu0 %v2720
        %v2946 = vpop.f32.mrf.mxu0
        %v2947 = vadd.f32 0.0, %v2946
        %v2948 = vpop.f32.mrf.mxu0
        %2949 = vdwg.mxu0
        %v2950 = vadd.f32 %v2559, %v2792
        %v2951 = vadd.f32 %v2560, %v2797
        %v2952 = vadd.f32 %v2561, %v2802
        %v2953 = vadd.f32 %v2562, %v2807
        %v2954 = vadd.f32 %v2563, %v2812
        %v2955 = vadd.f32 %v2564, %v2817
        %v2956 = vadd.f32 %v2565, %v2822
        %v2957 = vadd.f32 %v2566, %v2827
        %v2958 = vadd.f32 %v2567, %v2832
        %v2959 = vadd.f32 %v2568, %v2837
        %v2960 = vadd.f32 %v2569, %v2842
        %v2961 = vadd.f32 %v2570, %v2847
        %v2962 = vadd.f32 %v2571, %v2852
        %v2963 = vadd.f32 %v2572, %v2857
        %v2964 = vadd.f32 %v2573, %v2862
        %v2965 = vadd.f32 %v2574, %v2867
        %v2966 = vadd.f32 %v2575, %v2872
        %v2967 = vadd.f32 %v2576, %v2877
        %v2968 = vadd.f32 %v2577, %v2882
        %v2969 = vadd.f32 %v2578, %v2887
        %v2970 = vadd.f32 %v2579, %v2892
        %v2971 = vadd.f32 %v2580, %v2897
        %v2972 = vadd.f32 %v2581, %v2902
        %v2973 = vadd.f32 %v2582, %v2907
        %v2974 = vadd.f32 %v2583, %v2912
        %v2975 = vadd.f32 %v2584, %v2917
        %v2976 = vadd.f32 %v2585, %v2922
        %v2977 = vadd.f32 %v2586, %v2927
        %v2978 = vadd.f32 %v2587, %v2932
        %v2979 = vadd.f32 %v2588, %v2937
        %v2980 = vadd.f32 %v2589, %v2942
        %v2981 = vadd.f32 %v2590, %v2947
        %v2982 = vld [vmem:[%s2591 + $0x1] sm:$0xff]
        %v2983 = vld [vmem:[%s2591 + $0x9] sm:$0xff]
        %v2984 = vld [vmem:[%s2591 + $0x19] sm:$0xff]
        %v2985 = vld [vmem:[%s2591 + $0x21] sm:$0xff]
        %v2986 = vld [vmem:[%s2591 + $0x31] sm:$0xff]
        %v2987 = vld [vmem:[%s2591 + $0x39] sm:$0xff]
        %v2988 = vld [vmem:[%s2591 + $0x49] sm:$0xff]
        %v2989 = vld [vmem:[%s2591 + $0x51] sm:$0xff]
        %v2990 = vld [vmem:[%s2591 + $0x61] sm:$0xff]
        %v2991 = vld [vmem:[%s2591 + $0x69] sm:$0xff]
        %v2992 = vld [vmem:[%s2591 + $0x79] sm:$0xff]
        %v2993 = vld [vmem:[%s2591 + $0x81] sm:$0xff]
        %v2994 = vld [vmem:[%s2591 + $0x91] sm:$0xff]
        %v2995 = vld [vmem:[%s2591 + $0x99] sm:$0xff]
        %v2996 = vld [vmem:[%s2591 + $0xa9] sm:$0xff]
        %v2997 = vld [vmem:[%s2591 + $0xb1] sm:$0xff]
        %v2998 = vld [vmem:[%s2591 + $0xc1] sm:$0xff]
        %v2999 = vld [vmem:[%s2591 + $0xc9] sm:$0xff]
        %v3000 = vld [vmem:[%s2591 + $0xd9] sm:$0xff]
        %v3001 = vld [vmem:[%s2591 + $0xe1] sm:$0xff]
        %v3002 = vld [vmem:[%s2591 + $0xf1] sm:$0xff]
        %v3003 = vld [vmem:[%s2591 + $0xf9] sm:$0xff]
        %v3004 = vld [vmem:[%s2591 + $0x109] sm:$0xff]
        %v3005 = vld [vmem:[%s2591 + $0x111] sm:$0xff]
        %v3006 = vld [vmem:[%s2591 + $0x121] sm:$0xff]
        %v3007 = vld [vmem:[%s2591 + $0x129] sm:$0xff]
        %v3008 = vld [vmem:[%s2591 + $0x139] sm:$0xff]
        %v3009 = vld [vmem:[%s2591 + $0x141] sm:$0xff]
        %v3010 = vld [vmem:[%s2591 + $0x151] sm:$0xff]
        %v3011 = vld [vmem:[%s2591 + $0x159] sm:$0xff]
        %v3012 = vld [vmem:[%s2591 + $0x169] sm:$0xff]
        %v3013 = vld [vmem:[%s2591 + $0x171] sm:$0xff]
        %s3014 = scalar_lea.vmem %s1, 28
        %v3015 = vld [vmem:[%s3014] sm:$0x7]
        %v3017 = vsel %vm380, %v2982, 0
        %v3020 = vsel %vm380, %v2983, 0
        %v3023 = vsel %vm380, %v2984, 0
        %v3026 = vsel %vm380, %v2985, 0
        %v3029 = vsel %vm380, %v2986, 0
        %v3032 = vsel %vm380, %v2987, 0
        %v3035 = vsel %vm380, %v2988, 0
        %v3038 = vsel %vm380, %v2989, 0
        %v3041 = vsel %vm380, %v2990, 0
        %v3044 = vsel %vm380, %v2991, 0
        %v3047 = vsel %vm380, %v2992, 0
        %v3050 = vsel %vm380, %v2993, 0
        %v3053 = vsel %vm380, %v2994, 0
        %v3056 = vsel %vm380, %v2995, 0
        %v3059 = vsel %vm380, %v2996, 0
        %v3062 = vsel %vm380, %v2997, 0
        %v3065 = vsel %vm380, %v2998, 0
        %v3068 = vsel %vm380, %v2999, 0
        %v3071 = vsel %vm380, %v3000, 0
        %v3074 = vsel %vm380, %v3001, 0
        %v3077 = vsel %vm380, %v3002, 0
        %v3080 = vsel %vm380, %v3003, 0
        %v3083 = vsel %vm380, %v3004, 0
        %v3086 = vsel %vm380, %v3005, 0
        %v3089 = vsel %vm380, %v3006, 0
        %v3092 = vsel %vm380, %v3007, 0
        %v3095 = vsel %vm380, %v3008, 0
        %v3098 = vsel %vm380, %v3009, 0
        %v3101 = vsel %vm380, %v3010, 0
        %v3104 = vsel %vm380, %v3011, 0
        %v3107 = vsel %vm380, %v3012, 0
        %v3110 = vsel %vm380, %v3013, 0
        %v3113 = vsel %vm477, %v3015, 0
        %3115 = vmatprep.subr.mxu0 0.0
        %3116 = vmatpush1.msra.mxu0 0.0
        %3117 = vmatprep.subr.mxu0 0.0
        %3118 = vmatpush1.msra.mxu0 0.0
        %3119 = vmatprep.subr.mxu0 0.0
        %3120 = vmatpush1.msra.mxu0 0.0
        %3121 = vmatprep.subr.mxu0 0.0
        %3122 = vmatpush1.msra.mxu0 0.0
        %3123 = vmatprep.subr.mxu0 0.0
        %3124 = vmatpush1.msra.mxu0 0.0
        %3125 = vmatprep.subr.mxu0 0.0
        %3126 = vmatpush1.msra.mxu0 0.0
        %3127 = vmatprep.subr.mxu0 0.0
        %3128 = vmatpush1.msra.mxu0 0.0
        %3129 = vmatprep.subr.mxu0 0.0
        %3130 = vmatpush1.msra.mxu0 0.0
        %3131 = vmatprep.subr.mxu0 0.0
        %3132 = vmatpush1.msra.mxu0 0.0
        %3133 = vmatprep.subr.mxu0 0.0
        %3134 = vmatpush1.msra.mxu0 0.0
        %3135 = vmatprep.subr.mxu0 0.0
        %3136 = vmatpush1.msra.mxu0 0.0
        %3137 = vmatprep.subr.mxu0 0.0
        %3138 = vmatpush1.msra.mxu0 0.0
        %3139 = vmatprep.subr.mxu0 0.0
        %3140 = vmatpush1.msra.mxu0 0.0
        %3141 = vmatprep.subr.mxu0 0.0
        %3142 = vmatpush1.msra.mxu0 0.0
        %3143 = vmatprep.subr.mxu0 0.0
        %3144 = vmatpush1.msra.mxu0 0.0
        %3145 = vmatprep.subr.mxu0 0.0
        %3146 = vmatpush1.msra.mxu0 %v3113
        %3147 = vmatprep.subr.mxu0 0.0
        %3148 = vmatpush2.msra.mxu0 0.0
        %3149 = vmatprep.subr.mxu0 0.0
        %3150 = vmatpush2.msra.mxu0 0.0
        %3151 = vmatprep.subr.mxu0 0.0
        %3152 = vmatpush2.msra.mxu0 0.0
        %3153 = vmatprep.subr.mxu0 0.0
        %3154 = vmatpush2.msra.mxu0 0.0
        %3155 = vmatprep.subr.mxu0 0.0
        %3156 = vmatpush2.msra.mxu0 0.0
        %3157 = vmatprep.subr.mxu0 0.0
        %3158 = vmatpush2.msra.mxu0 0.0
        %3159 = vmatprep.subr.mxu0 0.0
        %3160 = vmatpush2.msra.mxu0 0.0
        %3161 = vmatprep.subr.mxu0 0.0
        %3162 = vmatpush2.msra.mxu0 0.0
        %3163 = vmatprep.subr.mxu0 0.0
        %3164 = vmatpush2.msra.mxu0 0.0
        %3165 = vmatprep.subr.mxu0 0.0
        %3166 = vmatpush2.msra.mxu0 0.0
        %3167 = vmatprep.subr.mxu0 0.0
        %3168 = vmatpush2.msra.mxu0 0.0
        %3169 = vmatprep.subr.mxu0 0.0
        %3170 = vmatpush2.msra.mxu0 0.0
        %3171 = vmatprep.subr.mxu0 0.0
        %3172 = vmatpush2.msra.mxu0 0.0
        %3173 = vmatprep.subr.mxu0 0.0
        %3174 = vmatpush2.msra.mxu0 0.0
        %3175 = vmatprep.subr.mxu0 0.0
        %3176 = vmatpush2.msra.mxu0 0.0
        %3177 = vmatprep.subr.mxu0 0.0
        %3178 = vmatpush2.msra.mxu0 0.0
        %3179 = vmatprep.mubr.f32.mxu0 0.0
        %3180 = vmatmul.mubr.f32.gmra.mxu0 %v3017
        %v3181 = vpop.f32.mrf.mxu0
        %v3182 = vadd.f32 0.0, %v3181
        %v3183 = vpop.f32.mrf.mxu0
        %3184 = vmatprep.mubr.f32.mxu0 0.0
        %3185 = vmatmul.mubr.f32.gmra.mxu0 %v3020
        %v3186 = vpop.f32.mrf.mxu0
        %v3187 = vadd.f32 0.0, %v3186
        %v3188 = vpop.f32.mrf.mxu0
        %3189 = vmatprep.mubr.f32.mxu0 0.0
        %3190 = vmatmul.mubr.f32.gmra.mxu0 %v3023
        %v3191 = vpop.f32.mrf.mxu0
        %v3192 = vadd.f32 0.0, %v3191
        %v3193 = vpop.f32.mrf.mxu0
        %3194 = vmatprep.mubr.f32.mxu0 0.0
        %3195 = vmatmul.mubr.f32.gmra.mxu0 %v3026
        %v3196 = vpop.f32.mrf.mxu0
        %v3197 = vadd.f32 0.0, %v3196
        %v3198 = vpop.f32.mrf.mxu0
        %3199 = vmatprep.mubr.f32.mxu0 0.0
        %3200 = vmatmul.mubr.f32.gmra.mxu0 %v3029
        %v3201 = vpop.f32.mrf.mxu0
        %v3202 = vadd.f32 0.0, %v3201
        %v3203 = vpop.f32.mrf.mxu0
        %3204 = vmatprep.mubr.f32.mxu0 0.0
        %3205 = vmatmul.mubr.f32.gmra.mxu0 %v3032
        %v3206 = vpop.f32.mrf.mxu0
        %v3207 = vadd.f32 0.0, %v3206
        %v3208 = vpop.f32.mrf.mxu0
        %3209 = vmatprep.mubr.f32.mxu0 0.0
        %3210 = vmatmul.mubr.f32.gmra.mxu0 %v3035
        %v3211 = vpop.f32.mrf.mxu0
        %v3212 = vadd.f32 0.0, %v3211
        %v3213 = vpop.f32.mrf.mxu0
        %3214 = vmatprep.mubr.f32.mxu0 0.0
        %3215 = vmatmul.mubr.f32.gmra.mxu0 %v3038
        %v3216 = vpop.f32.mrf.mxu0
        %v3217 = vadd.f32 0.0, %v3216
        %v3218 = vpop.f32.mrf.mxu0
        %3219 = vmatprep.mubr.f32.mxu0 0.0
        %3220 = vmatmul.mubr.f32.gmra.mxu0 %v3041
        %v3221 = vpop.f32.mrf.mxu0
        %v3222 = vadd.f32 0.0, %v3221
        %v3223 = vpop.f32.mrf.mxu0
        %3224 = vmatprep.mubr.f32.mxu0 0.0
        %3225 = vmatmul.mubr.f32.gmra.mxu0 %v3044
        %v3226 = vpop.f32.mrf.mxu0
        %v3227 = vadd.f32 0.0, %v3226
        %v3228 = vpop.f32.mrf.mxu0
        %3229 = vmatprep.mubr.f32.mxu0 0.0
        %3230 = vmatmul.mubr.f32.gmra.mxu0 %v3047
        %v3231 = vpop.f32.mrf.mxu0
        %v3232 = vadd.f32 0.0, %v3231
        %v3233 = vpop.f32.mrf.mxu0
        %3234 = vmatprep.mubr.f32.mxu0 0.0
        %3235 = vmatmul.mubr.f32.gmra.mxu0 %v3050
        %v3236 = vpop.f32.mrf.mxu0
        %v3237 = vadd.f32 0.0, %v3236
        %v3238 = vpop.f32.mrf.mxu0
        %3239 = vmatprep.mubr.f32.mxu0 0.0
        %3240 = vmatmul.mubr.f32.gmra.mxu0 %v3053
        %v3241 = vpop.f32.mrf.mxu0
        %v3242 = vadd.f32 0.0, %v3241
        %v3243 = vpop.f32.mrf.mxu0
        %3244 = vmatprep.mubr.f32.mxu0 0.0
        %3245 = vmatmul.mubr.f32.gmra.mxu0 %v3056
        %v3246 = vpop.f32.mrf.mxu0
        %v3247 = vadd.f32 0.0, %v3246
        %v3248 = vpop.f32.mrf.mxu0
        %3249 = vmatprep.mubr.f32.mxu0 0.0
        %3250 = vmatmul.mubr.f32.gmra.mxu0 %v3059
        %v3251 = vpop.f32.mrf.mxu0
        %v3252 = vadd.f32 0.0, %v3251
        %v3253 = vpop.f32.mrf.mxu0
        %3254 = vmatprep.mubr.f32.mxu0 0.0
        %3255 = vmatmul.mubr.f32.gmra.mxu0 %v3062
        %v3256 = vpop.f32.mrf.mxu0
        %v3257 = vadd.f32 0.0, %v3256
        %v3258 = vpop.f32.mrf.mxu0
        %3259 = vmatprep.mubr.f32.mxu0 0.0
        %3260 = vmatmul.mubr.f32.gmra.mxu0 %v3065
        %v3261 = vpop.f32.mrf.mxu0
        %v3262 = vadd.f32 0.0, %v3261
        %v3263 = vpop.f32.mrf.mxu0
        %3264 = vmatprep.mubr.f32.mxu0 0.0
        %3265 = vmatmul.mubr.f32.gmra.mxu0 %v3068
        %v3266 = vpop.f32.mrf.mxu0
        %v3267 = vadd.f32 0.0, %v3266
        %v3268 = vpop.f32.mrf.mxu0
        %3269 = vmatprep.mubr.f32.mxu0 0.0
        %3270 = vmatmul.mubr.f32.gmra.mxu0 %v3071
        %v3271 = vpop.f32.mrf.mxu0
        %v3272 = vadd.f32 0.0, %v3271
        %v3273 = vpop.f32.mrf.mxu0
        %3274 = vmatprep.mubr.f32.mxu0 0.0
        %3275 = vmatmul.mubr.f32.gmra.mxu0 %v3074
        %v3276 = vpop.f32.mrf.mxu0
        %v3277 = vadd.f32 0.0, %v3276
        %v3278 = vpop.f32.mrf.mxu0
        %3279 = vmatprep.mubr.f32.mxu0 0.0
        %3280 = vmatmul.mubr.f32.gmra.mxu0 %v3077
        %v3281 = vpop.f32.mrf.mxu0
        %v3282 = vadd.f32 0.0, %v3281
        %v3283 = vpop.f32.mrf.mxu0
        %3284 = vmatprep.mubr.f32.mxu0 0.0
        %3285 = vmatmul.mubr.f32.gmra.mxu0 %v3080
        %v3286 = vpop.f32.mrf.mxu0
        %v3287 = vadd.f32 0.0, %v3286
        %v3288 = vpop.f32.mrf.mxu0
        %3289 = vmatprep.mubr.f32.mxu0 0.0
        %3290 = vmatmul.mubr.f32.gmra.mxu0 %v3083
        %v3291 = vpop.f32.mrf.mxu0
        %v3292 = vadd.f32 0.0, %v3291
        %v3293 = vpop.f32.mrf.mxu0
        %3294 = vmatprep.mubr.f32.mxu0 0.0
        %3295 = vmatmul.mubr.f32.gmra.mxu0 %v3086
        %v3296 = vpop.f32.mrf.mxu0
        %v3297 = vadd.f32 0.0, %v3296
        %v3298 = vpop.f32.mrf.mxu0
        %3299 = vmatprep.mubr.f32.mxu0 0.0
        %3300 = vmatmul.mubr.f32.gmra.mxu0 %v3089
        %v3301 = vpop.f32.mrf.mxu0
        %v3302 = vadd.f32 0.0, %v3301
        %v3303 = vpop.f32.mrf.mxu0
        %3304 = vmatprep.mubr.f32.mxu0 0.0
        %3305 = vmatmul.mubr.f32.gmra.mxu0 %v3092
        %v3306 = vpop.f32.mrf.mxu0
        %v3307 = vadd.f32 0.0, %v3306
        %v3308 = vpop.f32.mrf.mxu0
        %3309 = vmatprep.mubr.f32.mxu0 0.0
        %3310 = vmatmul.mubr.f32.gmra.mxu0 %v3095
        %v3311 = vpop.f32.mrf.mxu0
        %v3312 = vadd.f32 0.0, %v3311
        %v3313 = vpop.f32.mrf.mxu0
        %3314 = vmatprep.mubr.f32.mxu0 0.0
        %3315 = vmatmul.mubr.f32.gmra.mxu0 %v3098
        %v3316 = vpop.f32.mrf.mxu0
        %v3317 = vadd.f32 0.0, %v3316
        %v3318 = vpop.f32.mrf.mxu0
        %3319 = vmatprep.mubr.f32.mxu0 0.0
        %3320 = vmatmul.mubr.f32.gmra.mxu0 %v3101
        %v3321 = vpop.f32.mrf.mxu0
        %v3322 = vadd.f32 0.0, %v3321
        %v3323 = vpop.f32.mrf.mxu0
        %3324 = vmatprep.mubr.f32.mxu0 0.0
        %3325 = vmatmul.mubr.f32.gmra.mxu0 %v3104
        %v3326 = vpop.f32.mrf.mxu0
        %v3327 = vadd.f32 0.0, %v3326
        %v3328 = vpop.f32.mrf.mxu0
        %3329 = vmatprep.mubr.f32.mxu0 0.0
        %3330 = vmatmul.mubr.f32.gmra.mxu0 %v3107
        %v3331 = vpop.f32.mrf.mxu0
        %v3332 = vadd.f32 0.0, %v3331
        %v3333 = vpop.f32.mrf.mxu0
        %3334 = vmatprep.mubr.f32.mxu0 0.0
        %3335 = vmatmul.mubr.f32.gmra.mxu0 %v3110
        %v3336 = vpop.f32.mrf.mxu0
        %v3337 = vadd.f32 0.0, %v3336
        %v3338 = vpop.f32.mrf.mxu0
        %3339 = vdwg.mxu0
        %v3340 = vadd.f32 %v2950, %v3182
        %v3341 = vadd.f32 %v2951, %v3187
        %v3342 = vadd.f32 %v2952, %v3192
        %v3343 = vadd.f32 %v2953, %v3197
        %v3344 = vadd.f32 %v2954, %v3202
        %v3345 = vadd.f32 %v2955, %v3207
        %v3346 = vadd.f32 %v2956, %v3212
        %v3347 = vadd.f32 %v2957, %v3217
        %v3348 = vadd.f32 %v2958, %v3222
        %v3349 = vadd.f32 %v2959, %v3227
        %v3350 = vadd.f32 %v2960, %v3232
        %v3351 = vadd.f32 %v2961, %v3237
        %v3352 = vadd.f32 %v2962, %v3242
        %v3353 = vadd.f32 %v2963, %v3247
        %v3354 = vadd.f32 %v2964, %v3252
        %v3355 = vadd.f32 %v2965, %v3257
        %v3356 = vadd.f32 %v2966, %v3262
        %v3357 = vadd.f32 %v2967, %v3267
        %v3358 = vadd.f32 %v2968, %v3272
        %v3359 = vadd.f32 %v2969, %v3277
        %v3360 = vadd.f32 %v2970, %v3282
        %v3361 = vadd.f32 %v2971, %v3287
        %v3362 = vadd.f32 %v2972, %v3292
        %v3363 = vadd.f32 %v2973, %v3297
        %v3364 = vadd.f32 %v2974, %v3302
        %v3365 = vadd.f32 %v2975, %v3307
        %v3366 = vadd.f32 %v2976, %v3312
        %v3367 = vadd.f32 %v2977, %v3317
        %v3368 = vadd.f32 %v2978, %v3322
        %v3369 = vadd.f32 %v2979, %v3327
        %v3370 = vadd.f32 %v2980, %v3332
        %v3371 = vadd.f32 %v2981, %v3337
        %v3372 = vld [vmem:[%s2591 + $0x2] sm:$0xff]
        %v3373 = vld [vmem:[%s2591 + $0xa] sm:$0xff]
        %v3374 = vld [vmem:[%s2591 + $0x1a] sm:$0xff]
        %v3375 = vld [vmem:[%s2591 + $0x22] sm:$0xff]
        %v3376 = vld [vmem:[%s2591 + $0x32] sm:$0xff]
        %v3377 = vld [vmem:[%s2591 + $0x3a] sm:$0xff]
        %v3378 = vld [vmem:[%s2591 + $0x4a] sm:$0xff]
        %v3379 = vld [vmem:[%s2591 + $0x52] sm:$0xff]
        %v3380 = vld [vmem:[%s2591 + $0x62] sm:$0xff]
        %v3381 = vld [vmem:[%s2591 + $0x6a] sm:$0xff]
        %v3382 = vld [vmem:[%s2591 + $0x7a] sm:$0xff]
        %v3383 = vld [vmem:[%s2591 + $0x82] sm:$0xff]
        %v3384 = vld [vmem:[%s2591 + $0x92] sm:$0xff]
        %v3385 = vld [vmem:[%s2591 + $0x9a] sm:$0xff]
        %v3386 = vld [vmem:[%s2591 + $0xaa] sm:$0xff]
        %v3387 = vld [vmem:[%s2591 + $0xb2] sm:$0xff]
        %v3388 = vld [vmem:[%s2591 + $0xc2] sm:$0xff]
        %v3389 = vld [vmem:[%s2591 + $0xca] sm:$0xff]
        %v3390 = vld [vmem:[%s2591 + $0xda] sm:$0xff]
        %v3391 = vld [vmem:[%s2591 + $0xe2] sm:$0xff]
        %v3392 = vld [vmem:[%s2591 + $0xf2] sm:$0xff]
        %v3393 = vld [vmem:[%s2591 + $0xfa] sm:$0xff]
        %v3394 = vld [vmem:[%s2591 + $0x10a] sm:$0xff]
        %v3395 = vld [vmem:[%s2591 + $0x112] sm:$0xff]
        %v3396 = vld [vmem:[%s2591 + $0x122] sm:$0xff]
        %v3397 = vld [vmem:[%s2591 + $0x12a] sm:$0xff]
        %v3398 = vld [vmem:[%s2591 + $0x13a] sm:$0xff]
        %v3399 = vld [vmem:[%s2591 + $0x142] sm:$0xff]
        %v3400 = vld [vmem:[%s2591 + $0x152] sm:$0xff]
        %v3401 = vld [vmem:[%s2591 + $0x15a] sm:$0xff]
        %v3402 = vld [vmem:[%s2591 + $0x16a] sm:$0xff]
        %v3403 = vld [vmem:[%s2591 + $0x172] sm:$0xff]
        %s3404 = scalar_lea.vmem %s1, 32
        %v3405 = vld [vmem:[%s3404] sm:$0x7]
        %v3407 = vsel %vm380, %v3372, 0
        %v3410 = vsel %vm380, %v3373, 0
        %v3413 = vsel %vm380, %v3374, 0
        %v3416 = vsel %vm380, %v3375, 0
        %v3419 = vsel %vm380, %v3376, 0
        %v3422 = vsel %vm380, %v3377, 0
        %v3425 = vsel %vm380, %v3378, 0
        %v3428 = vsel %vm380, %v3379, 0
        %v3431 = vsel %vm380, %v3380, 0
        %v3434 = vsel %vm380, %v3381, 0
        %v3437 = vsel %vm380, %v3382, 0
        %v3440 = vsel %vm380, %v3383, 0
        %v3443 = vsel %vm380, %v3384, 0
        %v3446 = vsel %vm380, %v3385, 0
        %v3449 = vsel %vm380, %v3386, 0
        %v3452 = vsel %vm380, %v3387, 0
        %v3455 = vsel %vm380, %v3388, 0
        %v3458 = vsel %vm380, %v3389, 0
        %v3461 = vsel %vm380, %v3390, 0
        %v3464 = vsel %vm380, %v3391, 0
        %v3467 = vsel %vm380, %v3392, 0
        %v3470 = vsel %vm380, %v3393, 0
        %v3473 = vsel %vm380, %v3394, 0
        %v3476 = vsel %vm380, %v3395, 0
        %v3479 = vsel %vm380, %v3396, 0
        %v3482 = vsel %vm380, %v3397, 0
        %v3485 = vsel %vm380, %v3398, 0
        %v3488 = vsel %vm380, %v3399, 0
        %v3491 = vsel %vm380, %v3400, 0
        %v3494 = vsel %vm380, %v3401, 0
        %v3497 = vsel %vm380, %v3402, 0
        %v3500 = vsel %vm380, %v3403, 0
        %v3503 = vsel %vm477, %v3405, 0
        %3505 = vmatprep.subr.mxu0 0.0
        %3506 = vmatpush1.msra.mxu0 0.0
        %3507 = vmatprep.subr.mxu0 0.0
        %3508 = vmatpush1.msra.mxu0 0.0
        %3509 = vmatprep.subr.mxu0 0.0
        %3510 = vmatpush1.msra.mxu0 0.0
        %3511 = vmatprep.subr.mxu0 0.0
        %3512 = vmatpush1.msra.mxu0 0.0
        %3513 = vmatprep.subr.mxu0 0.0
        %3514 = vmatpush1.msra.mxu0 0.0
        %3515 = vmatprep.subr.mxu0 0.0
        %3516 = vmatpush1.msra.mxu0 0.0
        %3517 = vmatprep.subr.mxu0 0.0
        %3518 = vmatpush1.msra.mxu0 0.0
        %3519 = vmatprep.subr.mxu0 0.0
        %3520 = vmatpush1.msra.mxu0 0.0
        %3521 = vmatprep.subr.mxu0 0.0
        %3522 = vmatpush1.msra.mxu0 0.0
        %3523 = vmatprep.subr.mxu0 0.0
        %3524 = vmatpush1.msra.mxu0 0.0
        %3525 = vmatprep.subr.mxu0 0.0
        %3526 = vmatpush1.msra.mxu0 0.0
        %3527 = vmatprep.subr.mxu0 0.0
        %3528 = vmatpush1.msra.mxu0 0.0
        %3529 = vmatprep.subr.mxu0 0.0
        %3530 = vmatpush1.msra.mxu0 0.0
        %3531 = vmatprep.subr.mxu0 0.0
        %3532 = vmatpush1.msra.mxu0 0.0
        %3533 = vmatprep.subr.mxu0 0.0
        %3534 = vmatpush1.msra.mxu0 0.0
        %3535 = vmatprep.subr.mxu0 0.0
        %3536 = vmatpush1.msra.mxu0 %v3503
        %3537 = vmatprep.subr.mxu0 0.0
        %3538 = vmatpush2.msra.mxu0 0.0
        %3539 = vmatprep.subr.mxu0 0.0
        %3540 = vmatpush2.msra.mxu0 0.0
        %3541 = vmatprep.subr.mxu0 0.0
        %3542 = vmatpush2.msra.mxu0 0.0
        %3543 = vmatprep.subr.mxu0 0.0
        %3544 = vmatpush2.msra.mxu0 0.0
        %3545 = vmatprep.subr.mxu0 0.0
        %3546 = vmatpush2.msra.mxu0 0.0
        %3547 = vmatprep.subr.mxu0 0.0
        %3548 = vmatpush2.msra.mxu0 0.0
        %3549 = vmatprep.subr.mxu0 0.0
        %3550 = vmatpush2.msra.mxu0 0.0
        %3551 = vmatprep.subr.mxu0 0.0
        %3552 = vmatpush2.msra.mxu0 0.0
        %3553 = vmatprep.subr.mxu0 0.0
        %3554 = vmatpush2.msra.mxu0 0.0
        %3555 = vmatprep.subr.mxu0 0.0
        %3556 = vmatpush2.msra.mxu0 0.0
        %3557 = vmatprep.subr.mxu0 0.0
        %3558 = vmatpush2.msra.mxu0 0.0
        %3559 = vmatprep.subr.mxu0 0.0
        %3560 = vmatpush2.msra.mxu0 0.0
        %3561 = vmatprep.subr.mxu0 0.0
        %3562 = vmatpush2.msra.mxu0 0.0
        %3563 = vmatprep.subr.mxu0 0.0
        %3564 = vmatpush2.msra.mxu0 0.0
        %3565 = vmatprep.subr.mxu0 0.0
        %3566 = vmatpush2.msra.mxu0 0.0
        %3567 = vmatprep.subr.mxu0 0.0
        %3568 = vmatpush2.msra.mxu0 0.0
        %3569 = vmatprep.mubr.f32.mxu0 0.0
        %3570 = vmatmul.mubr.f32.gmra.mxu0 %v3407
        %v3571 = vpop.f32.mrf.mxu0
        %v3572 = vadd.f32 0.0, %v3571
        %v3573 = vpop.f32.mrf.mxu0
        %3574 = vmatprep.mubr.f32.mxu0 0.0
        %3575 = vmatmul.mubr.f32.gmra.mxu0 %v3410
        %v3576 = vpop.f32.mrf.mxu0
        %v3577 = vadd.f32 0.0, %v3576
        %v3578 = vpop.f32.mrf.mxu0
        %3579 = vmatprep.mubr.f32.mxu0 0.0
        %3580 = vmatmul.mubr.f32.gmra.mxu0 %v3413
        %v3581 = vpop.f32.mrf.mxu0
        %v3582 = vadd.f32 0.0, %v3581
        %v3583 = vpop.f32.mrf.mxu0
        %3584 = vmatprep.mubr.f32.mxu0 0.0
        %3585 = vmatmul.mubr.f32.gmra.mxu0 %v3416
        %v3586 = vpop.f32.mrf.mxu0
        %v3587 = vadd.f32 0.0, %v3586
        %v3588 = vpop.f32.mrf.mxu0
        %3589 = vmatprep.mubr.f32.mxu0 0.0
        %3590 = vmatmul.mubr.f32.gmra.mxu0 %v3419
        %v3591 = vpop.f32.mrf.mxu0
        %v3592 = vadd.f32 0.0, %v3591
        %v3593 = vpop.f32.mrf.mxu0
        %3594 = vmatprep.mubr.f32.mxu0 0.0
        %3595 = vmatmul.mubr.f32.gmra.mxu0 %v3422
        %v3596 = vpop.f32.mrf.mxu0
        %v3597 = vadd.f32 0.0, %v3596
        %v3598 = vpop.f32.mrf.mxu0
        %3599 = vmatprep.mubr.f32.mxu0 0.0
        %3600 = vmatmul.mubr.f32.gmra.mxu0 %v3425
        %v3601 = vpop.f32.mrf.mxu0
        %v3602 = vadd.f32 0.0, %v3601
        %v3603 = vpop.f32.mrf.mxu0
        %3604 = vmatprep.mubr.f32.mxu0 0.0
        %3605 = vmatmul.mubr.f32.gmra.mxu0 %v3428
        %v3606 = vpop.f32.mrf.mxu0
        %v3607 = vadd.f32 0.0, %v3606
        %v3608 = vpop.f32.mrf.mxu0
        %3609 = vmatprep.mubr.f32.mxu0 0.0
        %3610 = vmatmul.mubr.f32.gmra.mxu0 %v3431
        %v3611 = vpop.f32.mrf.mxu0
        %v3612 = vadd.f32 0.0, %v3611
        %v3613 = vpop.f32.mrf.mxu0
        %3614 = vmatprep.mubr.f32.mxu0 0.0
        %3615 = vmatmul.mubr.f32.gmra.mxu0 %v3434
        %v3616 = vpop.f32.mrf.mxu0
        %v3617 = vadd.f32 0.0, %v3616
        %v3618 = vpop.f32.mrf.mxu0
        %3619 = vmatprep.mubr.f32.mxu0 0.0
        %3620 = vmatmul.mubr.f32.gmra.mxu0 %v3437
        %v3621 = vpop.f32.mrf.mxu0
        %v3622 = vadd.f32 0.0, %v3621
        %v3623 = vpop.f32.mrf.mxu0
        %3624 = vmatprep.mubr.f32.mxu0 0.0
        %3625 = vmatmul.mubr.f32.gmra.mxu0 %v3440
        %v3626 = vpop.f32.mrf.mxu0
        %v3627 = vadd.f32 0.0, %v3626
        %v3628 = vpop.f32.mrf.mxu0
        %3629 = vmatprep.mubr.f32.mxu0 0.0
        %3630 = vmatmul.mubr.f32.gmra.mxu0 %v3443
        %v3631 = vpop.f32.mrf.mxu0
        %v3632 = vadd.f32 0.0, %v3631
        %v3633 = vpop.f32.mrf.mxu0
        %3634 = vmatprep.mubr.f32.mxu0 0.0
        %3635 = vmatmul.mubr.f32.gmra.mxu0 %v3446
        %v3636 = vpop.f32.mrf.mxu0
        %v3637 = vadd.f32 0.0, %v3636
        %v3638 = vpop.f32.mrf.mxu0
        %3639 = vmatprep.mubr.f32.mxu0 0.0
        %3640 = vmatmul.mubr.f32.gmra.mxu0 %v3449
        %v3641 = vpop.f32.mrf.mxu0
        %v3642 = vadd.f32 0.0, %v3641
        %v3643 = vpop.f32.mrf.mxu0
        %3644 = vmatprep.mubr.f32.mxu0 0.0
        %3645 = vmatmul.mubr.f32.gmra.mxu0 %v3452
        %v3646 = vpop.f32.mrf.mxu0
        %v3647 = vadd.f32 0.0, %v3646
        %v3648 = vpop.f32.mrf.mxu0
        %3649 = vmatprep.mubr.f32.mxu0 0.0
        %3650 = vmatmul.mubr.f32.gmra.mxu0 %v3455
        %v3651 = vpop.f32.mrf.mxu0
        %v3652 = vadd.f32 0.0, %v3651
        %v3653 = vpop.f32.mrf.mxu0
        %3654 = vmatprep.mubr.f32.mxu0 0.0
        %3655 = vmatmul.mubr.f32.gmra.mxu0 %v3458
        %v3656 = vpop.f32.mrf.mxu0
        %v3657 = vadd.f32 0.0, %v3656
        %v3658 = vpop.f32.mrf.mxu0
        %3659 = vmatprep.mubr.f32.mxu0 0.0
        %3660 = vmatmul.mubr.f32.gmra.mxu0 %v3461
        %v3661 = vpop.f32.mrf.mxu0
        %v3662 = vadd.f32 0.0, %v3661
        %v3663 = vpop.f32.mrf.mxu0
        %3664 = vmatprep.mubr.f32.mxu0 0.0
        %3665 = vmatmul.mubr.f32.gmra.mxu0 %v3464
        %v3666 = vpop.f32.mrf.mxu0
        %v3667 = vadd.f32 0.0, %v3666
        %v3668 = vpop.f32.mrf.mxu0
        %3669 = vmatprep.mubr.f32.mxu0 0.0
        %3670 = vmatmul.mubr.f32.gmra.mxu0 %v3467
        %v3671 = vpop.f32.mrf.mxu0
        %v3672 = vadd.f32 0.0, %v3671
        %v3673 = vpop.f32.mrf.mxu0
        %3674 = vmatprep.mubr.f32.mxu0 0.0
        %3675 = vmatmul.mubr.f32.gmra.mxu0 %v3470
        %v3676 = vpop.f32.mrf.mxu0
        %v3677 = vadd.f32 0.0, %v3676
        %v3678 = vpop.f32.mrf.mxu0
        %3679 = vmatprep.mubr.f32.mxu0 0.0
        %3680 = vmatmul.mubr.f32.gmra.mxu0 %v3473
        %v3681 = vpop.f32.mrf.mxu0
        %v3682 = vadd.f32 0.0, %v3681
        %v3683 = vpop.f32.mrf.mxu0
        %3684 = vmatprep.mubr.f32.mxu0 0.0
        %3685 = vmatmul.mubr.f32.gmra.mxu0 %v3476
        %v3686 = vpop.f32.mrf.mxu0
        %v3687 = vadd.f32 0.0, %v3686
        %v3688 = vpop.f32.mrf.mxu0
        %3689 = vmatprep.mubr.f32.mxu0 0.0
        %3690 = vmatmul.mubr.f32.gmra.mxu0 %v3479
        %v3691 = vpop.f32.mrf.mxu0
        %v3692 = vadd.f32 0.0, %v3691
        %v3693 = vpop.f32.mrf.mxu0
        %3694 = vmatprep.mubr.f32.mxu0 0.0
        %3695 = vmatmul.mubr.f32.gmra.mxu0 %v3482
        %v3696 = vpop.f32.mrf.mxu0
        %v3697 = vadd.f32 0.0, %v3696
        %v3698 = vpop.f32.mrf.mxu0
        %3699 = vmatprep.mubr.f32.mxu0 0.0
        %3700 = vmatmul.mubr.f32.gmra.mxu0 %v3485
        %v3701 = vpop.f32.mrf.mxu0
        %v3702 = vadd.f32 0.0, %v3701
        %v3703 = vpop.f32.mrf.mxu0
        %3704 = vmatprep.mubr.f32.mxu0 0.0
        %3705 = vmatmul.mubr.f32.gmra.mxu0 %v3488
        %v3706 = vpop.f32.mrf.mxu0
        %v3707 = vadd.f32 0.0, %v3706
        %v3708 = vpop.f32.mrf.mxu0
        %3709 = vmatprep.mubr.f32.mxu0 0.0
        %3710 = vmatmul.mubr.f32.gmra.mxu0 %v3491
        %v3711 = vpop.f32.mrf.mxu0
        %v3712 = vadd.f32 0.0, %v3711
        %v3713 = vpop.f32.mrf.mxu0
        %3714 = vmatprep.mubr.f32.mxu0 0.0
        %3715 = vmatmul.mubr.f32.gmra.mxu0 %v3494
        %v3716 = vpop.f32.mrf.mxu0
        %v3717 = vadd.f32 0.0, %v3716
        %v3718 = vpop.f32.mrf.mxu0
        %3719 = vmatprep.mubr.f32.mxu0 0.0
        %3720 = vmatmul.mubr.f32.gmra.mxu0 %v3497
        %v3721 = vpop.f32.mrf.mxu0
        %v3722 = vadd.f32 0.0, %v3721
        %v3723 = vpop.f32.mrf.mxu0
        %3724 = vmatprep.mubr.f32.mxu0 0.0
        %3725 = vmatmul.mubr.f32.gmra.mxu0 %v3500
        %v3726 = vpop.f32.mrf.mxu0
        %v3727 = vadd.f32 0.0, %v3726
        %v3728 = vpop.f32.mrf.mxu0
        %3729 = vdwg.mxu0
        %v3730 = vadd.f32 %v3340, %v3572
        %v3731 = vadd.f32 %v3341, %v3577
        %v3732 = vadd.f32 %v3342, %v3582
        %v3733 = vadd.f32 %v3343, %v3587
        %v3734 = vadd.f32 %v3344, %v3592
        %v3735 = vadd.f32 %v3345, %v3597
        %v3736 = vadd.f32 %v3346, %v3602
        %v3737 = vadd.f32 %v3347, %v3607
        %v3738 = vadd.f32 %v3348, %v3612
        %v3739 = vadd.f32 %v3349, %v3617
        %v3740 = vadd.f32 %v3350, %v3622
        %v3741 = vadd.f32 %v3351, %v3627
        %v3742 = vadd.f32 %v3352, %v3632
        %v3743 = vadd.f32 %v3353, %v3637
        %v3744 = vadd.f32 %v3354, %v3642
        %v3745 = vadd.f32 %v3355, %v3647
        %v3746 = vadd.f32 %v3356, %v3652
        %v3747 = vadd.f32 %v3357, %v3657
        %v3748 = vadd.f32 %v3358, %v3662
        %v3749 = vadd.f32 %v3359, %v3667
        %v3750 = vadd.f32 %v3360, %v3672
        %v3751 = vadd.f32 %v3361, %v3677
        %v3752 = vadd.f32 %v3362, %v3682
        %v3753 = vadd.f32 %v3363, %v3687
        %v3754 = vadd.f32 %v3364, %v3692
        %v3755 = vadd.f32 %v3365, %v3697
        %v3756 = vadd.f32 %v3366, %v3702
        %v3757 = vadd.f32 %v3367, %v3707
        %v3758 = vadd.f32 %v3368, %v3712
        %v3759 = vadd.f32 %v3369, %v3717
        %v3760 = vadd.f32 %v3370, %v3722
        %v3761 = vadd.f32 %v3371, %v3727
        %v3762 = vld [vmem:[%s2] sm:$0x1]
        %v3764 = vlaneseq
        %v3765 = vshrl.u32 %v3764, 7
        %v3766 = vsub.s32 0, %v3765
        %v3767 = vrot.slane %v3762, %v3766
        %v3769 = vadd.f32 %v3730, %v3767
        %v3770 = vadd.f32 %v3731, %v3767
        %v3771 = vadd.f32 %v3732, %v3767
        %v3772 = vadd.f32 %v3733, %v3767
        %v3773 = vadd.f32 %v3734, %v3767
        %v3774 = vadd.f32 %v3735, %v3767
        %v3775 = vadd.f32 %v3736, %v3767
        %v3776 = vadd.f32 %v3737, %v3767
        %v3777 = vadd.f32 %v3738, %v3767
        %v3778 = vadd.f32 %v3739, %v3767
        %v3779 = vadd.f32 %v3740, %v3767
        %v3780 = vadd.f32 %v3741, %v3767
        %v3781 = vadd.f32 %v3742, %v3767
        %v3782 = vadd.f32 %v3743, %v3767
        %v3783 = vadd.f32 %v3744, %v3767
        %v3784 = vadd.f32 %v3745, %v3767
        %v3785 = vadd.f32 %v3746, %v3767
        %v3786 = vadd.f32 %v3747, %v3767
        %v3787 = vadd.f32 %v3748, %v3767
        %v3788 = vadd.f32 %v3749, %v3767
        %v3789 = vadd.f32 %v3750, %v3767
        %v3790 = vadd.f32 %v3751, %v3767
        %v3791 = vadd.f32 %v3752, %v3767
        %v3792 = vadd.f32 %v3753, %v3767
        %v3793 = vadd.f32 %v3754, %v3767
        %v3794 = vadd.f32 %v3755, %v3767
        %v3795 = vadd.f32 %v3756, %v3767
        %v3796 = vadd.f32 %v3757, %v3767
        %v3797 = vadd.f32 %v3758, %v3767
        %v3798 = vadd.f32 %v3759, %v3767
        %v3799 = vadd.f32 %v3760, %v3767
        %v3800 = vadd.f32 %v3761, %v3767
        %v3801 = vmax.f32 %v3769, 0.0
        %v3802 = vmax.f32 %v3770, 0.0
        %v3803 = vmax.f32 %v3771, 0.0
        %v3804 = vmax.f32 %v3772, 0.0
        %v3805 = vmax.f32 %v3773, 0.0
        %v3806 = vmax.f32 %v3774, 0.0
        %v3807 = vmax.f32 %v3775, 0.0
        %v3808 = vmax.f32 %v3776, 0.0
        %v3809 = vmax.f32 %v3777, 0.0
        %v3810 = vmax.f32 %v3778, 0.0
        %v3811 = vmax.f32 %v3779, 0.0
        %v3812 = vmax.f32 %v3780, 0.0
        %v3813 = vmax.f32 %v3781, 0.0
        %v3814 = vmax.f32 %v3782, 0.0
        %v3815 = vmax.f32 %v3783, 0.0
        %v3816 = vmax.f32 %v3784, 0.0
        %v3817 = vmax.f32 %v3785, 0.0
        %v3818 = vmax.f32 %v3786, 0.0
        %v3819 = vmax.f32 %v3787, 0.0
        %v3820 = vmax.f32 %v3788, 0.0
        %v3821 = vmax.f32 %v3789, 0.0
        %v3822 = vmax.f32 %v3790, 0.0
        %v3823 = vmax.f32 %v3791, 0.0
        %v3824 = vmax.f32 %v3792, 0.0
        %v3825 = vmax.f32 %v3793, 0.0
        %v3826 = vmax.f32 %v3794, 0.0
        %v3827 = vmax.f32 %v3795, 0.0
        %v3828 = vmax.f32 %v3796, 0.0
        %v3829 = vmax.f32 %v3797, 0.0
        %v3830 = vmax.f32 %v3798, 0.0
        %v3831 = vmax.f32 %v3799, 0.0
        %v3832 = vmax.f32 %v3800, 0.0
        %vm3833 = vcmask 261120
        %v3834 = vsel %vm3833, %v3801, 0.0
        %v3835 = vsel %vm3833, %v3802, 0.0
        %v3836 = vadd.f32 %v3834, %v3835
        %v3837 = vsel %vm3833, %v3803, 0.0
        %v3838 = vadd.f32 %v3836, %v3837
        %v3839 = vsel %vm3833, %v3804, 0.0
        %v3840 = vadd.f32 %v3838, %v3839
        %v3841 = vsel %vm3833, %v3805, 0.0
        %v3842 = vadd.f32 %v3840, %v3841
        %v3843 = vsel %vm3833, %v3806, 0.0
        %v3844 = vadd.f32 %v3842, %v3843
        %v3845 = vsel %vm3833, %v3807, 0.0
        %v3846 = vadd.f32 %v3844, %v3845
        %v3847 = vsel %vm3833, %v3808, 0.0
        %v3848 = vadd.f32 %v3846, %v3847
        %v3849 = vsel %vm3833, %v3809, 0.0
        %v3850 = vadd.f32 %v3848, %v3849
        %v3851 = vsel %vm3833, %v3810, 0.0
        %v3852 = vadd.f32 %v3850, %v3851
        %v3853 = vsel %vm3833, %v3811, 0.0
        %v3854 = vadd.f32 %v3852, %v3853
        %v3855 = vsel %vm3833, %v3812, 0.0
        %v3856 = vadd.f32 %v3854, %v3855
        %v3857 = vsel %vm3833, %v3813, 0.0
        %v3858 = vadd.f32 %v3856, %v3857
        %v3859 = vsel %vm3833, %v3814, 0.0
        %v3860 = vadd.f32 %v3858, %v3859
        %v3861 = vsel %vm3833, %v3815, 0.0
        %v3862 = vadd.f32 %v3860, %v3861
        %v3863 = vsel %vm3833, %v3816, 0.0
        %v3864 = vadd.f32 %v3862, %v3863
        %v3865 = vsel %vm3833, %v3817, 0.0
        %v3866 = vadd.f32 %v3864, %v3865
        %v3867 = vsel %vm3833, %v3818, 0.0
        %v3868 = vadd.f32 %v3866, %v3867
        %v3869 = vsel %vm3833, %v3819, 0.0
        %v3870 = vadd.f32 %v3868, %v3869
        %v3871 = vsel %vm3833, %v3820, 0.0
        %v3872 = vadd.f32 %v3870, %v3871
        %v3873 = vsel %vm3833, %v3821, 0.0
        %v3874 = vadd.f32 %v3872, %v3873
        %v3875 = vsel %vm3833, %v3822, 0.0
        %v3876 = vadd.f32 %v3874, %v3875
        %v3877 = vsel %vm3833, %v3823, 0.0
        %v3878 = vadd.f32 %v3876, %v3877
        %v3879 = vsel %vm3833, %v3824, 0.0
        %v3880 = vadd.f32 %v3878, %v3879
        %v3881 = vsel %vm3833, %v3825, 0.0
        %v3882 = vadd.f32 %v3880, %v3881
        %v3883 = vsel %vm3833, %v3826, 0.0
        %v3884 = vadd.f32 %v3882, %v3883
        %v3885 = vsel %vm3833, %v3827, 0.0
        %v3886 = vadd.f32 %v3884, %v3885
        %v3887 = vsel %vm3833, %v3828, 0.0
        %v3888 = vadd.f32 %v3886, %v3887
        %v3889 = vsel %vm3833, %v3829, 0.0
        %v3890 = vadd.f32 %v3888, %v3889
        %v3891 = vsel %vm3833, %v3830, 0.0
        %v3892 = vadd.f32 %v3890, %v3891
        %v3893 = vsel %vm3833, %v3831, 0.0
        %v3894 = vadd.f32 %v3892, %v3893
        %v3895 = vsel %vm3833, %v3832, 0.0
        %v3896 = vadd.f32 %v3894, %v3895
        %v3897 = vrot.slane %v3896, 4
        %v3898 = vadd.f32 %v3896, %v3897
        %v3899 = vrot.slane %v3898, 2
        %v3900 = vadd.f32 %v3898, %v3899
        %v3901 = vrot.slane %v3900, 1
        %v3902 = vadd.f32 %v3900, %v3901
        %v3903 = vrcp.pop 256.0
        %v3904 = vmul.f32 %v3902, %v3903
        %v3905 = vld [vmem:[%s3] sm:$0xff]
        %v3906 = vld [vmem:[%s3 + $0x8] sm:$0xff]
        %v3907 = vld [vmem:[%s3 + $0x10] sm:$0xff]
        %v3908 = vld [vmem:[%s3 + $0x18] sm:$0xff]
        %v3909 = vld [vmem:[%s5] sm:$0x1]
        %v3911 = vsel %vm3833, %v3904, 0
        %3913 = vmatprep.subr.mxu0 0.0
        %3914 = vmatpush1.msra.mxu0 0.0
        %3915 = vmatprep.subr.mxu0 0.0
        %3916 = vmatpush1.msra.mxu0 0.0
        %3917 = vmatprep.subr.mxu0 0.0
        %3918 = vmatpush1.msra.mxu0 0.0
        %3919 = vmatprep.subr.mxu0 0.0
        %3920 = vmatpush1.msra.mxu0 0.0
        %3921 = vmatprep.subr.mxu0 0.0
        %3922 = vmatpush1.msra.mxu0 0.0
        %3923 = vmatprep.subr.mxu0 0.0
        %3924 = vmatpush1.msra.mxu0 0.0
        %3925 = vmatprep.subr.mxu0 0.0
        %3926 = vmatpush1.msra.mxu0 0.0
        %3927 = vmatprep.subr.mxu0 0.0
        %3928 = vmatpush1.msra.mxu0 0.0
        %3929 = vmatprep.subr.mxu0 0.0
        %3930 = vmatpush1.msra.mxu0 0.0
        %3931 = vmatprep.subr.mxu0 0.0
        %3932 = vmatpush1.msra.mxu0 0.0
        %3933 = vmatprep.subr.mxu0 0.0
        %3934 = vmatpush1.msra.mxu0 0.0
        %3935 = vmatprep.subr.mxu0 0.0
        %3936 = vmatpush1.msra.mxu0 0.0
        %3937 = vmatprep.subr.mxu0 0.0
        %3938 = vmatpush1.msra.mxu0 %v3908
        %3939 = vmatprep.subr.mxu0 0.0
        %3940 = vmatpush1.msra.mxu0 %v3907
        %3941 = vmatprep.subr.mxu0 0.0
        %3942 = vmatpush1.msra.mxu0 %v3906
        %3943 = vmatprep.subr.mxu0 0.0
        %3944 = vmatpush1.msra.mxu0 %v3905
        %3945 = vmatprep.subr.mxu0 0.0
        %3946 = vmatpush2.msra.mxu0 0.0
        %3947 = vmatprep.subr.mxu0 0.0
        %3948 = vmatpush2.msra.mxu0 0.0
        %3949 = vmatprep.subr.mxu0 0.0
        %3950 = vmatpush2.msra.mxu0 0.0
        %3951 = vmatprep.subr.mxu0 0.0
        %3952 = vmatpush2.msra.mxu0 0.0
        %3953 = vmatprep.subr.mxu0 0.0
        %3954 = vmatpush2.msra.mxu0 0.0
        %3955 = vmatprep.subr.mxu0 0.0
        %3956 = vmatpush2.msra.mxu0 0.0
        %3957 = vmatprep.subr.mxu0 0.0
        %3958 = vmatpush2.msra.mxu0 0.0
        %3959 = vmatprep.subr.mxu0 0.0
        %3960 = vmatpush2.msra.mxu0 0.0
        %3961 = vmatprep.subr.mxu0 0.0
        %3962 = vmatpush2.msra.mxu0 0.0
        %3963 = vmatprep.subr.mxu0 0.0
        %3964 = vmatpush2.msra.mxu0 0.0
        %3965 = vmatprep.subr.mxu0 0.0
        %3966 = vmatpush2.msra.mxu0 0.0
        %3967 = vmatprep.subr.mxu0 0.0
        %3968 = vmatpush2.msra.mxu0 0.0
        %3969 = vmatprep.subr.mxu0 0.0
        %3970 = vmatpush2.msra.mxu0 0.0
        %3971 = vmatprep.subr.mxu0 0.0
        %3972 = vmatpush2.msra.mxu0 0.0
        %3973 = vmatprep.subr.mxu0 0.0
        %3974 = vmatpush2.msra.mxu0 0.0
        %3975 = vmatprep.subr.mxu0 0.0
        %3976 = vmatpush2.msra.mxu0 0.0
        %3977 = vmatprep.mubr.f32.mxu0 0.0
        %3978 = vmatmul.mubr.f32.gmra.mxu0 %v3911
        %v3979 = vpop.f32.mrf.mxu0
        %v3980 = vadd.f32 %v3909, %v3979
        %v3981 = vpop.f32.mrf.mxu0
        %3982 = vdwg.mxu0
        %vm3983 = vcmask 32768
        %v3984 = vsel %vm3983, %v3980, -inf
        %3985 = vmax.xlane.f32.xlu0 %v3984
        %v3986 = vpop.xlane.xlu0 %3985
        %v3987 = vsub.f32 %v3980, %v3986
        %v3988 = vmul.f32 %v3987, 1.442695
        %v3989 = vpow.pop %v3988
        %v3990 = vsel %vm3983, %v3989, 0.0
        %3991 = vadd.xlane.f32.xlu0 %v3990
        %v3992 = vpop.xlane.xlu0 %3991
        %v3993 = vrcp.pop %v3992
        %v3994 = vmul.f32 %v3989, %v3993
        %3995 = vst.msk [vmem:[%s301] sm:$0x1] %vm3983, %v3994
        %v3996 = vld [vmem:[%s4] sm:$0xff]
        %v3997 = vld [vmem:[%s4 + $0x8] sm:$0xff]
        %v3998 = vld [vmem:[%s4 + $0x10] sm:$0xff]
        %v3999 = vld [vmem:[%s4 + $0x18] sm:$0xff]
        %v4000 = vld [vmem:[%s6] sm:$0x1]
        %4001 = vmatprep.subr.mxu0 0.0
        %4002 = vmatpush1.msra.mxu0 0.0
        %4003 = vmatprep.subr.mxu0 0.0
        %4004 = vmatpush1.msra.mxu0 0.0
        %4005 = vmatprep.subr.mxu0 0.0
        %4006 = vmatpush1.msra.mxu0 0.0
        %4007 = vmatprep.subr.mxu0 0.0
        %4008 = vmatpush1.msra.mxu0 0.0
        %4009 = vmatprep.subr.mxu0 0.0
        %4010 = vmatpush1.msra.mxu0 0.0
        %4011 = vmatprep.subr.mxu0 0.0
        %4012 = vmatpush1.msra.mxu0 0.0
        %4013 = vmatprep.subr.mxu0 0.0
        %4014 = vmatpush1.msra.mxu0 0.0
        %4015 = vmatprep.subr.mxu0 0.0
        %4016 = vmatpush1.msra.mxu0 0.0
        %4017 = vmatprep.subr.mxu0 0.0
        %4018 = vmatpush1.msra.mxu0 0.0
        %4019 = vmatprep.subr.mxu0 0.0
        %4020 = vmatpush1.msra.mxu0 0.0
        %4021 = vmatprep.subr.mxu0 0.0
        %4022 = vmatpush1.msra.mxu0 0.0
        %4023 = vmatprep.subr.mxu0 0.0
        %4024 = vmatpush1.msra.mxu0 0.0
        %4025 = vmatprep.subr.mxu0 0.0
        %4026 = vmatpush1.msra.mxu0 %v3999
        %4027 = vmatprep.subr.mxu0 0.0
        %4028 = vmatpush1.msra.mxu0 %v3998
        %4029 = vmatprep.subr.mxu0 0.0
        %4030 = vmatpush1.msra.mxu0 %v3997
        %4031 = vmatprep.subr.mxu0 0.0
        %4032 = vmatpush1.msra.mxu0 %v3996
        %4033 = vmatprep.subr.mxu0 0.0
        %4034 = vmatpush2.msra.mxu0 0.0
        %4035 = vmatprep.subr.mxu0 0.0
        %4036 = vmatpush2.msra.mxu0 0.0
        %4037 = vmatprep.subr.mxu0 0.0
        %4038 = vmatpush2.msra.mxu0 0.0
        %4039 = vmatprep.subr.mxu0 0.0
        %4040 = vmatpush2.msra.mxu0 0.0
        %4041 = vmatprep.subr.mxu0 0.0
        %4042 = vmatpush2.msra.mxu0 0.0
        %4043 = vmatprep.subr.mxu0 0.0
        %4044 = vmatpush2.msra.mxu0 0.0
        %4045 = vmatprep.subr.mxu0 0.0
        %4046 = vmatpush2.msra.mxu0 0.0
        %4047 = vmatprep.subr.mxu0 0.0
        %4048 = vmatpush2.msra.mxu0 0.0
        %4049 = vmatprep.subr.mxu0 0.0
        %4050 = vmatpush2.msra.mxu0 0.0
        %4051 = vmatprep.subr.mxu0 0.0
        %4052 = vmatpush2.msra.mxu0 0.0
        %4053 = vmatprep.subr.mxu0 0.0
        %4054 = vmatpush2.msra.mxu0 0.0
        %4055 = vmatprep.subr.mxu0 0.0
        %4056 = vmatpush2.msra.mxu0 0.0
        %4057 = vmatprep.subr.mxu0 0.0
        %4058 = vmatpush2.msra.mxu0 0.0
        %4059 = vmatprep.subr.mxu0 0.0
        %4060 = vmatpush2.msra.mxu0 0.0
        %4061 = vmatprep.subr.mxu0 0.0
        %4062 = vmatpush2.msra.mxu0 0.0
        %4063 = vmatprep.subr.mxu0 0.0
        %4064 = vmatpush2.msra.mxu0 0.0
        %4065 = vmatprep.mubr.f32.mxu0 0.0
        %4066 = vmatmul.mubr.f32.gmra.mxu0 %v3911
        %v4067 = vpop.f32.mrf.mxu0
        %v4068 = vadd.f32 %v4000, %v4067
        %v4069 = vpop.f32.mrf.mxu0
        %4070 = vdwg.mxu0
        %vm4071 = vcmask 57344
        %v4072 = vsel %vm4071, %v4068, -inf
        %4073 = vmax.xlane.f32.xlu0 %v4072
        %v4074 = vpop.xlane.xlu0 %4073
        %v4075 = vsub.f32 %v4068, %v4074
        %v4076 = vmul.f32 %v4075, 1.442695
        %v4077 = vpow.pop %v4076
        %v4078 = vsel %vm4071, %v4077, 0.0
        %4079 = vadd.xlane.f32.xlu0 %v4078
        %v4080 = vpop.xlane.xlu0 %4079
        %v4081 = vrcp.pop %v4080
        %v4082 = vmul.f32 %v4077, %v4081
        %4083 = vst.msk [vmem:[%s307] sm:$0x1] %vm4071, %v4082
        %s4084 = sand.u32 %s186, 1
        %s4085 = scalar_lea.sflag [#allocation3], %s4084
        %s4086 = sand.u32 %s186, 1
        %s4087 = scalar_lea.vmem [#allocation2], %s4086
        %s4088 = sand.u32 %s212, 1
        %s4089 = scalar_lea.sflag [#allocation5], %s4088
        %s4090 = sand.u32 %s212, 1
        %s4091 = scalar_lea.vmem [#allocation4], %s4090
        // Predicated region
        $region49: #{pipe_forward.1} parent=47 // pred_check
          %p4092 = pneg %p196
        $region50: #{pipe_forward.1} parent=47 // pred_check_branch
          %4094 = sbr.rel (%p4092) target = $region52
        $region51: #{pipe_forward.1} parent=47 // pred_region
          %s4096 = ssub.s32 16, 16
          %4097 = vsyncadd %s4085, %s4096
          %s4098 = smul.addr %s26, 16
          %s4099 = scalar_lea.hbm %s7, %s4098
          %s4101 = sshll.u32 %s4087, 4
          %s4102 = int_to_ptr.vmem [resolvable:$true] %s4101
          %4104 = dma.vmem_to_hbm [thread:$0]  %s4102, 16, %s4099, %s4085
        $region52: #{pipe_forward.1} parent=47 // pred_fallthru
          _
        // Predicated region
        $region53: #{pipe_forward.1} parent=47 // pred_check
          %p4105 = pneg %p222
        $region54: #{pipe_forward.1} parent=47 // pred_check_branch
          %4107 = sbr.rel (%p4105) target = $region56
        $region55: #{pipe_forward.1} parent=47 // pred_region
          %s4109 = ssub.s32 16, 16
          %4110 = vsyncadd %s4089, %s4109
          %s4111 = smul.addr %s26, 16
          %s4112 = scalar_lea.hbm %s8, %s4111
          %s4114 = sshll.u32 %s4091, 4
          %s4115 = int_to_ptr.vmem [resolvable:$true] %s4114
          %4117 = dma.vmem_to_hbm [thread:$0]  %s4115, 16, %s4112, %s4089
        $region56: #{pipe_forward.1} parent=47 // pred_fallthru
          _
      $region48: #{pipe_forward.1} parent=5 // pred_fallthru
        _
      %p4118 = scmp.le.s32.totalorder 2, %s21
      // Predicated region
      $region57: #{pipe_forward.1} parent=5 // pred_check
        %p4119 = pneg %p4118
      $region58: #{pipe_forward.1} parent=5 // pred_check_branch
        %4121 = sbr.rel (%p4119) target = $region60
      $region59: #{pipe_forward.1} parent=5 // pred_region
        %s4122 = ssub.s32 %s21, 2
        // Predicated region
        $region61: #{pipe_forward.1} parent=59 // pred_check
          %p4123 = pneg %p202
        $region62: #{pipe_forward.1} parent=59 // pred_check_branch
          %4125 = sbr.rel (%p4123) target = $region64
        $region63: #{pipe_forward.1} parent=59 // pred_region
          %s4126 = sand.u32 %s187, 1
          %s4127 = scalar_lea.sflag [#allocation3], %s4126
          %s4128 = sand.u32 %s187, 1
          %s4129 = scalar_lea.vmem [#allocation2], %s4128
          %4130 = dma.done %s4127, 16
        $region64: #{pipe_forward.1} parent=59 // pred_fallthru
          _
        // Predicated region
        $region65: #{pipe_forward.1} parent=59 // pred_check
          %p4131 = pneg %p228
        $region66: #{pipe_forward.1} parent=59 // pred_check_branch
          %4133 = sbr.rel (%p4131) target = $region68
        $region67: #{pipe_forward.1} parent=59 // pred_region
          %s4134 = sand.u32 %s213, 1
          %s4135 = scalar_lea.sflag [#allocation5], %s4134
          %s4136 = sand.u32 %s213, 1
          %s4137 = scalar_lea.vmem [#allocation4], %s4136
          %4138 = dma.done %s4135, 16
        $region68: #{pipe_forward.1} parent=59 // pred_fallthru
          _
      $region60: #{pipe_forward.1} parent=5 // pred_fallthru
        _
    $region6: #{pipe_forward.1} parent=1 // loop_footer
      %s25 = sadd.s32 1, %s21
    $region7: #{pipe_forward.1} parent=1 // loop_footer_branch
      %20 = sbr.rel target = $region3
    $region8: #{pipe_forward.1} parent=1 // loop_exit
      _
    %4139 = vsyncpa [#allocation3], 1
    %s4140 = scalar_lea.sflag [#allocation3], 1
    %4141 = vsyncpa %s4140, 1
    %4142 = vsyncpa [#allocation5], 1
    %s4143 = scalar_lea.sflag [#allocation5], 1
    %4144 = vsyncpa %s4143, 1

</llo_original>
